<compile_context>
chip_gen: v5e
topology: v5e:2x2
jax: 0.10.0
libtpu: 0.0.40
codegen_flags: <defaults>
</compile_context>

<pallas_src>
import math
import functools

import jax
import jax.numpy as jnp
import numpy as np
from jax.experimental import pallas as pl
from jax.experimental.pallas import tpu as pltpu


# ----------------------------------------------------------------------------
# Kernel 1: attention RMSNorm + fused QKV projection + RoPE, head-major outputs.
# Grid: (B,), one batch element per step ("parallel").
# ----------------------------------------------------------------------------
def _qkv_rope_kernel(
    x_ref,        # (S, D)            f32   (batch squeezed)
    attn_w_ref,   # (1, D)            f32   attention_norm weight
    wqkv_ref,     # (D, (H+2Hk)*hd)   bf16  [wq | wk | wv], q/k columns rotate-half permuted
    cos_ref,      # (S, hd)           f32   [cos | cos]
    sin_ref,      # (S, hd)           f32   [-sin | sin]
    q_ref,        # (H,  S, hd)       bf16  out
    k_ref,        # (Hk, S, hd)       bf16  out  (prefill KV-cache write)
    v_ref,        # (Hk, S, hd)       bf16  out
    *,
    n_heads,
    n_kv_heads,
    head_dim,
    eps,
):
    f32, bf16 = jnp.float32, jnp.bfloat16
    H, Hk, hd = n_heads, n_kv_heads, head_dim

    x = x_ref[...]                                                   # (S, D) f32
    h_norm = x * jax.lax.rsqrt(jnp.mean(x * x, axis=-1, keepdims=True) + eps)
    h_norm = h_norm * attn_w_ref[...]
    h_nb = h_norm.astype(bf16)

    # Fused QKV projection: one MXU pass, f32 accumulation.
    qkv = jnp.dot(h_nb, wqkv_ref[...], preferred_element_type=f32)   # (S, (H+2Hk)*hd)

    cos = cos_ref[...]                                               # (S, hd)
    sin = sin_ref[...]                                               # (S, hd)

    def rope(t):  # rotate-half RoPE; roll is one XLU lane rotate per vreg
        return t * cos + pltpu.roll(t, hd // 2, 1) * sin

    # Per-head RoPE + head-major store.  hd == 128 so every slice is lane-aligned.
    for h in range(H):
        q_ref[h] = rope(qkv[:, h * hd:(h + 1) * hd]).astype(bf16)
    koff = H * hd
    voff = (H + Hk) * hd
    for h in range(Hk):
        k_ref[h] = rope(qkv[:, koff + h * hd: koff + (h + 1) * hd]).astype(bf16)
        v_ref[h] = qkv[:, voff + h * hd: voff + (h + 1) * hd].astype(bf16)


# ----------------------------------------------------------------------------
# Kernel 2: attention (query-tiled) + output projection + residual + SwiGLU FFN.
# Grid: (B, S // TQ), both axes "parallel".
# ----------------------------------------------------------------------------
def _attn_ffn_kernel(
    x_ref,        # (TQ, D)        f32   residual input tile
    q_ref,        # (H, TQ, hd)    bf16  RoPE'd queries for this tile
    k_ref,        # (Hk, S, hd)    bf16  full keys
    v_ref,        # (Hk, S, hd)    bf16  full values
    ffn_w_ref,    # (1, D)         f32   ffn_norm weight
    wo_ref,       # (H, hd, D)     bf16  output projection, head-major
    w13_ref,      # (D, 2F)        bf16  [w1 | w3]
    w2_ref,       # (F, D)         bf16
    o_ref,        # (TQ, D)        f32
    *,
    n_heads,
    n_kv_heads,
    head_dim,
    ffn_dim,
    q_tile,
    eps,
):
    f32, bf16 = jnp.float32, jnp.bfloat16
    H, Hk, hd, F, TQ = n_heads, n_kv_heads, head_dim, ffn_dim, q_tile
    n_rep = H // Hk
    S = k_ref.shape[1]
    q_start = pl.program_id(1) * TQ

    x = x_ref[...]                                                   # (TQ, D) f32
    q = q_ref[...]                                                   # (H, TQ, hd) bf16

    # GQA repeat_interleave along the (leading, untiled) head axis: head h -> kv h//n_rep.
    # TODO(synk): grouped-query layout at real n_rep to avoid this duplication.
    k = jnp.broadcast_to(k_ref[...][:, None], (Hk, n_rep, S, hd)).reshape(H, S, hd)
    v = jnp.broadcast_to(v_ref[...][:, None], (Hk, n_rep, S, hd)).reshape(H, S, hd)

    # Head-batched scores on the MXU; softmax in f32.
    scores = jnp.einsum("hqd,hkd->hqk", q, k, preferred_element_type=f32)
    scores = scores * (1.0 / math.sqrt(hd))                          # (H, TQ, S)

    # In-kernel causal mask for query rows [q_start, q_start + TQ).
    q_pos = q_start + jax.lax.broadcasted_iota(jnp.int32, (TQ, S), 0)
    k_pos = jax.lax.broadcasted_iota(jnp.int32, (TQ, S), 1)
    scores = scores + jnp.where(k_pos > q_pos, -1e30, 0.0)[None]

    scores = scores - jnp.max(scores, axis=-1, keepdims=True)
    p = jnp.exp(scores)
    p = p * pl.reciprocal(jnp.sum(p, axis=-1, keepdims=True), approx=True)
    attn = jnp.einsum("hqk,hkd->hqd", p.astype(bf16), v,
                      preferred_element_type=f32)                    # (H, TQ, hd)

    # Head-contracted output projection: per-head MXU matmul, sum over heads.
    proj = jnp.einsum("hqd,hdn->hqn", attn.astype(bf16), wo_ref[...],
                      preferred_element_type=f32)                    # (H, TQ, D)
    h1 = x + jnp.sum(proj, axis=0)                                   # residual

    # FFN RMSNorm + fused SwiGLU up-projection.
    h2 = h1 * jax.lax.rsqrt(jnp.mean(h1 * h1, axis=-1, keepdims=True) + eps)
    h2 = h2 * ffn_w_ref[...]
    h2b = h2.astype(bf16)
    u = jnp.dot(h2b, w13_ref[...], preferred_element_type=f32)       # (TQ, 2F)
    a, g = u[:, :F], u[:, F:]
    silu = a * pl.reciprocal(1.0 + jnp.exp(-a), approx=True)
    ff = jnp.dot((silu * g).astype(bf16), w2_ref[...], preferred_element_type=f32)

    o_ref[...] = h1 + ff                                             # lane-dense (TQ, D)


# ----------------------------------------------------------------------------
# Glue
# ----------------------------------------------------------------------------
def _rope_col_perm(n_heads_w, head_dim):
    """Per-head column permutation: interleaved (2i, 2i+1) -> [evens | odds]."""
    per_head = np.concatenate([np.arange(0, head_dim, 2), np.arange(1, head_dim, 2)])
    return np.concatenate([h * head_dim + per_head for h in range(n_heads_w)])


def make_rope_tables(S, head_dim, theta):
    pos = jnp.arange(S, dtype=jnp.float32)
    inv_freq = 1.0 / (theta ** (jnp.arange(0, head_dim, 2, dtype=jnp.float32) / head_dim))
    ang = pos[:, None] * inv_freq[None, :]                 # (S, hd/2)
    cos, sin = jnp.cos(ang), jnp.sin(ang)
    cos_h = jnp.concatenate([cos, cos], axis=-1)           # (S, hd)
    sin_h = jnp.concatenate([-sin, sin], axis=-1)          # (S, hd)
    return (cos_h, sin_h), (cos, sin)


def transformer_block(x, params, rope_tables, *, n_heads, n_kv_heads, head_dim, eps,
                      q_tile=None, single_buffer=True):
    B, S, D = x.shape
    H, Hk, hd = n_heads, n_kv_heads, head_dim
    TQ = S if q_tile is None else q_tile
    assert S % TQ == 0
    n_qt = S // TQ
    cos_h, sin_h = rope_tables
    bf16 = jnp.bfloat16

    # One-time weight prep: rotate-half column permutation baked into wq/wk, QKV and
    # w1|w3 fusion, head-major wo, bf16 cast (f32 accumulation happens in-kernel).
    qperm = _rope_col_perm(H, hd)
    kperm = _rope_col_perm(Hk, hd)
    wqkv = jnp.concatenate(
        [params["wq"][:, qperm], params["wk"][:, kperm], params["wv"]], axis=1
    ).astype(bf16)                                          # (D, (H+2Hk)*hd)
    wo_r = params["wo"].reshape(H, hd, D).astype(bf16)      # (H, hd, D)
    w13 = jnp.concatenate([params["w1"], params["w3"]], axis=1).astype(bf16)  # (D, 2F)
    w2 = params["w2"].astype(bf16)                          # (F, D)
    F = params["w1"].shape[1]

    attn_w2d = params["attn_norm"].reshape(1, D)
    ffn_w2d = params["ffn_norm"].reshape(1, D)

    # Grid-invariant inputs: single-buffered (the second pipeline buffer is pure VMEM waste
    # for a constant index_map).  Perf-only; caller falls back if Buffered(1) is unsupported.
    def invariant_1(arr):
        n = arr.ndim
        imap = lambda b: (0,) * n
        if single_buffer:
            return pl.BlockSpec(arr.shape, imap, pipeline_mode=pl.Buffered(buffer_count=1))
        return pl.BlockSpec(arr.shape, imap)

    def invariant_2(arr):
        n = arr.ndim
        imap = lambda b, t: (0,) * n
        if single_buffer:
            return pl.BlockSpec(arr.shape, imap, pipeline_mode=pl.Buffered(buffer_count=1))
        return pl.BlockSpec(arr.shape, imap)

    vmem_bytes = 48 * 1024 * 1024   # headroom under v7x's 64 MiB physical VMEM

    # --- Kernel 1: norm + fused QKV + RoPE -> head-major q/k/v (prefill KV write) ---
    qkv_kernel = functools.partial(
        _qkv_rope_kernel, n_heads=H, n_kv_heads=Hk, head_dim=hd, eps=eps)
    q_hm, k_hm, v_hm = pl.pallas_call(
        qkv_kernel,
        out_shape=(
            jax.ShapeDtypeStruct((B, H, S, hd), bf16),
            jax.ShapeDtypeStruct((B, Hk, S, hd), bf16),
            jax.ShapeDtypeStruct((B, Hk, S, hd), bf16),
        ),
        grid_spec=pltpu.PrefetchScalarGridSpec(
            num_scalar_prefetch=0,
            grid=(B,),
            in_specs=[
                pl.BlockSpec((None, S, D), lambda b: (b, 0, 0)),          # x
                invariant_1(attn_w2d),
                invariant_1(wqkv),
                invariant_1(cos_h),
                invariant_1(sin_h),
            ],
            out_specs=[
                pl.BlockSpec((None, H, S, hd), lambda b: (b, 0, 0, 0)),
                pl.BlockSpec((None, Hk, S, hd), lambda b: (b, 0, 0, 0)),
                pl.BlockSpec((None, Hk, S, hd), lambda b: (b, 0, 0, 0)),
            ],
        ),
        compiler_params=pltpu.CompilerParams(
            dimension_semantics=("parallel",),
            vmem_limit_bytes=vmem_bytes,
        ),
    )(x, attn_w2d, wqkv, cos_h, sin_h)

    # --- Kernel 2: query-tiled attention + out-proj + residual + SwiGLU FFN ---
    attn_kernel = functools.partial(
        _attn_ffn_kernel, n_heads=H, n_kv_heads=Hk, head_dim=hd,
        ffn_dim=F, q_tile=TQ, eps=eps)
    out = pl.pallas_call(
        attn_kernel,
        out_shape=jax.ShapeDtypeStruct((B, S, D), jnp.float32),
        grid_spec=pltpu.PrefetchScalarGridSpec(
            num_scalar_prefetch=0,
            grid=(B, n_qt),
            in_specs=[
                pl.BlockSpec((None, TQ, D), lambda b, t: (b, t, 0)),        # x tile
                pl.BlockSpec((None, H, TQ, hd), lambda b, t: (b, 0, t, 0)),  # q tile
                pl.BlockSpec((None, Hk, S, hd), lambda b, t: (b, 0, 0, 0)),  # k (full S)
                pl.BlockSpec((None, Hk, S, hd), lambda b, t: (b, 0, 0, 0)),  # v (full S)
                invariant_2(ffn_w2d),
                invariant_2(wo_r),
                invariant_2(w13),
                invariant_2(w2),
            ],
            out_specs=pl.BlockSpec((None, TQ, D), lambda b, t: (b, t, 0)),
        ),
        compiler_params=pltpu.CompilerParams(
            dimension_semantics=("parallel", "parallel"),   # query tiles feed both v7x TCs
            vmem_limit_bytes=vmem_bytes,
        ),
    )(x, q_hm, k_hm, v_hm, ffn_w2d, wo_r, w13, w2)
    return out


# ----------------------------------------------------------------------------
# Pure-JAX f32 reference matching the PyTorch module (interleaved complex RoPE)
# ----------------------------------------------------------------------------
def reference_block(x, params, cos, sin, *, n_heads, n_kv_heads, head_dim, eps):
    B, S, D = x.shape

    def rms(t, w):
        return t * jax.lax.rsqrt(jnp.mean(t * t, -1, keepdims=True) + eps) * w

    hn = rms(x, params["attn_norm"])
    xq = (hn @ params["wq"]).reshape(B, S, n_heads, head_dim)
    xk = (hn @ params["wk"]).reshape(B, S, n_kv_heads, head_dim)
    xv = (hn @ params["wv"]).reshape(B, S, n_kv_heads, head_dim)

    def rope(t):
        tr = t.reshape(*t.shape[:-1], head_dim // 2, 2)
        te, to = tr[..., 0], tr[..., 1]
        c, s = cos[None, :, None, :], sin[None, :, None, :]
        return jnp.stack([te * c - to * s, te * s + to * c], axis=-1).reshape(t.shape)

    xq, xk = rope(xq), rope(xk)
    n_rep = n_heads // n_kv_heads
    keys = jnp.repeat(xk, n_rep, axis=2)        # repeat_interleave == repeat_kv
    values = jnp.repeat(xv, n_rep, axis=2)
    xq, keys, values = (t.transpose(0, 2, 1, 3) for t in (xq, keys, values))
    scores = jnp.einsum("bhqd,bhkd->bhqk", xq, keys) / math.sqrt(head_dim)
    mask = jnp.triu(jnp.full((S, S), -1e30, dtype=jnp.float32), k=1)
    scores = jax.nn.softmax(scores + mask[None, None], axis=-1)
    out = jnp.einsum("bhqk,bhkd->bhqd", scores, values)
    out = out.transpose(0, 2, 1, 3).reshape(B, S, -1)
    h = x + out @ params["wo"]
    hn2 = rms(h, params["ffn_norm"])
    ff = (jax.nn.silu(hn2 @ params["w1"]) * (hn2 @ params["w3"])) @ params["w2"]
    return h + ff


if __name__ == "__main__":
    # Small ModelArgs-consistent config with TPU-friendly shapes
    # (head_dim = 128 lane-aligned, TQ multiple of the bf16 sublane tile).
    dim, n_heads, n_kv_heads = 512, 4, 2
    head_dim = dim // n_heads                       # 128
    multiple_of, eps, rope_theta = 256, 1e-5, 500000.0
    B, S, TQ = 2, 32, 16
    hidden = int(2 * (4 * dim) / 3)
    hidden = multiple_of * ((hidden + multiple_of - 1) // multiple_of)  # 1536

    key = jax.random.PRNGKey(0)
    keys = jax.random.split(key, 10)
    scale = 0.05
    params = {
        "attn_norm": jnp.ones((dim,), jnp.float32),
        "ffn_norm": jnp.ones((dim,), jnp.float32),
        "wq": scale * jax.random.normal(keys[0], (dim, n_heads * head_dim), jnp.float32),
        "wk": scale * jax.random.normal(keys[1], (dim, n_kv_heads * head_dim), jnp.float32),
        "wv": scale * jax.random.normal(keys[2], (dim, n_kv_heads * head_dim), jnp.float32),
        "wo": scale * jax.random.normal(keys[3], (n_heads * head_dim, dim), jnp.float32),
        "w1": scale * jax.random.normal(keys[4], (dim, hidden), jnp.float32),
        "w2": scale * jax.random.normal(keys[5], (hidden, dim), jnp.float32),
        "w3": scale * jax.random.normal(keys[6], (dim, hidden), jnp.float32),
    }
    x = jax.random.normal(keys[7], (B, S, dim), jnp.float32)

    rope_tables, (cos, sin) = make_rope_tables(S, head_dim, rope_theta)

    kwargs = dict(n_heads=n_heads, n_kv_heads=n_kv_heads, head_dim=head_dim,
                  eps=eps, q_tile=TQ)
    try:
        out = jax.block_until_ready(
            transformer_block(x, params, rope_tables, single_buffer=True, **kwargs))
    except Exception:
        # pl.Buffered(1) single-buffering of grid-invariant weights is a perf-only
        # optimization; fall back to default double-buffering if unsupported.
        out = jax.block_until_ready(
            transformer_block(x, params, rope_tables, single_buffer=False, **kwargs))

    ref = reference_block(
        x, params, cos, sin,
        n_heads=n_heads, n_kv_heads=n_kv_heads, head_dim=head_dim, eps=eps)

    out_np, ref_np = np.asarray(out), np.asarray(ref)
    # bf16 MXU operands / approx-EUP reciprocals vs. an f32 reference: tolerance scaled to
    # the output magnitude (a real bug -- mask, RoPE, GQA mapping -- gives O(max|ref|) error).
    max_ref = float(np.max(np.abs(ref_np)))
    np.testing.assert_allclose(out_np, ref_np, rtol=4e-2, atol=4e-2 * max_ref)

    print("KERNEL_OK")
</pallas_src>

<mosaic_0001>
module attributes {stable_mosaic.version = 11 : i64} {
  func.func @_qkv_rope_kernel(%arg0: i32, %arg1: memref<1x32x512xf32, #tpu.memory_space<vmem>>, %arg2: memref<1x512xf32, #tpu.memory_space<vmem>>, %arg3: memref<512x1024xbf16, #tpu.memory_space<vmem>>, %arg4: memref<32x128xf32, #tpu.memory_space<vmem>>, %arg5: memref<32x128xf32, #tpu.memory_space<vmem>>, %arg6: memref<1x4x32x128xbf16, #tpu.memory_space<vmem>>, %arg7: memref<1x2x32x128xbf16, #tpu.memory_space<vmem>>, %arg8: memref<1x2x32x128xbf16, #tpu.memory_space<vmem>>) attributes {dimension_semantics = [#tpu.dimension_semantics<parallel>], iteration_bounds = array<i64: 2>, scalar_prefetch = 0 : i64, scratch_operands = 0 : i64, tpu.core_type = #tpu.core_type<tc>, window_params = [{transform_indices = @transform_0, window_bounds = array<i64: 1, 32, 512>}, {pipeline_mode = #tpu.pipeline_mode<synchronous>, transform_indices = @transform_1, window_bounds = array<i64: 1, 512>}, {pipeline_mode = #tpu.pipeline_mode<synchronous>, transform_indices = @transform_2, window_bounds = array<i64: 512, 1024>}, {pipeline_mode = #tpu.pipeline_mode<synchronous>, transform_indices = @transform_3, window_bounds = array<i64: 32, 128>}, {pipeline_mode = #tpu.pipeline_mode<synchronous>, transform_indices = @transform_4, window_bounds = array<i64: 32, 128>}, {transform_indices = @transform_5, window_bounds = array<i64: 1, 4, 32, 128>}, {transform_indices = @transform_6, window_bounds = array<i64: 1, 2, 32, 128>}, {transform_indices = @transform_7, window_bounds = array<i64: 1, 2, 32, 128>}]} {
    %c0 = arith.constant 0 : index
    %c0_0 = arith.constant 0 : index
    %c0_1 = arith.constant 0 : index
    %0 = vector.load %arg1[%c0, %c0_0, %c0_1] : memref<1x32x512xf32, #tpu.memory_space<vmem>>, vector<1x32x512xf32>
    %1 = vector.shape_cast %0 : vector<1x32x512xf32> to vector<32x512xf32>
    %2 = arith.mulf %1, %1 : vector<32x512xf32>
    %cst = arith.constant dense<0.000000e+00> : vector<32xf32>
    %3 = vector.multi_reduction <add>, %2, %cst [1] : vector<32x512xf32> to vector<32xf32>
    %4 = vector.shape_cast %3 : vector<32xf32> to vector<32x1xf32>
    %cst_2 = arith.constant 5.120000e+02 : f32
    %5 = vector.broadcast %cst_2 : f32 to vector<32x1xf32>
    %6 = arith.divf %4, %5 : vector<32x1xf32>
    %cst_3 = arith.constant 9.99999974E-6 : f32
    %7 = vector.broadcast %cst_3 : f32 to vector<32x1xf32>
    %8 = arith.addf %6, %7 : vector<32x1xf32>
    %9 = math.rsqrt %8 : vector<32x1xf32>
    %10 = vector.broadcast %9 : vector<32x1xf32> to vector<32x512xf32>
    %11 = arith.mulf %1, %10 : vector<32x512xf32>
    %c0_4 = arith.constant 0 : index
    %c0_5 = arith.constant 0 : index
    %12 = vector.load %arg2[%c0_4, %c0_5] : memref<1x512xf32, #tpu.memory_space<vmem>>, vector<1x512xf32>
    %13 = vector.broadcast %12 : vector<1x512xf32> to vector<32x512xf32>
    %14 = arith.mulf %11, %13 : vector<32x512xf32>
    %15 = arith.truncf %14 : vector<32x512xf32> to vector<32x512xbf16>
    %c0_6 = arith.constant 0 : index
    %c0_7 = arith.constant 0 : index
    %16 = vector.load %arg3[%c0_6, %c0_7] : memref<512x1024xbf16, #tpu.memory_space<vmem>>, vector<512x1024xbf16>
    %cst_8 = arith.constant dense<0.000000e+00> : vector<32x1024xf32>
    %17 = tpu.matmul %15, %16, %cst_8 {dimension_numbers = #tpu.dot_dimension_numbers<[1], [0], [0], [1], [0, 0, 1, 1], [], []>} : vector<32x512xbf16>, vector<512x1024xbf16>, vector<32x1024xf32> -> vector<32x1024xf32>
    %c0_9 = arith.constant 0 : index
    %c0_10 = arith.constant 0 : index
    %18 = vector.load %arg4[%c0_9, %c0_10] : memref<32x128xf32, #tpu.memory_space<vmem>>, vector<32x128xf32>
    %c0_11 = arith.constant 0 : index
    %c0_12 = arith.constant 0 : index
    %19 = vector.load %arg5[%c0_11, %c0_12] : memref<32x128xf32, #tpu.memory_space<vmem>>, vector<32x128xf32>
    %20 = vector.extract_strided_slice %17 {offsets = [0, 0], sizes = [32, 128], strides = [1, 1]} : vector<32x1024xf32> to vector<32x128xf32>
    %21 = arith.mulf %20, %18 : vector<32x128xf32>
    %c64_i32 = arith.constant 64 : i32
    %22 = tpu.dynamic_rotate %20 by %c64_i32 dim 1 : vector<32x128xf32>, i32 -> vector<32x128xf32>
    %23 = arith.mulf %22, %19 : vector<32x128xf32>
    %24 = arith.addf %21, %23 : vector<32x128xf32>
    %25 = arith.truncf %24 : vector<32x128xf32> to vector<32x128xbf16>
    %c0_13 = arith.constant 0 : index
    %c0_14 = arith.constant 0 : index
    %c0_15 = arith.constant 0 : index
    %c0_16 = arith.constant 0 : index
    %26 = vector.load %arg6[%c0_13, %c0_14, %c0_15, %c0_16] : memref<1x4x32x128xbf16, #tpu.memory_space<vmem>>, vector<1x1x32x128xbf16>
    %27 = vector.shape_cast %26 : vector<1x1x32x128xbf16> to vector<32x128xbf16>
    %28 = vector.shape_cast %25 : vector<32x128xbf16> to vector<1x1x32x128xbf16>
    tpu.vector_store %arg6[%c0_13, %c0_14, %c0_15, %c0_16], %28 {strides = array<i32>} : memref<1x4x32x128xbf16, #tpu.memory_space<vmem>>, vector<1x1x32x128xbf16>,
    %29 = vector.extract_strided_slice %17 {offsets = [0, 128], sizes = [32, 128], strides = [1, 1]} : vector<32x1024xf32> to vector<32x128xf32>
    %30 = arith.mulf %29, %18 : vector<32x128xf32>
    %c64_i32_17 = arith.constant 64 : i32
    %31 = tpu.dynamic_rotate %29 by %c64_i32_17 dim 1 : vector<32x128xf32>, i32 -> vector<32x128xf32>
    %32 = arith.mulf %31, %19 : vector<32x128xf32>
    %33 = arith.addf %30, %32 : vector<32x128xf32>
    %34 = arith.truncf %33 : vector<32x128xf32> to vector<32x128xbf16>
    %c0_18 = arith.constant 0 : index
    %c1 = arith.constant 1 : index
    %c0_19 = arith.constant 0 : index
    %c0_20 = arith.constant 0 : index
    %35 = vector.load %arg6[%c0_18, %c1, %c0_19, %c0_20] : memref<1x4x32x128xbf16, #tpu.memory_space<vmem>>, vector<1x1x32x128xbf16>
    %36 = vector.shape_cast %35 : vector<1x1x32x128xbf16> to vector<32x128xbf16>
    %37 = vector.shape_cast %34 : vector<32x128xbf16> to vector<1x1x32x128xbf16>
    tpu.vector_store %arg6[%c0_18, %c1, %c0_19, %c0_20], %37 {strides = array<i32>} : memref<1x4x32x128xbf16, #tpu.memory_space<vmem>>, vector<1x1x32x128xbf16>,
    %38 = vector.extract_strided_slice %17 {offsets = [0, 256], sizes = [32, 128], strides = [1, 1]} : vector<32x1024xf32> to vector<32x128xf32>
    %39 = arith.mulf %38, %18 : vector<32x128xf32>
    %c64_i32_21 = arith.constant 64 : i32
    %40 = tpu.dynamic_rotate %38 by %c64_i32_21 dim 1 : vector<32x128xf32>, i32 -> vector<32x128xf32>
    %41 = arith.mulf %40, %19 : vector<32x128xf32>
    %42 = arith.addf %39, %41 : vector<32x128xf32>
    %43 = arith.truncf %42 : vector<32x128xf32> to vector<32x128xbf16>
    %c0_22 = arith.constant 0 : index
    %c2 = arith.constant 2 : index
    %c0_23 = arith.constant 0 : index
    %c0_24 = arith.constant 0 : index
    %44 = vector.load %arg6[%c0_22, %c2, %c0_23, %c0_24] : memref<1x4x32x128xbf16, #tpu.memory_space<vmem>>, vector<1x1x32x128xbf16>
    %45 = vector.shape_cast %44 : vector<1x1x32x128xbf16> to vector<32x128xbf16>
    %46 = vector.shape_cast %43 : vector<32x128xbf16> to vector<1x1x32x128xbf16>
    tpu.vector_store %arg6[%c0_22, %c2, %c0_23, %c0_24], %46 {strides = array<i32>} : memref<1x4x32x128xbf16, #tpu.memory_space<vmem>>, vector<1x1x32x128xbf16>,
    %47 = vector.extract_strided_slice %17 {offsets = [0, 384], sizes = [32, 128], strides = [1, 1]} : vector<32x1024xf32> to vector<32x128xf32>
    %48 = arith.mulf %47, %18 : vector<32x128xf32>
    %c64_i32_25 = arith.constant 64 : i32
    %49 = tpu.dynamic_rotate %47 by %c64_i32_25 dim 1 : vector<32x128xf32>, i32 -> vector<32x128xf32>
    %50 = arith.mulf %49, %19 : vector<32x128xf32>
    %51 = arith.addf %48, %50 : vector<32x128xf32>
    %52 = arith.truncf %51 : vector<32x128xf32> to vector<32x128xbf16>
    %c0_26 = arith.constant 0 : index
    %c3 = arith.constant 3 : index
    %c0_27 = arith.constant 0 : index
    %c0_28 = arith.constant 0 : index
    %53 = vector.load %arg6[%c0_26, %c3, %c0_27, %c0_28] : memref<1x4x32x128xbf16, #tpu.memory_space<vmem>>, vector<1x1x32x128xbf16>
    %54 = vector.shape_cast %53 : vector<1x1x32x128xbf16> to vector<32x128xbf16>
    %55 = vector.shape_cast %52 : vector<32x128xbf16> to vector<1x1x32x128xbf16>
    tpu.vector_store %arg6[%c0_26, %c3, %c0_27, %c0_28], %55 {strides = array<i32>} : memref<1x4x32x128xbf16, #tpu.memory_space<vmem>>, vector<1x1x32x128xbf16>,
    %56 = vector.extract_strided_slice %17 {offsets = [0, 512], sizes = [32, 128], strides = [1, 1]} : vector<32x1024xf32> to vector<32x128xf32>
    %57 = arith.mulf %56, %18 : vector<32x128xf32>
    %c64_i32_29 = arith.constant 64 : i32
    %58 = tpu.dynamic_rotate %56 by %c64_i32_29 dim 1 : vector<32x128xf32>, i32 -> vector<32x128xf32>
    %59 = arith.mulf %58, %19 : vector<32x128xf32>
    %60 = arith.addf %57, %59 : vector<32x128xf32>
    %61 = arith.truncf %60 : vector<32x128xf32> to vector<32x128xbf16>
    %c0_30 = arith.constant 0 : index
    %c0_31 = arith.constant 0 : index
    %c0_32 = arith.constant 0 : index
    %c0_33 = arith.constant 0 : index
    %62 = vector.load %arg7[%c0_30, %c0_31, %c0_32, %c0_33] : memref<1x2x32x128xbf16, #tpu.memory_space<vmem>>, vector<1x1x32x128xbf16>
    %63 = vector.shape_cast %62 : vector<1x1x32x128xbf16> to vector<32x128xbf16>
    %64 = vector.shape_cast %61 : vector<32x128xbf16> to vector<1x1x32x128xbf16>
    tpu.vector_store %arg7[%c0_30, %c0_31, %c0_32, %c0_33], %64 {strides = array<i32>} : memref<1x2x32x128xbf16, #tpu.memory_space<vmem>>, vector<1x1x32x128xbf16>,
    %65 = vector.extract_strided_slice %17 {offsets = [0, 768], sizes = [32, 128], strides = [1, 1]} : vector<32x1024xf32> to vector<32x128xf32>
    %66 = arith.truncf %65 : vector<32x128xf32> to vector<32x128xbf16>
    %c0_34 = arith.constant 0 : index
    %c0_35 = arith.constant 0 : index
    %c0_36 = arith.constant 0 : index
    %c0_37 = arith.constant 0 : index
    %67 = vector.load %arg8[%c0_34, %c0_35, %c0_36, %c0_37] : memref<1x2x32x128xbf16, #tpu.memory_space<vmem>>, vector<1x1x32x128xbf16>
    %68 = vector.shape_cast %67 : vector<1x1x32x128xbf16> to vector<32x128xbf16>
    %69 = vector.shape_cast %66 : vector<32x128xbf16> to vector<1x1x32x128xbf16>
    tpu.vector_store %arg8[%c0_34, %c0_35, %c0_36, %c0_37], %69 {strides = array<i32>} : memref<1x2x32x128xbf16, #tpu.memory_space<vmem>>, vector<1x1x32x128xbf16>,
    %70 = vector.extract_strided_slice %17 {offsets = [0, 640], sizes = [32, 128], strides = [1, 1]} : vector<32x1024xf32> to vector<32x128xf32>
    %71 = arith.mulf %70, %18 : vector<32x128xf32>
    %c64_i32_38 = arith.constant 64 : i32
    %72 = tpu.dynamic_rotate %70 by %c64_i32_38 dim 1 : vector<32x128xf32>, i32 -> vector<32x128xf32>
    %73 = arith.mulf %72, %19 : vector<32x128xf32>
    %74 = arith.addf %71, %73 : vector<32x128xf32>
    %75 = arith.truncf %74 : vector<32x128xf32> to vector<32x128xbf16>
    %c0_39 = arith.constant 0 : index
    %c1_40 = arith.constant 1 : index
    %c0_41 = arith.constant 0 : index
    %c0_42 = arith.constant 0 : index
    %76 = vector.load %arg7[%c0_39, %c1_40, %c0_41, %c0_42] : memref<1x2x32x128xbf16, #tpu.memory_space<vmem>>, vector<1x1x32x128xbf16>
    %77 = vector.shape_cast %76 : vector<1x1x32x128xbf16> to vector<32x128xbf16>
    %78 = vector.shape_cast %75 : vector<32x128xbf16> to vector<1x1x32x128xbf16>
    tpu.vector_store %arg7[%c0_39, %c1_40, %c0_41, %c0_42], %78 {strides = array<i32>} : memref<1x2x32x128xbf16, #tpu.memory_space<vmem>>, vector<1x1x32x128xbf16>,
    %79 = vector.extract_strided_slice %17 {offsets = [0, 896], sizes = [32, 128], strides = [1, 1]} : vector<32x1024xf32> to vector<32x128xf32>
    %80 = arith.truncf %79 : vector<32x128xf32> to vector<32x128xbf16>
    %c0_43 = arith.constant 0 : index
    %c1_44 = arith.constant 1 : index
    %c0_45 = arith.constant 0 : index
    %c0_46 = arith.constant 0 : index
    %81 = vector.load %arg8[%c0_43, %c1_44, %c0_45, %c0_46] : memref<1x2x32x128xbf16, #tpu.memory_space<vmem>>, vector<1x1x32x128xbf16>
    %82 = vector.shape_cast %81 : vector<1x1x32x128xbf16> to vector<32x128xbf16>
    %83 = vector.shape_cast %80 : vector<32x128xbf16> to vector<1x1x32x128xbf16>
    tpu.vector_store %arg8[%c0_43, %c1_44, %c0_45, %c0_46], %83 {strides = array<i32>} : memref<1x2x32x128xbf16, #tpu.memory_space<vmem>>, vector<1x1x32x128xbf16>,
    return
  }
  func.func @transform_0(%arg0: i32) -> (i32, i32, i32) {
    %c0_i32 = arith.constant 0 : i32
    %c0_i32_0 = arith.constant 0 : i32
    %c0_i32_1 = arith.constant 0 : i32
    return %arg0, %c0_i32, %c0_i32_0 : i32, i32, i32
  }
  func.func @transform_1(%arg0: i32) -> (i32, i32) {
    %c0_i32 = arith.constant 0 : i32
    %c0_i32_0 = arith.constant 0 : i32
    %c0_i32_1 = arith.constant 0 : i32
    return %c0_i32, %c0_i32_0 : i32, i32
  }
  func.func @transform_2(%arg0: i32) -> (i32, i32) {
    %c0_i32 = arith.constant 0 : i32
    %c0_i32_0 = arith.constant 0 : i32
    %c0_i32_1 = arith.constant 0 : i32
    return %c0_i32, %c0_i32_0 : i32, i32
  }
  func.func @transform_3(%arg0: i32) -> (i32, i32) {
    %c0_i32 = arith.constant 0 : i32
    %c0_i32_0 = arith.constant 0 : i32
    %c0_i32_1 = arith.constant 0 : i32
    return %c0_i32, %c0_i32_0 : i32, i32
  }
  func.func @transform_4(%arg0: i32) -> (i32, i32) {
    %c0_i32 = arith.constant 0 : i32
    %c0_i32_0 = arith.constant 0 : i32
    %c0_i32_1 = arith.constant 0 : i32
    return %c0_i32, %c0_i32_0 : i32, i32
  }
  func.func @transform_5(%arg0: i32) -> (i32, i32, i32, i32) {
    %c0_i32 = arith.constant 0 : i32
    %c0_i32_0 = arith.constant 0 : i32
    %c0_i32_1 = arith.constant 0 : i32
    %c0_i32_2 = arith.constant 0 : i32
    return %arg0, %c0_i32, %c0_i32_0, %c0_i32_1 : i32, i32, i32, i32
  }
  func.func @transform_6(%arg0: i32) -> (i32, i32, i32, i32) {
    %c0_i32 = arith.constant 0 : i32
    %c0_i32_0 = arith.constant 0 : i32
    %c0_i32_1 = arith.constant 0 : i32
    %c0_i32_2 = arith.constant 0 : i32
    return %arg0, %c0_i32, %c0_i32_0, %c0_i32_1 : i32, i32, i32, i32
  }
  func.func @transform_7(%arg0: i32) -> (i32, i32, i32, i32) {
    %c0_i32 = arith.constant 0 : i32
    %c0_i32_0 = arith.constant 0 : i32
    %c0_i32_1 = arith.constant 0 : i32
    %c0_i32_2 = arith.constant 0 : i32
    return %arg0, %c0_i32, %c0_i32_0, %c0_i32_1 : i32, i32, i32, i32
  }
}

module attributes {stable_mosaic.version = 11 : i64} {
  func.func @_qkv_rope_kernel(%arg0: i32, %arg1: memref<1x32x512xf32, #tpu.memory_space<vmem>>, %arg2: memref<1x512xf32, #tpu.memory_space<vmem>>, %arg3: memref<512x1024xbf16, #tpu.memory_space<vmem>>, %arg4: memref<32x128xf32, #tpu.memory_space<vmem>>, %arg5: memref<32x128xf32, #tpu.memory_space<vmem>>, %arg6: memref<1x4x32x128xbf16, #tpu.memory_space<vmem>>, %arg7: memref<1x2x32x128xbf16, #tpu.memory_space<vmem>>, %arg8: memref<1x2x32x128xbf16, #tpu.memory_space<vmem>>) attributes {dimension_semantics = [#tpu.dimension_semantics<parallel>], iteration_bounds = array<i64: 2>, scalar_prefetch = 0 : i64, scratch_operands = 0 : i64, tpu.core_type = #tpu.core_type<tc>, window_params = [{transform_indices = @transform_0, window_bounds = array<i64: 1, 32, 512>}, {pipeline_mode = #tpu.pipeline_mode<synchronous>, transform_indices = @transform_1, window_bounds = array<i64: 1, 512>}, {pipeline_mode = #tpu.pipeline_mode<synchronous>, transform_indices = @transform_2, window_bounds = array<i64: 512, 1024>}, {pipeline_mode = #tpu.pipeline_mode<synchronous>, transform_indices = @transform_3, window_bounds = array<i64: 32, 128>}, {pipeline_mode = #tpu.pipeline_mode<synchronous>, transform_indices = @transform_4, window_bounds = array<i64: 32, 128>}, {transform_indices = @transform_5, window_bounds = array<i64: 1, 4, 32, 128>}, {transform_indices = @transform_6, window_bounds = array<i64: 1, 2, 32, 128>}, {transform_indices = @transform_7, window_bounds = array<i64: 1, 2, 32, 128>}]} {
    %c0 = arith.constant 0 : index
    %c0_0 = arith.constant 0 : index
    %c0_1 = arith.constant 0 : index
    %0 = vector.load %arg1[%c0, %c0_0, %c0_1] : memref<1x32x512xf32, #tpu.memory_space<vmem>>, vector<1x32x512xf32>
    %1 = vector.shape_cast %0 : vector<1x32x512xf32> to vector<32x512xf32>
    %2 = arith.mulf %1, %1 : vector<32x512xf32>
    %cst = arith.constant dense<0.000000e+00> : vector<32xf32>
    %3 = vector.multi_reduction <add>, %2, %cst [1] : vector<32x512xf32> to vector<32xf32>
    %4 = vector.shape_cast %3 : vector<32xf32> to vector<32x1xf32>
    %cst_2 = arith.constant 5.120000e+02 : f32
    %5 = vector.broadcast %cst_2 : f32 to vector<32x1xf32>
    %6 = arith.divf %4, %5 : vector<32x1xf32>
    %cst_3 = arith.constant 9.99999974E-6 : f32
    %7 = vector.broadcast %cst_3 : f32 to vector<32x1xf32>
    %8 = arith.addf %6, %7 : vector<32x1xf32>
    %9 = math.rsqrt %8 : vector<32x1xf32>
    %10 = vector.broadcast %9 : vector<32x1xf32> to vector<32x512xf32>
    %11 = arith.mulf %1, %10 : vector<32x512xf32>
    %c0_4 = arith.constant 0 : index
    %c0_5 = arith.constant 0 : index
    %12 = vector.load %arg2[%c0_4, %c0_5] : memref<1x512xf32, #tpu.memory_space<vmem>>, vector<1x512xf32>
    %13 = vector.broadcast %12 : vector<1x512xf32> to vector<32x512xf32>
    %14 = arith.mulf %11, %13 : vector<32x512xf32>
    %15 = arith.truncf %14 : vector<32x512xf32> to vector<32x512xbf16>
    %c0_6 = arith.constant 0 : index
    %c0_7 = arith.constant 0 : index
    %16 = vector.load %arg3[%c0_6, %c0_7] : memref<512x1024xbf16, #tpu.memory_space<vmem>>, vector<512x1024xbf16>
    %cst_8 = arith.constant dense<0.000000e+00> : vector<32x1024xf32>
    %17 = tpu.matmul %15, %16, %cst_8 {dimension_numbers = #tpu.dot_dimension_numbers<[1], [0], [0], [1], [0, 0, 1, 1], [], []>} : vector<32x512xbf16>, vector<512x1024xbf16>, vector<32x1024xf32> -> vector<32x1024xf32>
    %c0_9 = arith.constant 0 : index
    %c0_10 = arith.constant 0 : index
    %18 = vector.load %arg4[%c0_9, %c0_10] : memref<32x128xf32, #tpu.memory_space<vmem>>, vector<32x128xf32>
    %c0_11 = arith.constant 0 : index
    %c0_12 = arith.constant 0 : index
    %19 = vector.load %arg5[%c0_11, %c0_12] : memref<32x128xf32, #tpu.memory_space<vmem>>, vector<32x128xf32>
    %20 = vector.extract_strided_slice %17 {offsets = [0, 0], sizes = [32, 128], strides = [1, 1]} : vector<32x1024xf32> to vector<32x128xf32>
    %21 = arith.mulf %20, %18 : vector<32x128xf32>
    %c64_i32 = arith.constant 64 : i32
    %22 = tpu.dynamic_rotate %20 by %c64_i32 dim 1 : vector<32x128xf32>, i32 -> vector<32x128xf32>
    %23 = arith.mulf %22, %19 : vector<32x128xf32>
    %24 = arith.addf %21, %23 : vector<32x128xf32>
    %25 = arith.truncf %24 : vector<32x128xf32> to vector<32x128xbf16>
    %c0_13 = arith.constant 0 : index
    %c0_14 = arith.constant 0 : index
    %c0_15 = arith.constant 0 : index
    %c0_16 = arith.constant 0 : index
    %26 = vector.load %arg6[%c0_13, %c0_14, %c0_15, %c0_16] : memref<1x4x32x128xbf16, #tpu.memory_space<vmem>>, vector<1x1x32x128xbf16>
    %27 = vector.shape_cast %26 : vector<1x1x32x128xbf16> to vector<32x128xbf16>
    %28 = vector.shape_cast %25 : vector<32x128xbf16> to vector<1x1x32x128xbf16>
    tpu.vector_store %arg6[%c0_13, %c0_14, %c0_15, %c0_16], %28 {strides = array<i32>} : memref<1x4x32x128xbf16, #tpu.memory_space<vmem>>, vector<1x1x32x128xbf16>,
    %29 = vector.extract_strided_slice %17 {offsets = [0, 128], sizes = [32, 128], strides = [1, 1]} : vector<32x1024xf32> to vector<32x128xf32>
    %30 = arith.mulf %29, %18 : vector<32x128xf32>
    %c64_i32_17 = arith.constant 64 : i32
    %31 = tpu.dynamic_rotate %29 by %c64_i32_17 dim 1 : vector<32x128xf32>, i32 -> vector<32x128xf32>
    %32 = arith.mulf %31, %19 : vector<32x128xf32>
    %33 = arith.addf %30, %32 : vector<32x128xf32>
    %34 = arith.truncf %33 : vector<32x128xf32> to vector<32x128xbf16>
    %c0_18 = arith.constant 0 : index
    %c1 = arith.constant 1 : index
    %c0_19 = arith.constant 0 : index
    %c0_20 = arith.constant 0 : index
    %35 = vector.load %arg6[%c0_18, %c1, %c0_19, %c0_20] : memref<1x4x32x128xbf16, #tpu.memory_space<vmem>>, vector<1x1x32x128xbf16>
    %36 = vector.shape_cast %35 : vector<1x1x32x128xbf16> to vector<32x128xbf16>
    %37 = vector.shape_cast %34 : vector<32x128xbf16> to vector<1x1x32x128xbf16>
    tpu.vector_store %arg6[%c0_18, %c1, %c0_19, %c0_20], %37 {strides = array<i32>} : memref<1x4x32x128xbf16, #tpu.memory_space<vmem>>, vector<1x1x32x128xbf16>,
    %38 = vector.extract_strided_slice %17 {offsets = [0, 256], sizes = [32, 128], strides = [1, 1]} : vector<32x1024xf32> to vector<32x128xf32>
    %39 = arith.mulf %38, %18 : vector<32x128xf32>
    %c64_i32_21 = arith.constant 64 : i32
    %40 = tpu.dynamic_rotate %38 by %c64_i32_21 dim 1 : vector<32x128xf32>, i32 -> vector<32x128xf32>
    %41 = arith.mulf %40, %19 : vector<32x128xf32>
    %42 = arith.addf %39, %41 : vector<32x128xf32>
    %43 = arith.truncf %42 : vector<32x128xf32> to vector<32x128xbf16>
    %c0_22 = arith.constant 0 : index
    %c2 = arith.constant 2 : index
    %c0_23 = arith.constant 0 : index
    %c0_24 = arith.constant 0 : index
    %44 = vector.load %arg6[%c0_22, %c2, %c0_23, %c0_24] : memref<1x4x32x128xbf16, #tpu.memory_space<vmem>>, vector<1x1x32x128xbf16>
    %45 = vector.shape_cast %44 : vector<1x1x32x128xbf16> to vector<32x128xbf16>
    %46 = vector.shape_cast %43 : vector<32x128xbf16> to vector<1x1x32x128xbf16>
    tpu.vector_store %arg6[%c0_22, %c2, %c0_23, %c0_24], %46 {strides = array<i32>} : memref<1x4x32x128xbf16, #tpu.memory_space<vmem>>, vector<1x1x32x128xbf16>,
    %47 = vector.extract_strided_slice %17 {offsets = [0, 384], sizes = [32, 128], strides = [1, 1]} : vector<32x1024xf32> to vector<32x128xf32>
    %48 = arith.mulf %47, %18 : vector<32x128xf32>
    %c64_i32_25 = arith.constant 64 : i32
    %49 = tpu.dynamic_rotate %47 by %c64_i32_25 dim 1 : vector<32x128xf32>, i32 -> vector<32x128xf32>
    %50 = arith.mulf %49, %19 : vector<32x128xf32>
    %51 = arith.addf %48, %50 : vector<32x128xf32>
    %52 = arith.truncf %51 : vector<32x128xf32> to vector<32x128xbf16>
    %c0_26 = arith.constant 0 : index
    %c3 = arith.constant 3 : index
    %c0_27 = arith.constant 0 : index
    %c0_28 = arith.constant 0 : index
    %53 = vector.load %arg6[%c0_26, %c3, %c0_27, %c0_28] : memref<1x4x32x128xbf16, #tpu.memory_space<vmem>>, vector<1x1x32x128xbf16>
    %54 = vector.shape_cast %53 : vector<1x1x32x128xbf16> to vector<32x128xbf16>
    %55 = vector.shape_cast %52 : vector<32x128xbf16> to vector<1x1x32x128xbf16>
    tpu.vector_store %arg6[%c0_26, %c3, %c0_27, %c0_28], %55 {strides = array<i32>} : memref<1x4x32x128xbf16, #tpu.memory_space<vmem>>, vector<1x1x32x128xbf16>,
    %56 = vector.extract_strided_slice %17 {offsets = [0, 512], sizes = [32, 128], strides = [1, 1]} : vector<32x1024xf32> to vector<32x128xf32>
    %57 = arith.mulf %56, %18 : vector<32x128xf32>
    %c64_i32_29 = arith.constant 64 : i32
    %58 = tpu.dynamic_rotate %56 by %c64_i32_29 dim 1 : vector<32x128xf32>, i32 -> vector<32x128xf32>
    %59 = arith.mulf %58, %19 : vector<32x128xf32>
    %60 = arith.addf %57, %59 : vector<32x128xf32>
    %61 = arith.truncf %60 : vector<32x128xf32> to vector<32x128xbf16>
    %c0_30 = arith.constant 0 : index
    %c0_31 = arith.constant 0 : index
    %c0_32 = arith.constant 0 : index
    %c0_33 = arith.constant 0 : index
    %62 = vector.load %arg7[%c0_30, %c0_31, %c0_32, %c0_33] : memref<1x2x32x128xbf16, #tpu.memory_space<vmem>>, vector<1x1x32x128xbf16>
    %63 = vector.shape_cast %62 : vector<1x1x32x128xbf16> to vector<32x128xbf16>
    %64 = vector.shape_cast %61 : vector<32x128xbf16> to vector<1x1x32x128xbf16>
    tpu.vector_store %arg7[%c0_30, %c0_31, %c0_32, %c0_33], %64 {strides = array<i32>} : memref<1x2x32x128xbf16, #tpu.memory_space<vmem>>, vector<1x1x32x128xbf16>,
    %65 = vector.extract_strided_slice %17 {offsets = [0, 768], sizes = [32, 128], strides = [1, 1]} : vector<32x1024xf32> to vector<32x128xf32>
    %66 = arith.truncf %65 : vector<32x128xf32> to vector<32x128xbf16>
    %c0_34 = arith.constant 0 : index
    %c0_35 = arith.constant 0 : index
    %c0_36 = arith.constant 0 : index
    %c0_37 = arith.constant 0 : index
    %67 = vector.load %arg8[%c0_34, %c0_35, %c0_36, %c0_37] : memref<1x2x32x128xbf16, #tpu.memory_space<vmem>>, vector<1x1x32x128xbf16>
    %68 = vector.shape_cast %67 : vector<1x1x32x128xbf16> to vector<32x128xbf16>
    %69 = vector.shape_cast %66 : vector<32x128xbf16> to vector<1x1x32x128xbf16>
    tpu.vector_store %arg8[%c0_34, %c0_35, %c0_36, %c0_37], %69 {strides = array<i32>} : memref<1x2x32x128xbf16, #tpu.memory_space<vmem>>, vector<1x1x32x128xbf16>,
    %70 = vector.extract_strided_slice %17 {offsets = [0, 640], sizes = [32, 128], strides = [1, 1]} : vector<32x1024xf32> to vector<32x128xf32>
    %71 = arith.mulf %70, %18 : vector<32x128xf32>
    %c64_i32_38 = arith.constant 64 : i32
    %72 = tpu.dynamic_rotate %70 by %c64_i32_38 dim 1 : vector<32x128xf32>, i32 -> vector<32x128xf32>
    %73 = arith.mulf %72, %19 : vector<32x128xf32>
    %74 = arith.addf %71, %73 : vector<32x128xf32>
    %75 = arith.truncf %74 : vector<32x128xf32> to vector<32x128xbf16>
    %c0_39 = arith.constant 0 : index
    %c1_40 = arith.constant 1 : index
    %c0_41 = arith.constant 0 : index
    %c0_42 = arith.constant 0 : index
    %76 = vector.load %arg7[%c0_39, %c1_40, %c0_41, %c0_42] : memref<1x2x32x128xbf16, #tpu.memory_space<vmem>>, vector<1x1x32x128xbf16>
    %77 = vector.shape_cast %76 : vector<1x1x32x128xbf16> to vector<32x128xbf16>
    %78 = vector.shape_cast %75 : vector<32x128xbf16> to vector<1x1x32x128xbf16>
    tpu.vector_store %arg7[%c0_39, %c1_40, %c0_41, %c0_42], %78 {strides = array<i32>} : memref<1x2x32x128xbf16, #tpu.memory_space<vmem>>, vector<1x1x32x128xbf16>,
    %79 = vector.extract_strided_slice %17 {offsets = [0, 896], sizes = [32, 128], strides = [1, 1]} : vector<32x1024xf32> to vector<32x128xf32>
    %80 = arith.truncf %79 : vector<32x128xf32> to vector<32x128xbf16>
    %c0_43 = arith.constant 0 : index
    %c1_44 = arith.constant 1 : index
    %c0_45 = arith.constant 0 : index
    %c0_46 = arith.constant 0 : index
    %81 = vector.load %arg8[%c0_43, %c1_44, %c0_45, %c0_46] : memref<1x2x32x128xbf16, #tpu.memory_space<vmem>>, vector<1x1x32x128xbf16>
    %82 = vector.shape_cast %81 : vector<1x1x32x128xbf16> to vector<32x128xbf16>
    %83 = vector.shape_cast %80 : vector<32x128xbf16> to vector<1x1x32x128xbf16>
    tpu.vector_store %arg8[%c0_43, %c1_44, %c0_45, %c0_46], %83 {strides = array<i32>} : memref<1x2x32x128xbf16, #tpu.memory_space<vmem>>, vector<1x1x32x128xbf16>,
    return
  }
  func.func @transform_0(%arg0: i32) -> (i32, i32, i32) {
    %c0_i32 = arith.constant 0 : i32
    %c0_i32_0 = arith.constant 0 : i32
    %c0_i32_1 = arith.constant 0 : i32
    return %arg0, %c0_i32, %c0_i32_0 : i32, i32, i32
  }
  func.func @transform_1(%arg0: i32) -> (i32, i32) {
    %c0_i32 = arith.constant 0 : i32
    %c0_i32_0 = arith.constant 0 : i32
    %c0_i32_1 = arith.constant 0 : i32
    return %c0_i32, %c0_i32_0 : i32, i32
  }
  func.func @transform_2(%arg0: i32) -> (i32, i32) {
    %c0_i32 = arith.constant 0 : i32
    %c0_i32_0 = arith.constant 0 : i32
    %c0_i32_1 = arith.constant 0 : i32
    return %c0_i32, %c0_i32_0 : i32, i32
  }
  func.func @transform_3(%arg0: i32) -> (i32, i32) {
    %c0_i32 = arith.constant 0 : i32
    %c0_i32_0 = arith.constant 0 : i32
    %c0_i32_1 = arith.constant 0 : i32
    return %c0_i32, %c0_i32_0 : i32, i32
  }
  func.func @transform_4(%arg0: i32) -> (i32, i32) {
    %c0_i32 = arith.constant 0 : i32
    %c0_i32_0 = arith.constant 0 : i32
    %c0_i32_1 = arith.constant 0 : i32
    return %c0_i32, %c0_i32_0 : i32, i32
  }
  func.func @transform_5(%arg0: i32) -> (i32, i32, i32, i32) {
    %c0_i32 = arith.constant 0 : i32
    %c0_i32_0 = arith.constant 0 : i32
    %c0_i32_1 = arith.constant 0 : i32
    %c0_i32_2 = arith.constant 0 : i32
    return %arg0, %c0_i32, %c0_i32_0, %c0_i32_1 : i32, i32, i32, i32
  }
  func.func @transform_6(%arg0: i32) -> (i32, i32, i32, i32) {
    %c0_i32 = arith.constant 0 : i32
    %c0_i32_0 = arith.constant 0 : i32
    %c0_i32_1 = arith.constant 0 : i32
    %c0_i32_2 = arith.constant 0 : i32
    return %arg0, %c0_i32, %c0_i32_0, %c0_i32_1 : i32, i32, i32, i32
  }
  func.func @transform_7(%arg0: i32) -> (i32, i32, i32, i32) {
    %c0_i32 = arith.constant 0 : i32
    %c0_i32_0 = arith.constant 0 : i32
    %c0_i32_1 = arith.constant 0 : i32
    %c0_i32_2 = arith.constant 0 : i32
    return %arg0, %c0_i32, %c0_i32_0, %c0_i32_1 : i32, i32, i32, i32
  }
}

</mosaic_0001>

<llo_original>
// kernel: tpu_custom_call.1
$region0: #{tpu_custom_call.1}
  #allocation0 [shape = 'u32[]', space=smem, size = 0x4, offset = 0x4, fixed_abs, tag = 'smem constant byte address 0x4 - core index']
  #allocation1 [shape = 'u32[72,128]{1,0:T(1,128)}', space=vmem, size = 0x9000, scoped, tag = 'internal scratch']
  %s0 = inlined_call_operand.hbm [shape: f32[2,32,512], index: 0, kind: input, shape index: {}]
  %s1 = inlined_call_operand.hbm [shape: f32[1,512], index: 1, kind: input, shape index: {}]
  %s2 = inlined_call_operand.hbm [shape: bf16[512,1024], index: 2, kind: input, shape index: {}]
  %s3 = inlined_call_operand.hbm [shape: f32[32,128], index: 3, kind: input, shape index: {}]
  %s4 = inlined_call_operand.hbm [shape: f32[32,128], index: 4, kind: input, shape index: {}]
  %s5 = inlined_call_operand.hbm [shape: bf16[2,4,32,128], index: 5, kind: output, shape index: {0}]
  %s6 = inlined_call_operand.hbm [shape: bf16[2,2,32,128], index: 6, kind: output, shape index: {1}]
  %s7 = inlined_call_operand.hbm [shape: bf16[2,2,32,128], index: 7, kind: output, shape index: {2}]
  %8 = xla_tuple %s5, %s6, %s7
  %s9 = sld [smem:[#allocation0]]
  $region89: #{tpu_custom_call.1} parent=0
    _
  %s11 = ssub.s32 1, %s9
  %s12 = scalar_select 0, %s11, %s9
  $region1: #{tpu_custom_call.1} parent=0
    #allocation2 [shape = 'u8[131072]{0}', space=vmem, size = 0x20000, scoped, tag = 'input window, operand 0']
    #allocation3 [shape = 's32[2]{0}', space=sflag, size = 0x8, scoped, tag = 'scoped memory for tpu_custom_call.1']
    #allocation4 [shape = 's32[2]{0}', space=sflag, size = 0x8, scoped, tag = 'scoped memory for tpu_custom_call.1']
    #allocation5 [shape = 'u8[2048]{0}', space=vmem, size = 0x800, scoped, tag = 'input window, operand 1, single buffered']
    #allocation6 [shape = 's32[1]{0}', space=sflag, size = 0x4, scoped, tag = 'scoped memory for tpu_custom_call.1']
    #allocation7 [shape = 'u8[1048576]{0}', space=vmem, size = 0x100000, scoped, tag = 'input window, operand 2, single buffered']
    #allocation8 [shape = 'u8[16384]{0}', space=vmem, size = 0x4000, scoped, tag = 'input window, operand 3, single buffered']
    #allocation9 [shape = 's32[1]{0}', space=sflag, size = 0x4, scoped, tag = 'scoped memory for tpu_custom_call.1']
    #allocation10 [shape = 'u8[16384]{0}', space=vmem, size = 0x4000, scoped, tag = 'input window, operand 4, single buffered']
    #allocation11 [shape = 'u8[65536]{0}', space=vmem, size = 0x10000, scoped, tag = 'output window, operand 0']
    #allocation12 [shape = 'u8[32768]{0}', space=vmem, size = 0x8000, scoped, tag = 'output window, operand 1']
    #allocation13 [shape = 's32[2]{0}', space=sflag, size = 0x8, scoped, tag = 'scoped memory for tpu_custom_call.1']
    #allocation14 [shape = 'u8[32768]{0}', space=vmem, size = 0x8000, scoped, tag = 'output window, operand 2']
    %13 = vsyncpa [#allocation3], 0
    %s14 = scalar_lea.sflag [#allocation3], 1
    %15 = vsyncpa %s14, 0
    %16 = vsyncpa [#allocation6], 0
    %17 = vsyncpa [#allocation9], 0
    %18 = vsyncpa [#allocation4], 0
    %s19 = scalar_lea.sflag [#allocation4], 1
    %20 = vsyncpa %s19, 0
    %21 = vsyncpa [#allocation13], 0
    %s22 = scalar_lea.sflag [#allocation13], 1
    %23 = vsyncpa %s22, 0
    loop: start=0, step=1, limit=4
    $region2: #{tpu_custom_call.1} parent=1 // loop_pre_header
      _
    $region3: #{tpu_custom_call.1} parent=1 // loop_header
      %s25 = sphi 0, %s29
      %p26 = scmp.ge.s32.totalorder %s25, 4
      %s35 = sphi 0, %s37
      %s38 = sphi 0, %s35
      %s39 = sphi 0, %s38
      %s55 = sphi 0, %s39
      %s59 = sphi 0, %s59
      %s61 = sphi 0, %s59
      %s62 = sphi 0, %s61
      %s76 = sphi 0, %s62
      %s80 = sphi 0, %s80
      %s82 = sphi 0, %s80
      %s83 = sphi 0, %s82
      %s97 = sphi 0, %s83
      %s101 = sphi 0, %s101
      %s103 = sphi 0, %s101
      %s104 = sphi 0, %s103
      %s118 = sphi 0, %s104
      %s122 = sphi 0, %s122
      %s124 = sphi 0, %s122
      %s125 = sphi 0, %s124
      %s139 = sphi 0, %s125
      %s145 = sphi 0, %s147
      %s148 = sphi 0, %s145
      %s149 = sphi 0, %s148
      %s165 = sphi 0, %s149
      %s171 = sphi 0, %s173
      %s174 = sphi 0, %s171
      %s175 = sphi 0, %s174
      %s191 = sphi 0, %s175
      %s197 = sphi 0, %s199
      %s200 = sphi 0, %s197
      %s201 = sphi 0, %s200
      %s217 = sphi 0, %s201
    $region4: #{tpu_custom_call.1} parent=1 // loop_header_branch
      %28 = sbr.rel (%p26) target = $region8
    $region5: #{tpu_custom_call.1} parent=1 // loop_body
      %s30 = ssub.s32 %s25, 1
      %s31 = ssub.s32 %s25, 2
      %s32 = sadd.s32 %s25, 1
      %s33 = ssub.s32 %s25, %s32
      %p34 = scmp.eq.s32.totalorder %s33, 0
      %s36 = sadd.s32 %s35, 1
      %s37 = scalar_select %p34, %s35, %s36
      %p40 = pneg %p34
      %p41 = scmp.eq.s32.totalorder %s25, 1
      %p42 = por %p40, %p41
      %p43 = scmp.ne.s32.totalorder %s35, %s38
      %p44 = scmp.eq.s32.totalorder %s25, 0
      %p45 = por %p43, %p44
      %p46 = scmp.ne.s32.totalorder %s35, %s38
      %p47 = scmp.eq.s32.totalorder %s30, 1
      %p48 = por %p46, %p47
      %p49 = scmp.ne.s32.totalorder %s38, %s39
      %p50 = scmp.eq.s32.totalorder %s30, 0
      %p51 = por %p49, %p50
      %p52 = scmp.ne.s32.totalorder %s38, %s39
      %p53 = scmp.eq.s32.totalorder %s31, 1
      %p54 = por %p52, %p53
      %p56 = scmp.ne.s32.totalorder %s39, %s55
      %p57 = scmp.eq.s32.totalorder %s31, 0
      %p58 = por %p56, %p57
      %s60 = sadd.s32 %s59, 1
      %p63 = scmp.eq.s32.totalorder %s25, 1
      %p64 = scmp.ne.s32.totalorder %s59, %s61
      %p65 = scmp.eq.s32.totalorder %s25, 0
      %p66 = por %p64, %p65
      %p67 = scmp.ne.s32.totalorder %s59, %s61
      %p68 = scmp.eq.s32.totalorder %s30, 1
      %p69 = por %p67, %p68
      %p70 = scmp.ne.s32.totalorder %s61, %s62
      %p71 = scmp.eq.s32.totalorder %s30, 0
      %p72 = por %p70, %p71
      %p73 = scmp.ne.s32.totalorder %s61, %s62
      %p74 = scmp.eq.s32.totalorder %s31, 1
      %p75 = por %p73, %p74
      %p77 = scmp.ne.s32.totalorder %s62, %s76
      %p78 = scmp.eq.s32.totalorder %s31, 0
      %p79 = por %p77, %p78
      %s81 = sadd.s32 %s80, 1
      %p84 = scmp.eq.s32.totalorder %s25, 1
      %p85 = scmp.ne.s32.totalorder %s80, %s82
      %p86 = scmp.eq.s32.totalorder %s25, 0
      %p87 = por %p85, %p86
      %p88 = scmp.ne.s32.totalorder %s80, %s82
      %p89 = scmp.eq.s32.totalorder %s30, 1
      %p90 = por %p88, %p89
      %p91 = scmp.ne.s32.totalorder %s82, %s83
      %p92 = scmp.eq.s32.totalorder %s30, 0
      %p93 = por %p91, %p92
      %p94 = scmp.ne.s32.totalorder %s82, %s83
      %p95 = scmp.eq.s32.totalorder %s31, 1
      %p96 = por %p94, %p95
      %p98 = scmp.ne.s32.totalorder %s83, %s97
      %p99 = scmp.eq.s32.totalorder %s31, 0
      %p100 = por %p98, %p99
      %s102 = sadd.s32 %s101, 1
      %p105 = scmp.eq.s32.totalorder %s25, 1
      %p106 = scmp.ne.s32.totalorder %s101, %s103
      %p107 = scmp.eq.s32.totalorder %s25, 0
      %p108 = por %p106, %p107
      %p109 = scmp.ne.s32.totalorder %s101, %s103
      %p110 = scmp.eq.s32.totalorder %s30, 1
      %p111 = por %p109, %p110
      %p112 = scmp.ne.s32.totalorder %s103, %s104
      %p113 = scmp.eq.s32.totalorder %s30, 0
      %p114 = por %p112, %p113
      %p115 = scmp.ne.s32.totalorder %s103, %s104
      %p116 = scmp.eq.s32.totalorder %s31, 1
      %p117 = por %p115, %p116
      %p119 = scmp.ne.s32.totalorder %s104, %s118
      %p120 = scmp.eq.s32.totalorder %s31, 0
      %p121 = por %p119, %p120
      %s123 = sadd.s32 %s122, 1
      %p126 = scmp.eq.s32.totalorder %s25, 1
      %p127 = scmp.ne.s32.totalorder %s122, %s124
      %p128 = scmp.eq.s32.totalorder %s25, 0
      %p129 = por %p127, %p128
      %p130 = scmp.ne.s32.totalorder %s122, %s124
      %p131 = scmp.eq.s32.totalorder %s30, 1
      %p132 = por %p130, %p131
      %p133 = scmp.ne.s32.totalorder %s124, %s125
      %p134 = scmp.eq.s32.totalorder %s30, 0
      %p135 = por %p133, %p134
      %p136 = scmp.ne.s32.totalorder %s124, %s125
      %p137 = scmp.eq.s32.totalorder %s31, 1
      %p138 = por %p136, %p137
      %p140 = scmp.ne.s32.totalorder %s125, %s139
      %p141 = scmp.eq.s32.totalorder %s31, 0
      %p142 = por %p140, %p141
      %s143 = ssub.s32 %s25, %s32
      %p144 = scmp.eq.s32.totalorder %s143, 0
      %s146 = sadd.s32 %s145, 1
      %s147 = scalar_select %p144, %s145, %s146
      %p150 = pneg %p144
      %p151 = scmp.eq.s32.totalorder %s25, 1
      %p152 = por %p150, %p151
      %p153 = scmp.ne.s32.totalorder %s145, %s148
      %p154 = scmp.eq.s32.totalorder %s25, 0
      %p155 = por %p153, %p154
      %p156 = scmp.ne.s32.totalorder %s145, %s148
      %p157 = scmp.eq.s32.totalorder %s30, 1
      %p158 = por %p156, %p157
      %p159 = scmp.ne.s32.totalorder %s148, %s149
      %p160 = scmp.eq.s32.totalorder %s30, 0
      %p161 = por %p159, %p160
      %p162 = scmp.ne.s32.totalorder %s148, %s149
      %p163 = scmp.eq.s32.totalorder %s31, 1
      %p164 = por %p162, %p163
      %p166 = scmp.ne.s32.totalorder %s149, %s165
      %p167 = scmp.eq.s32.totalorder %s31, 0
      %p168 = por %p166, %p167
      %s169 = ssub.s32 %s25, %s32
      %p170 = scmp.eq.s32.totalorder %s169, 0
      %s172 = sadd.s32 %s171, 1
      %s173 = scalar_select %p170, %s171, %s172
      %p176 = pneg %p170
      %p177 = scmp.eq.s32.totalorder %s25, 1
      %p178 = por %p176, %p177
      %p179 = scmp.ne.s32.totalorder %s171, %s174
      %p180 = scmp.eq.s32.totalorder %s25, 0
      %p181 = por %p179, %p180
      %p182 = scmp.ne.s32.totalorder %s171, %s174
      %p183 = scmp.eq.s32.totalorder %s30, 1
      %p184 = por %p182, %p183
      %p185 = scmp.ne.s32.totalorder %s174, %s175
      %p186 = scmp.eq.s32.totalorder %s30, 0
      %p187 = por %p185, %p186
      %p188 = scmp.ne.s32.totalorder %s174, %s175
      %p189 = scmp.eq.s32.totalorder %s31, 1
      %p190 = por %p188, %p189
      %p192 = scmp.ne.s32.totalorder %s175, %s191
      %p193 = scmp.eq.s32.totalorder %s31, 0
      %p194 = por %p192, %p193
      %s195 = ssub.s32 %s25, %s32
      %p196 = scmp.eq.s32.totalorder %s195, 0
      %s198 = sadd.s32 %s197, 1
      %s199 = scalar_select %p196, %s197, %s198
      %p202 = pneg %p196
      %p203 = scmp.eq.s32.totalorder %s25, 1
      %p204 = por %p202, %p203
      %p205 = scmp.ne.s32.totalorder %s197, %s200
      %p206 = scmp.eq.s32.totalorder %s25, 0
      %p207 = por %p205, %p206
      %p208 = scmp.ne.s32.totalorder %s197, %s200
      %p209 = scmp.eq.s32.totalorder %s30, 1
      %p210 = por %p208, %p209
      %p211 = scmp.ne.s32.totalorder %s200, %s201
      %p212 = scmp.eq.s32.totalorder %s30, 0
      %p213 = por %p211, %p212
      %p214 = scmp.ne.s32.totalorder %s200, %s201
      %p215 = scmp.eq.s32.totalorder %s31, 1
      %p216 = por %p214, %p215
      %p218 = scmp.ne.s32.totalorder %s201, %s217
      %p219 = scmp.eq.s32.totalorder %s31, 0
      %p220 = por %p218, %p219
      %p221 = scmp.le.s32.totalorder 1, %s25
      %p222 = scmp.lt.s32.totalorder %s25, 3
      %p223 = pnand %p221, %p222
      %p224 = pneg %p223
      // Predicated region
      $region9: #{tpu_custom_call.1} parent=5 // pred_check
        _
      $region10: #{tpu_custom_call.1} parent=5 // pred_check_branch
        %226 = sbr.rel (%p223) target = $region12
      $region11: #{tpu_custom_call.1} parent=5 // pred_region
        %s227 = ssub.s32 %s25, 1
        // Predicated region
        $region13: #{tpu_custom_call.1} parent=11 // pred_check
          %p228 = pneg %p72
        $region14: #{tpu_custom_call.1} parent=11 // pred_check_branch
          %230 = sbr.rel (%p228) target = $region16
        $region15: #{tpu_custom_call.1} parent=11 // pred_region
          %232 = vsyncadd [#allocation6], 0
          %s234 = sshll.u32 %s1, 4
          %s235 = int_to_ptr.hbm [resolvable:$true] %s234
          %s236 = sshll.u32 [#allocation5], 4
          %s237 = int_to_ptr.vmem [resolvable:$true] %s236
          %239 = dma.hbm_to_vmem [thread:$0]  %s235, 64, %s237, [#allocation6]
        $region16: #{tpu_custom_call.1} parent=11 // pred_fallthru
          _
        // Predicated region
        $region17: #{tpu_custom_call.1} parent=11 // pred_check
          %p240 = pneg %p93
        $region18: #{tpu_custom_call.1} parent=11 // pred_check_branch
          %242 = sbr.rel (%p240) target = $region20
        $region19: #{tpu_custom_call.1} parent=11 // pred_region
          %244 = vsyncadd [#allocation6], 0
          %s245 = sshll.u32 %s2, 4
          %s246 = int_to_ptr.hbm [resolvable:$true] %s245
          %s247 = sshll.u32 [#allocation7], 4
          %s248 = int_to_ptr.vmem [resolvable:$true] %s247
          %253 = dma.hbm_to_vmem [thread:$0]  %s246, 32768, %s248, [#allocation6], 512, 512, 32
        $region20: #{tpu_custom_call.1} parent=11 // pred_fallthru
          _
        // Predicated region
        $region21: #{tpu_custom_call.1} parent=11 // pred_check
          %p254 = pneg %p114
        $region22: #{tpu_custom_call.1} parent=11 // pred_check_branch
          %256 = sbr.rel (%p254) target = $region24
        $region23: #{tpu_custom_call.1} parent=11 // pred_region
          %258 = vsyncadd [#allocation9], 0
          %s259 = sshll.u32 %s3, 4
          %s260 = int_to_ptr.hbm [resolvable:$true] %s259
          %s261 = sshll.u32 [#allocation8], 4
          %s262 = int_to_ptr.vmem [resolvable:$true] %s261
          %267 = dma.hbm_to_vmem [thread:$0]  %s260, 512, %s262, [#allocation9], 128, 128, 8
        $region24: #{tpu_custom_call.1} parent=11 // pred_fallthru
          _
        // Predicated region
        $region25: #{tpu_custom_call.1} parent=11 // pred_check
          %p268 = pneg %p135
        $region26: #{tpu_custom_call.1} parent=11 // pred_check_branch
          %270 = sbr.rel (%p268) target = $region28
        $region27: #{tpu_custom_call.1} parent=11 // pred_region
          %272 = vsyncadd [#allocation9], 0
          %s273 = sshll.u32 %s4, 4
          %s274 = int_to_ptr.hbm [resolvable:$true] %s273
          %s275 = sshll.u32 [#allocation10], 4
          %s276 = int_to_ptr.vmem [resolvable:$true] %s275
          %281 = dma.hbm_to_vmem [thread:$0]  %s274, 512, %s276, [#allocation9], 128, 128, 8
        $region28: #{tpu_custom_call.1} parent=11 // pred_fallthru
          _
      $region12: #{tpu_custom_call.1} parent=5 // pred_fallthru
        _
      %p282 = scmp.lt.s32.totalorder %s25, 2
      // Predicated region
      $region29: #{tpu_custom_call.1} parent=5 // pred_check
        %p283 = pneg %p282
      $region30: #{tpu_custom_call.1} parent=5 // pred_check_branch
        %285 = sbr.rel (%p283) target = $region32
      $region31: #{tpu_custom_call.1} parent=5 // pred_region
        // Predicated region
        $region33: #{tpu_custom_call.1} parent=31 // pred_check
          %p286 = pneg %p45
        $region34: #{tpu_custom_call.1} parent=31 // pred_check_branch
          %288 = sbr.rel (%p286) target = $region36
        $region35: #{tpu_custom_call.1} parent=31 // pred_region
          %s289 = sand.u32 %s35, 1
          %s290 = scalar_lea.sflag [#allocation3], %s289
          %s291 = sand.u32 %s35, 1
          %s292 = smul.addr %s291, 128
          %s293 = scalar_lea.vmem [#allocation2], %s292
          %295 = vsyncadd %s290, 0
          %s296 = smul.addr %s25, 16
          %s297 = smul.addr %s296, 8
          %s298 = scalar_lea.hbm %s0, %s297
          %s299 = sshll.u32 %s298, 4
          %s300 = int_to_ptr.hbm [resolvable:$true] %s299
          %s301 = sshll.u32 %s293, 4
          %s302 = int_to_ptr.vmem [resolvable:$true] %s301
          %307 = dma.hbm_to_vmem [thread:$0]  %s300, 2048, %s302, %s290, 512, 512, 32
        $region36: #{tpu_custom_call.1} parent=31 // pred_fallthru
          _
      $region32: #{tpu_custom_call.1} parent=5 // pred_fallthru
        _
      %p308 = scmp.le.s32.totalorder 1, %s25
      %p309 = scmp.lt.s32.totalorder %s25, 3
      %p310 = pnand %p308, %p309
      %p311 = pneg %p310
      // Predicated region
      $region37: #{tpu_custom_call.1} parent=5 // pred_check
        _
      $region38: #{tpu_custom_call.1} parent=5 // pred_check_branch
        %313 = sbr.rel (%p310) target = $region40
      $region39: #{tpu_custom_call.1} parent=5 // pred_region
        %s314 = ssub.s32 %s25, 1
        %s315 = sand.u32 %s38, 1
        %s316 = scalar_lea.sflag [#allocation3], %s315
        %s317 = sand.u32 %s38, 1
        %s318 = smul.addr %s317, 128
        %s319 = scalar_lea.vmem [#allocation2], %s318
        // Predicated region
        $region41: #{tpu_custom_call.1} parent=39 // pred_check
          %p320 = pneg %p51
        $region42: #{tpu_custom_call.1} parent=39 // pred_check_branch
          %322 = sbr.rel (%p320) target = $region44
        $region43: #{tpu_custom_call.1} parent=39 // pred_region
          %324 = dma.done %s316, 2048
        $region44: #{tpu_custom_call.1} parent=39 // pred_fallthru
          _
        // Predicated region
        $region45: #{tpu_custom_call.1} parent=39 // pred_check
          %p325 = pneg %p72
        $region46: #{tpu_custom_call.1} parent=39 // pred_check_branch
          %327 = sbr.rel (%p325) target = $region48
        $region47: #{tpu_custom_call.1} parent=39 // pred_region
          %329 = dma.done [#allocation6], 64
        $region48: #{tpu_custom_call.1} parent=39 // pred_fallthru
          _
        // Predicated region
        $region49: #{tpu_custom_call.1} parent=39 // pred_check
          %p330 = pneg %p93
        $region50: #{tpu_custom_call.1} parent=39 // pred_check_branch
          %332 = sbr.rel (%p330) target = $region52
        $region51: #{tpu_custom_call.1} parent=39 // pred_region
          %334 = dma.done [#allocation6], 32768
        $region52: #{tpu_custom_call.1} parent=39 // pred_fallthru
          _
        // Predicated region
        $region53: #{tpu_custom_call.1} parent=39 // pred_check
          %p335 = pneg %p114
        $region54: #{tpu_custom_call.1} parent=39 // pred_check_branch
          %337 = sbr.rel (%p335) target = $region56
        $region55: #{tpu_custom_call.1} parent=39 // pred_region
          %339 = dma.done [#allocation9], 512
        $region56: #{tpu_custom_call.1} parent=39 // pred_fallthru
          _
        // Predicated region
        $region57: #{tpu_custom_call.1} parent=39 // pred_check
          %p340 = pneg %p135
        $region58: #{tpu_custom_call.1} parent=39 // pred_check_branch
          %342 = sbr.rel (%p340) target = $region60
        $region59: #{tpu_custom_call.1} parent=39 // pred_region
          %344 = dma.done [#allocation9], 512
        $region60: #{tpu_custom_call.1} parent=39 // pred_fallthru
          _
        %s345 = sand.u32 %s38, 1
        %s346 = scalar_lea.sflag [#allocation3], %s345
        %s347 = sand.u32 %s38, 1
        %s348 = smul.addr %s347, 128
        %s349 = scalar_lea.vmem [#allocation2], %s348
        %p350 = pneg %p51
        %p351 = pneg %p48
        %p352 = pneg %p72
        %p353 = pneg %p69
        %p354 = pneg %p93
        %p355 = pneg %p90
        %p356 = pneg %p114
        %p357 = pneg %p111
        %p358 = pneg %p135
        %p359 = pneg %p132
        %p360 = pneg %p161
        %p361 = pneg %p158
        %s362 = sand.u32 %s148, 1
        %s363 = scalar_lea.sflag [#allocation4], %s362
        %s364 = sand.u32 %s148, 1
        %s365 = smul.addr %s364, 64
        %s366 = scalar_lea.vmem [#allocation11], %s365
        %p367 = pneg %p187
        %p368 = pneg %p184
        %s369 = sand.u32 %s30, 1
        %s370 = scalar_lea.sflag [#allocation13], %s369
        %s371 = sand.u32 %s174, 1
        %s372 = smul.addr %s371, 32
        %s373 = scalar_lea.vmem [#allocation12], %s372
        %p374 = pneg %p213
        %p375 = pneg %p210
        %s376 = sand.u32 %s30, 1
        %s377 = scalar_lea.sflag [#allocation13], %s376
        %s378 = sand.u32 %s200, 1
        %s379 = smul.addr %s378, 32
        %s380 = scalar_lea.vmem [#allocation14], %s379
        %v381 = vld [vmem:[%s319] sm:$0xff]
        %v382 = vld [vmem:[%s319 + $0x8] sm:$0xff]
        %v383 = vld [vmem:[%s319 + $0x10] sm:$0xff]
        %v384 = vld [vmem:[%s319 + $0x18] sm:$0xff]
        %v385 = vld [vmem:[%s319 + $0x20] sm:$0xff]
        %v386 = vld [vmem:[%s319 + $0x28] sm:$0xff]
        %v387 = vld [vmem:[%s319 + $0x30] sm:$0xff]
        %v388 = vld [vmem:[%s319 + $0x38] sm:$0xff]
        %v389 = vld [vmem:[%s319 + $0x40] sm:$0xff]
        %v390 = vld [vmem:[%s319 + $0x48] sm:$0xff]
        %v391 = vld [vmem:[%s319 + $0x50] sm:$0xff]
        %v392 = vld [vmem:[%s319 + $0x58] sm:$0xff]
        %v393 = vld [vmem:[%s319 + $0x60] sm:$0xff]
        %v394 = vld [vmem:[%s319 + $0x68] sm:$0xff]
        %v395 = vld [vmem:[%s319 + $0x70] sm:$0xff]
        %v396 = vld [vmem:[%s319 + $0x78] sm:$0xff]
        %v397 = vmul.f32 %v381, %v381
        %v398 = vmul.f32 %v382, %v382
        %v399 = vmul.f32 %v383, %v383
        %v400 = vmul.f32 %v384, %v384
        %v401 = vmul.f32 %v385, %v385
        %v402 = vmul.f32 %v386, %v386
        %v403 = vmul.f32 %v387, %v387
        %v404 = vmul.f32 %v388, %v388
        %v405 = vmul.f32 %v389, %v389
        %v406 = vmul.f32 %v390, %v390
        %v407 = vmul.f32 %v391, %v391
        %v408 = vmul.f32 %v392, %v392
        %v409 = vmul.f32 %v393, %v393
        %v410 = vmul.f32 %v394, %v394
        %v411 = vmul.f32 %v395, %v395
        %v412 = vmul.f32 %v396, %v396
        %v413 = vadd.f32 %v397, %v398
        %v414 = vadd.f32 %v413, %v399
        %v415 = vadd.f32 %v414, %v400
        %416 = vadd.xlane.f32.xlu0 %v415
        %v417 = vpop.xlane.xlu0 %416
        %v418 = vadd.f32 %v401, %v402
        %v419 = vadd.f32 %v418, %v403
        %v420 = vadd.f32 %v419, %v404
        %421 = vadd.xlane.f32.xlu0 %v420
        %v422 = vpop.xlane.xlu0 %421
        %v423 = vadd.f32 %v405, %v406
        %v424 = vadd.f32 %v423, %v407
        %v425 = vadd.f32 %v424, %v408
        %426 = vadd.xlane.f32.xlu0 %v425
        %v427 = vpop.xlane.xlu0 %426
        %v428 = vadd.f32 %v409, %v410
        %v429 = vadd.f32 %v428, %v411
        %v430 = vadd.f32 %v429, %v412
        %431 = vadd.xlane.f32.xlu0 %v430
        %v432 = vpop.xlane.xlu0 %431
        %v433 = vrcp.pop 512.0
        %v434 = vmul.f32 512.0, %v433
        %v435 = vsub.f32 1.0, %v434
        %v436 = vmul.f32 %v433, %v435
        %v437 = vadd.f32 %v433, %v436
        %vm438 = vweird.f32 %v433
        %v439 = vsel %vm438, %v433, %v437
        %v440 = vmul.f32 %v417, %v439
        %v441 = vmul.f32 %v422, %v439
        %v442 = vmul.f32 %v427, %v439
        %v443 = vmul.f32 %v432, %v439
        %v444 = vadd.f32 %v440, 1e-05
        %v445 = vadd.f32 %v441, 1e-05
        %v446 = vadd.f32 %v442, 1e-05
        %v447 = vadd.f32 %v443, 1e-05
        %v448 = vrsqrt.pop %v444
        %v449 = vmul.f32 %v448, %v444
        %v450 = vmul.f32 %v449, %v448
        %v451 = vmul.f32 0.5, %v450
        %v452 = vsub.f32 1.5, %v451
        %v453 = vmul.f32 %v448, %v452
        %vm454 = vweird.f32 %v444
        %vm455 = vweird.f32 %v448
        %vm456 = vmor %vm454, %vm455
        %v457 = vsel %vm456, %v448, %v453
        %v458 = vrsqrt.pop %v445
        %v459 = vmul.f32 %v458, %v445
        %v460 = vmul.f32 %v459, %v458
        %v461 = vmul.f32 0.5, %v460
        %v462 = vsub.f32 1.5, %v461
        %v463 = vmul.f32 %v458, %v462
        %vm464 = vweird.f32 %v445
        %vm465 = vweird.f32 %v458
        %vm466 = vmor %vm464, %vm465
        %v467 = vsel %vm466, %v458, %v463
        %v468 = vrsqrt.pop %v446
        %v469 = vmul.f32 %v468, %v446
        %v470 = vmul.f32 %v469, %v468
        %v471 = vmul.f32 0.5, %v470
        %v472 = vsub.f32 1.5, %v471
        %v473 = vmul.f32 %v468, %v472
        %vm474 = vweird.f32 %v446
        %vm475 = vweird.f32 %v468
        %vm476 = vmor %vm474, %vm475
        %v477 = vsel %vm476, %v468, %v473
        %v478 = vrsqrt.pop %v447
        %v479 = vmul.f32 %v478, %v447
        %v480 = vmul.f32 %v479, %v478
        %v481 = vmul.f32 0.5, %v480
        %v482 = vsub.f32 1.5, %v481
        %v483 = vmul.f32 %v478, %v482
        %vm484 = vweird.f32 %v447
        %vm485 = vweird.f32 %v478
        %vm486 = vmor %vm484, %vm485
        %v487 = vsel %vm486, %v478, %v483
        %v488 = vmul.f32 %v381, %v457
        %v489 = vmul.f32 %v382, %v457
        %v490 = vmul.f32 %v383, %v457
        %v491 = vmul.f32 %v384, %v457
        %v492 = vmul.f32 %v385, %v467
        %v493 = vmul.f32 %v386, %v467
        %v494 = vmul.f32 %v387, %v467
        %v495 = vmul.f32 %v388, %v467
        %v496 = vmul.f32 %v389, %v477
        %v497 = vmul.f32 %v390, %v477
        %v498 = vmul.f32 %v391, %v477
        %v499 = vmul.f32 %v392, %v477
        %v500 = vmul.f32 %v393, %v487
        %v501 = vmul.f32 %v394, %v487
        %v502 = vmul.f32 %v395, %v487
        %v503 = vmul.f32 %v396, %v487
        %v504 = vld [vmem:[#allocation5] sm:$0xf]
        %v506 = vperm.slane %v504, 0
        %v507 = vperm.slane %v504, 1
        %v508 = vperm.slane %v504, 2
        %v509 = vperm.slane %v504, 3
        %v514 = vmul.f32 %v488, %v506
        %v515 = vmul.f32 %v489, %v507
        %v516 = vmul.f32 %v490, %v508
        %v517 = vmul.f32 %v491, %v509
        %v518 = vmul.f32 %v492, %v506
        %v519 = vmul.f32 %v493, %v507
        %v520 = vmul.f32 %v494, %v508
        %v521 = vmul.f32 %v495, %v509
        %v522 = vmul.f32 %v496, %v506
        %v523 = vmul.f32 %v497, %v507
        %v524 = vmul.f32 %v498, %v508
        %v525 = vmul.f32 %v499, %v509
        %v526 = vmul.f32 %v500, %v506
        %v527 = vmul.f32 %v501, %v507
        %v528 = vmul.f32 %v502, %v508
        %v529 = vmul.f32 %v503, %v509
        %v530 = vpack.c.bf16 %v518, %v514
        %v531 = vpack.c.bf16 %v519, %v515
        %v532 = vpack.c.bf16 %v520, %v516
        %v533 = vpack.c.bf16 %v521, %v517
        %v534 = vpack.c.bf16 %v526, %v522
        %v535 = vpack.c.bf16 %v527, %v523
        %v536 = vpack.c.bf16 %v528, %v524
        %v537 = vpack.c.bf16 %v529, %v525
        %v538 = vld [vmem:[#allocation7] sm:$0xff]
        %v539 = vld [vmem:[#allocation7 + $0x8] sm:$0xff]
        %v540 = vld [vmem:[#allocation7 + $0x10] sm:$0xff]
        %v541 = vld [vmem:[#allocation7 + $0x18] sm:$0xff]
        %v542 = vld [vmem:[#allocation7 + $0x20] sm:$0xff]
        %v543 = vld [vmem:[#allocation7 + $0x28] sm:$0xff]
        %v544 = vld [vmem:[#allocation7 + $0x30] sm:$0xff]
        %v545 = vld [vmem:[#allocation7 + $0x38] sm:$0xff]
        %v546 = vld [vmem:[#allocation7 + $0x40] sm:$0xff]
        %v547 = vld [vmem:[#allocation7 + $0x48] sm:$0xff]
        %v548 = vld [vmem:[#allocation7 + $0x50] sm:$0xff]
        %v549 = vld [vmem:[#allocation7 + $0x58] sm:$0xff]
        %v550 = vld [vmem:[#allocation7 + $0x60] sm:$0xff]
        %v551 = vld [vmem:[#allocation7 + $0x68] sm:$0xff]
        %v552 = vld [vmem:[#allocation7 + $0x70] sm:$0xff]
        %v553 = vld [vmem:[#allocation7 + $0x78] sm:$0xff]
        %v554 = vld [vmem:[#allocation7 + $0x80] sm:$0xff]
        %v555 = vld [vmem:[#allocation7 + $0x88] sm:$0xff]
        %v556 = vld [vmem:[#allocation7 + $0x90] sm:$0xff]
        %v557 = vld [vmem:[#allocation7 + $0x98] sm:$0xff]
        %v558 = vld [vmem:[#allocation7 + $0xa0] sm:$0xff]
        %v559 = vld [vmem:[#allocation7 + $0xa8] sm:$0xff]
        %v560 = vld [vmem:[#allocation7 + $0xb0] sm:$0xff]
        %v561 = vld [vmem:[#allocation7 + $0xb8] sm:$0xff]
        %v562 = vld [vmem:[#allocation7 + $0xc0] sm:$0xff]
        %v563 = vld [vmem:[#allocation7 + $0xc8] sm:$0xff]
        %v564 = vld [vmem:[#allocation7 + $0xd0] sm:$0xff]
        %v565 = vld [vmem:[#allocation7 + $0xd8] sm:$0xff]
        %v566 = vld [vmem:[#allocation7 + $0xe0] sm:$0xff]
        %v567 = vld [vmem:[#allocation7 + $0xe8] sm:$0xff]
        %v568 = vld [vmem:[#allocation7 + $0xf0] sm:$0xff]
        %v569 = vld [vmem:[#allocation7 + $0xf8] sm:$0xff]
        %v570 = vld [vmem:[#allocation7 + $0x100] sm:$0xff]
        %v571 = vld [vmem:[#allocation7 + $0x108] sm:$0xff]
        %v572 = vld [vmem:[#allocation7 + $0x110] sm:$0xff]
        %v573 = vld [vmem:[#allocation7 + $0x118] sm:$0xff]
        %v574 = vld [vmem:[#allocation7 + $0x120] sm:$0xff]
        %v575 = vld [vmem:[#allocation7 + $0x128] sm:$0xff]
        %v576 = vld [vmem:[#allocation7 + $0x130] sm:$0xff]
        %v577 = vld [vmem:[#allocation7 + $0x138] sm:$0xff]
        %v578 = vld [vmem:[#allocation7 + $0x140] sm:$0xff]
        %v579 = vld [vmem:[#allocation7 + $0x148] sm:$0xff]
        %v580 = vld [vmem:[#allocation7 + $0x150] sm:$0xff]
        %v581 = vld [vmem:[#allocation7 + $0x158] sm:$0xff]
        %v582 = vld [vmem:[#allocation7 + $0x160] sm:$0xff]
        %v583 = vld [vmem:[#allocation7 + $0x168] sm:$0xff]
        %v584 = vld [vmem:[#allocation7 + $0x170] sm:$0xff]
        %v585 = vld [vmem:[#allocation7 + $0x178] sm:$0xff]
        %v586 = vld [vmem:[#allocation7 + $0x180] sm:$0xff]
        %v587 = vld [vmem:[#allocation7 + $0x188] sm:$0xff]
        %v588 = vld [vmem:[#allocation7 + $0x190] sm:$0xff]
        %v589 = vld [vmem:[#allocation7 + $0x198] sm:$0xff]
        %v590 = vld [vmem:[#allocation7 + $0x1a0] sm:$0xff]
        %v591 = vld [vmem:[#allocation7 + $0x1a8] sm:$0xff]
        %v592 = vld [vmem:[#allocation7 + $0x1b0] sm:$0xff]
        %v593 = vld [vmem:[#allocation7 + $0x1b8] sm:$0xff]
        %v594 = vld [vmem:[#allocation7 + $0x1c0] sm:$0xff]
        %v595 = vld [vmem:[#allocation7 + $0x1c8] sm:$0xff]
        %v596 = vld [vmem:[#allocation7 + $0x1d0] sm:$0xff]
        %v597 = vld [vmem:[#allocation7 + $0x1d8] sm:$0xff]
        %v598 = vld [vmem:[#allocation7 + $0x1e0] sm:$0xff]
        %v599 = vld [vmem:[#allocation7 + $0x1e8] sm:$0xff]
        %v600 = vld [vmem:[#allocation7 + $0x1f0] sm:$0xff]
        %v601 = vld [vmem:[#allocation7 + $0x1f8] sm:$0xff]
        %v602 = vld [vmem:[#allocation7 + $0x200] sm:$0xff]
        %v603 = vld [vmem:[#allocation7 + $0x208] sm:$0xff]
        %v604 = vld [vmem:[#allocation7 + $0x210] sm:$0xff]
        %v605 = vld [vmem:[#allocation7 + $0x218] sm:$0xff]
        %v606 = vld [vmem:[#allocation7 + $0x220] sm:$0xff]
        %v607 = vld [vmem:[#allocation7 + $0x228] sm:$0xff]
        %v608 = vld [vmem:[#allocation7 + $0x230] sm:$0xff]
        %v609 = vld [vmem:[#allocation7 + $0x238] sm:$0xff]
        %v610 = vld [vmem:[#allocation7 + $0x240] sm:$0xff]
        %v611 = vld [vmem:[#allocation7 + $0x248] sm:$0xff]
        %v612 = vld [vmem:[#allocation7 + $0x250] sm:$0xff]
        %v613 = vld [vmem:[#allocation7 + $0x258] sm:$0xff]
        %v614 = vld [vmem:[#allocation7 + $0x260] sm:$0xff]
        %v615 = vld [vmem:[#allocation7 + $0x268] sm:$0xff]
        %v616 = vld [vmem:[#allocation7 + $0x270] sm:$0xff]
        %v617 = vld [vmem:[#allocation7 + $0x278] sm:$0xff]
        %v618 = vld [vmem:[#allocation7 + $0x280] sm:$0xff]
        %v619 = vld [vmem:[#allocation7 + $0x288] sm:$0xff]
        %v620 = vld [vmem:[#allocation7 + $0x290] sm:$0xff]
        %v621 = vld [vmem:[#allocation7 + $0x298] sm:$0xff]
        %v622 = vld [vmem:[#allocation7 + $0x2a0] sm:$0xff]
        %v623 = vld [vmem:[#allocation7 + $0x2a8] sm:$0xff]
        %v624 = vld [vmem:[#allocation7 + $0x2b0] sm:$0xff]
        %v625 = vld [vmem:[#allocation7 + $0x2b8] sm:$0xff]
        %v626 = vld [vmem:[#allocation7 + $0x2c0] sm:$0xff]
        %v627 = vld [vmem:[#allocation7 + $0x2c8] sm:$0xff]
        %v628 = vld [vmem:[#allocation7 + $0x2d0] sm:$0xff]
        %v629 = vld [vmem:[#allocation7 + $0x2d8] sm:$0xff]
        %v630 = vld [vmem:[#allocation7 + $0x2e0] sm:$0xff]
        %v631 = vld [vmem:[#allocation7 + $0x2e8] sm:$0xff]
        %v632 = vld [vmem:[#allocation7 + $0x2f0] sm:$0xff]
        %v633 = vld [vmem:[#allocation7 + $0x2f8] sm:$0xff]
        %v634 = vld [vmem:[#allocation7 + $0x300] sm:$0xff]
        %v635 = vld [vmem:[#allocation7 + $0x308] sm:$0xff]
        %v636 = vld [vmem:[#allocation7 + $0x310] sm:$0xff]
        %v637 = vld [vmem:[#allocation7 + $0x318] sm:$0xff]
        %v638 = vld [vmem:[#allocation7 + $0x320] sm:$0xff]
        %v639 = vld [vmem:[#allocation7 + $0x328] sm:$0xff]
        %v640 = vld [vmem:[#allocation7 + $0x330] sm:$0xff]
        %v641 = vld [vmem:[#allocation7 + $0x338] sm:$0xff]
        %v642 = vld [vmem:[#allocation7 + $0x340] sm:$0xff]
        %v643 = vld [vmem:[#allocation7 + $0x348] sm:$0xff]
        %v644 = vld [vmem:[#allocation7 + $0x350] sm:$0xff]
        %v645 = vld [vmem:[#allocation7 + $0x358] sm:$0xff]
        %v646 = vld [vmem:[#allocation7 + $0x360] sm:$0xff]
        %v647 = vld [vmem:[#allocation7 + $0x368] sm:$0xff]
        %v648 = vld [vmem:[#allocation7 + $0x370] sm:$0xff]
        %v649 = vld [vmem:[#allocation7 + $0x378] sm:$0xff]
        %v650 = vld [vmem:[#allocation7 + $0x380] sm:$0xff]
        %v651 = vld [vmem:[#allocation7 + $0x388] sm:$0xff]
        %v652 = vld [vmem:[#allocation7 + $0x390] sm:$0xff]
        %v653 = vld [vmem:[#allocation7 + $0x398] sm:$0xff]
        %v654 = vld [vmem:[#allocation7 + $0x3a0] sm:$0xff]
        %v655 = vld [vmem:[#allocation7 + $0x3a8] sm:$0xff]
        %v656 = vld [vmem:[#allocation7 + $0x3b0] sm:$0xff]
        %v657 = vld [vmem:[#allocation7 + $0x3b8] sm:$0xff]
        %v658 = vld [vmem:[#allocation7 + $0x3c0] sm:$0xff]
        %v659 = vld [vmem:[#allocation7 + $0x3c8] sm:$0xff]
        %v660 = vld [vmem:[#allocation7 + $0x3d0] sm:$0xff]
        %v661 = vld [vmem:[#allocation7 + $0x3d8] sm:$0xff]
        %v662 = vld [vmem:[#allocation7 + $0x3e0] sm:$0xff]
        %v663 = vld [vmem:[#allocation7 + $0x3e8] sm:$0xff]
        %v664 = vld [vmem:[#allocation7 + $0x3f0] sm:$0xff]
        %v665 = vld [vmem:[#allocation7 + $0x3f8] sm:$0xff]
        %v666 = vld [vmem:[#allocation7 + $0x400] sm:$0xff]
        %v667 = vld [vmem:[#allocation7 + $0x408] sm:$0xff]
        %v668 = vld [vmem:[#allocation7 + $0x410] sm:$0xff]
        %v669 = vld [vmem:[#allocation7 + $0x418] sm:$0xff]
        %v670 = vld [vmem:[#allocation7 + $0x420] sm:$0xff]
        %v671 = vld [vmem:[#allocation7 + $0x428] sm:$0xff]
        %v672 = vld [vmem:[#allocation7 + $0x430] sm:$0xff]
        %v673 = vld [vmem:[#allocation7 + $0x438] sm:$0xff]
        %v674 = vld [vmem:[#allocation7 + $0x440] sm:$0xff]
        %v675 = vld [vmem:[#allocation7 + $0x448] sm:$0xff]
        %v676 = vld [vmem:[#allocation7 + $0x450] sm:$0xff]
        %v677 = vld [vmem:[#allocation7 + $0x458] sm:$0xff]
        %v678 = vld [vmem:[#allocation7 + $0x460] sm:$0xff]
        %v679 = vld [vmem:[#allocation7 + $0x468] sm:$0xff]
        %v680 = vld [vmem:[#allocation7 + $0x470] sm:$0xff]
        %v681 = vld [vmem:[#allocation7 + $0x478] sm:$0xff]
        %v682 = vld [vmem:[#allocation7 + $0x480] sm:$0xff]
        %v683 = vld [vmem:[#allocation7 + $0x488] sm:$0xff]
        %v684 = vld [vmem:[#allocation7 + $0x490] sm:$0xff]
        %v685 = vld [vmem:[#allocation7 + $0x498] sm:$0xff]
        %v686 = vld [vmem:[#allocation7 + $0x4a0] sm:$0xff]
        %v687 = vld [vmem:[#allocation7 + $0x4a8] sm:$0xff]
        %v688 = vld [vmem:[#allocation7 + $0x4b0] sm:$0xff]
        %v689 = vld [vmem:[#allocation7 + $0x4b8] sm:$0xff]
        %v690 = vld [vmem:[#allocation7 + $0x4c0] sm:$0xff]
        %v691 = vld [vmem:[#allocation7 + $0x4c8] sm:$0xff]
        %v692 = vld [vmem:[#allocation7 + $0x4d0] sm:$0xff]
        %v693 = vld [vmem:[#allocation7 + $0x4d8] sm:$0xff]
        %v694 = vld [vmem:[#allocation7 + $0x4e0] sm:$0xff]
        %v695 = vld [vmem:[#allocation7 + $0x4e8] sm:$0xff]
        %v696 = vld [vmem:[#allocation7 + $0x4f0] sm:$0xff]
        %v697 = vld [vmem:[#allocation7 + $0x4f8] sm:$0xff]
        %v698 = vld [vmem:[#allocation7 + $0x500] sm:$0xff]
        %v699 = vld [vmem:[#allocation7 + $0x508] sm:$0xff]
        %v700 = vld [vmem:[#allocation7 + $0x510] sm:$0xff]
        %v701 = vld [vmem:[#allocation7 + $0x518] sm:$0xff]
        %v702 = vld [vmem:[#allocation7 + $0x520] sm:$0xff]
        %v703 = vld [vmem:[#allocation7 + $0x528] sm:$0xff]
        %v704 = vld [vmem:[#allocation7 + $0x530] sm:$0xff]
        %v705 = vld [vmem:[#allocation7 + $0x538] sm:$0xff]
        %v706 = vld [vmem:[#allocation7 + $0x540] sm:$0xff]
        %v707 = vld [vmem:[#allocation7 + $0x548] sm:$0xff]
        %v708 = vld [vmem:[#allocation7 + $0x550] sm:$0xff]
        %v709 = vld [vmem:[#allocation7 + $0x558] sm:$0xff]
        %v710 = vld [vmem:[#allocation7 + $0x560] sm:$0xff]
        %v711 = vld [vmem:[#allocation7 + $0x568] sm:$0xff]
        %v712 = vld [vmem:[#allocation7 + $0x570] sm:$0xff]
        %v713 = vld [vmem:[#allocation7 + $0x578] sm:$0xff]
        %v714 = vld [vmem:[#allocation7 + $0x580] sm:$0xff]
        %v715 = vld [vmem:[#allocation7 + $0x588] sm:$0xff]
        %v716 = vld [vmem:[#allocation7 + $0x590] sm:$0xff]
        %v717 = vld [vmem:[#allocation7 + $0x598] sm:$0xff]
        %v718 = vld [vmem:[#allocation7 + $0x5a0] sm:$0xff]
        %v719 = vld [vmem:[#allocation7 + $0x5a8] sm:$0xff]
        %v720 = vld [vmem:[#allocation7 + $0x5b0] sm:$0xff]
        %v721 = vld [vmem:[#allocation7 + $0x5b8] sm:$0xff]
        %v722 = vld [vmem:[#allocation7 + $0x5c0] sm:$0xff]
        %v723 = vld [vmem:[#allocation7 + $0x5c8] sm:$0xff]
        %v724 = vld [vmem:[#allocation7 + $0x5d0] sm:$0xff]
        %v725 = vld [vmem:[#allocation7 + $0x5d8] sm:$0xff]
        %v726 = vld [vmem:[#allocation7 + $0x5e0] sm:$0xff]
        %v727 = vld [vmem:[#allocation7 + $0x5e8] sm:$0xff]
        %v728 = vld [vmem:[#allocation7 + $0x5f0] sm:$0xff]
        %v729 = vld [vmem:[#allocation7 + $0x5f8] sm:$0xff]
        %v730 = vld [vmem:[#allocation7 + $0x600] sm:$0xff]
        %v731 = vld [vmem:[#allocation7 + $0x608] sm:$0xff]
        %v732 = vld [vmem:[#allocation7 + $0x610] sm:$0xff]
        %v733 = vld [vmem:[#allocation7 + $0x618] sm:$0xff]
        %v734 = vld [vmem:[#allocation7 + $0x620] sm:$0xff]
        %v735 = vld [vmem:[#allocation7 + $0x628] sm:$0xff]
        %v736 = vld [vmem:[#allocation7 + $0x630] sm:$0xff]
        %v737 = vld [vmem:[#allocation7 + $0x638] sm:$0xff]
        %v738 = vld [vmem:[#allocation7 + $0x640] sm:$0xff]
        %v739 = vld [vmem:[#allocation7 + $0x648] sm:$0xff]
        %v740 = vld [vmem:[#allocation7 + $0x650] sm:$0xff]
        %v741 = vld [vmem:[#allocation7 + $0x658] sm:$0xff]
        %v742 = vld [vmem:[#allocation7 + $0x660] sm:$0xff]
        %v743 = vld [vmem:[#allocation7 + $0x668] sm:$0xff]
        %v744 = vld [vmem:[#allocation7 + $0x670] sm:$0xff]
        %v745 = vld [vmem:[#allocation7 + $0x678] sm:$0xff]
        %v746 = vld [vmem:[#allocation7 + $0x680] sm:$0xff]
        %v747 = vld [vmem:[#allocation7 + $0x688] sm:$0xff]
        %v748 = vld [vmem:[#allocation7 + $0x690] sm:$0xff]
        %v749 = vld [vmem:[#allocation7 + $0x698] sm:$0xff]
        %v750 = vld [vmem:[#allocation7 + $0x6a0] sm:$0xff]
        %v751 = vld [vmem:[#allocation7 + $0x6a8] sm:$0xff]
        %v752 = vld [vmem:[#allocation7 + $0x6b0] sm:$0xff]
        %v753 = vld [vmem:[#allocation7 + $0x6b8] sm:$0xff]
        %v754 = vld [vmem:[#allocation7 + $0x6c0] sm:$0xff]
        %v755 = vld [vmem:[#allocation7 + $0x6c8] sm:$0xff]
        %v756 = vld [vmem:[#allocation7 + $0x6d0] sm:$0xff]
        %v757 = vld [vmem:[#allocation7 + $0x6d8] sm:$0xff]
        %v758 = vld [vmem:[#allocation7 + $0x6e0] sm:$0xff]
        %v759 = vld [vmem:[#allocation7 + $0x6e8] sm:$0xff]
        %v760 = vld [vmem:[#allocation7 + $0x6f0] sm:$0xff]
        %v761 = vld [vmem:[#allocation7 + $0x6f8] sm:$0xff]
        %v762 = vld [vmem:[#allocation7 + $0x700] sm:$0xff]
        %v763 = vld [vmem:[#allocation7 + $0x708] sm:$0xff]
        %v764 = vld [vmem:[#allocation7 + $0x710] sm:$0xff]
        %v765 = vld [vmem:[#allocation7 + $0x718] sm:$0xff]
        %v766 = vld [vmem:[#allocation7 + $0x720] sm:$0xff]
        %v767 = vld [vmem:[#allocation7 + $0x728] sm:$0xff]
        %v768 = vld [vmem:[#allocation7 + $0x730] sm:$0xff]
        %v769 = vld [vmem:[#allocation7 + $0x738] sm:$0xff]
        %v770 = vld [vmem:[#allocation7 + $0x740] sm:$0xff]
        %v771 = vld [vmem:[#allocation7 + $0x748] sm:$0xff]
        %v772 = vld [vmem:[#allocation7 + $0x750] sm:$0xff]
        %v773 = vld [vmem:[#allocation7 + $0x758] sm:$0xff]
        %v774 = vld [vmem:[#allocation7 + $0x760] sm:$0xff]
        %v775 = vld [vmem:[#allocation7 + $0x768] sm:$0xff]
        %v776 = vld [vmem:[#allocation7 + $0x770] sm:$0xff]
        %v777 = vld [vmem:[#allocation7 + $0x778] sm:$0xff]
        %v778 = vld [vmem:[#allocation7 + $0x780] sm:$0xff]
        %v779 = vld [vmem:[#allocation7 + $0x788] sm:$0xff]
        %v780 = vld [vmem:[#allocation7 + $0x790] sm:$0xff]
        %v781 = vld [vmem:[#allocation7 + $0x798] sm:$0xff]
        %v782 = vld [vmem:[#allocation7 + $0x7a0] sm:$0xff]
        %v783 = vld [vmem:[#allocation7 + $0x7a8] sm:$0xff]
        %v784 = vld [vmem:[#allocation7 + $0x7b0] sm:$0xff]
        %v785 = vld [vmem:[#allocation7 + $0x7b8] sm:$0xff]
        %v786 = vld [vmem:[#allocation7 + $0x7c0] sm:$0xff]
        %v787 = vld [vmem:[#allocation7 + $0x7c8] sm:$0xff]
        %v788 = vld [vmem:[#allocation7 + $0x7d0] sm:$0xff]
        %v789 = vld [vmem:[#allocation7 + $0x7d8] sm:$0xff]
        %v790 = vld [vmem:[#allocation7 + $0x7e0] sm:$0xff]
        %v791 = vld [vmem:[#allocation7 + $0x7e8] sm:$0xff]
        %v792 = vld [vmem:[#allocation7 + $0x7f0] sm:$0xff]
        %v793 = vld [vmem:[#allocation7 + $0x7f8] sm:$0xff]
        %v1050 = vunpack.c.l.b16 %v538
        %v1051 = vunpack.c.h.b16 %v538
        %v1052 = vunpack.c.l.b16 %v539
        %v1053 = vunpack.c.h.b16 %v539
        %v1054 = vunpack.c.l.b16 %v540
        %v1055 = vunpack.c.h.b16 %v540
        %v1056 = vunpack.c.l.b16 %v541
        %v1057 = vunpack.c.h.b16 %v541
        %v1058 = vunpack.c.l.b16 %v542
        %v1059 = vunpack.c.h.b16 %v542
        %v1060 = vunpack.c.l.b16 %v543
        %v1061 = vunpack.c.h.b16 %v543
        %v1062 = vunpack.c.l.b16 %v544
        %v1063 = vunpack.c.h.b16 %v544
        %v1064 = vunpack.c.l.b16 %v545
        %v1065 = vunpack.c.h.b16 %v545
        %v1066 = vunpack.c.l.b16 %v546
        %v1067 = vunpack.c.h.b16 %v546
        %v1068 = vunpack.c.l.b16 %v547
        %v1069 = vunpack.c.h.b16 %v547
        %v1070 = vunpack.c.l.b16 %v548
        %v1071 = vunpack.c.h.b16 %v548
        %v1072 = vunpack.c.l.b16 %v549
        %v1073 = vunpack.c.h.b16 %v549
        %v1074 = vunpack.c.l.b16 %v550
        %v1075 = vunpack.c.h.b16 %v550
        %v1076 = vunpack.c.l.b16 %v551
        %v1077 = vunpack.c.h.b16 %v551
        %v1078 = vunpack.c.l.b16 %v552
        %v1079 = vunpack.c.h.b16 %v552
        %v1080 = vunpack.c.l.b16 %v553
        %v1081 = vunpack.c.h.b16 %v553
        %v1082 = vunpack.c.l.b16 %v554
        %v1083 = vunpack.c.h.b16 %v554
        %v1084 = vunpack.c.l.b16 %v555
        %v1085 = vunpack.c.h.b16 %v555
        %v1086 = vunpack.c.l.b16 %v556
        %v1087 = vunpack.c.h.b16 %v556
        %v1088 = vunpack.c.l.b16 %v557
        %v1089 = vunpack.c.h.b16 %v557
        %v1090 = vunpack.c.l.b16 %v558
        %v1091 = vunpack.c.h.b16 %v558
        %v1092 = vunpack.c.l.b16 %v559
        %v1093 = vunpack.c.h.b16 %v559
        %v1094 = vunpack.c.l.b16 %v560
        %v1095 = vunpack.c.h.b16 %v560
        %v1096 = vunpack.c.l.b16 %v561
        %v1097 = vunpack.c.h.b16 %v561
        %v1098 = vunpack.c.l.b16 %v562
        %v1099 = vunpack.c.h.b16 %v562
        %v1100 = vunpack.c.l.b16 %v563
        %v1101 = vunpack.c.h.b16 %v563
        %v1102 = vunpack.c.l.b16 %v564
        %v1103 = vunpack.c.h.b16 %v564
        %v1104 = vunpack.c.l.b16 %v565
        %v1105 = vunpack.c.h.b16 %v565
        %v1106 = vunpack.c.l.b16 %v566
        %v1107 = vunpack.c.h.b16 %v566
        %v1108 = vunpack.c.l.b16 %v567
        %v1109 = vunpack.c.h.b16 %v567
        %v1110 = vunpack.c.l.b16 %v568
        %v1111 = vunpack.c.h.b16 %v568
        %v1112 = vunpack.c.l.b16 %v569
        %v1113 = vunpack.c.h.b16 %v569
        %v1114 = vunpack.c.l.b16 %v570
        %v1115 = vunpack.c.h.b16 %v570
        %v1116 = vunpack.c.l.b16 %v571
        %v1117 = vunpack.c.h.b16 %v571
        %v1118 = vunpack.c.l.b16 %v572
        %v1119 = vunpack.c.h.b16 %v572
        %v1120 = vunpack.c.l.b16 %v573
        %v1121 = vunpack.c.h.b16 %v573
        %v1122 = vunpack.c.l.b16 %v574
        %v1123 = vunpack.c.h.b16 %v574
        %v1124 = vunpack.c.l.b16 %v575
        %v1125 = vunpack.c.h.b16 %v575
        %v1126 = vunpack.c.l.b16 %v576
        %v1127 = vunpack.c.h.b16 %v576
        %v1128 = vunpack.c.l.b16 %v577
        %v1129 = vunpack.c.h.b16 %v577
        %v1130 = vunpack.c.l.b16 %v578
        %v1131 = vunpack.c.h.b16 %v578
        %v1132 = vunpack.c.l.b16 %v579
        %v1133 = vunpack.c.h.b16 %v579
        %v1134 = vunpack.c.l.b16 %v580
        %v1135 = vunpack.c.h.b16 %v580
        %v1136 = vunpack.c.l.b16 %v581
        %v1137 = vunpack.c.h.b16 %v581
        %v1138 = vunpack.c.l.b16 %v582
        %v1139 = vunpack.c.h.b16 %v582
        %v1140 = vunpack.c.l.b16 %v583
        %v1141 = vunpack.c.h.b16 %v583
        %v1142 = vunpack.c.l.b16 %v584
        %v1143 = vunpack.c.h.b16 %v584
        %v1144 = vunpack.c.l.b16 %v585
        %v1145 = vunpack.c.h.b16 %v585
        %v1146 = vunpack.c.l.b16 %v586
        %v1147 = vunpack.c.h.b16 %v586
        %v1148 = vunpack.c.l.b16 %v587
        %v1149 = vunpack.c.h.b16 %v587
        %v1150 = vunpack.c.l.b16 %v588
        %v1151 = vunpack.c.h.b16 %v588
        %v1152 = vunpack.c.l.b16 %v589
        %v1153 = vunpack.c.h.b16 %v589
        %v1154 = vunpack.c.l.b16 %v590
        %v1155 = vunpack.c.h.b16 %v590
        %v1156 = vunpack.c.l.b16 %v591
        %v1157 = vunpack.c.h.b16 %v591
        %v1158 = vunpack.c.l.b16 %v592
        %v1159 = vunpack.c.h.b16 %v592
        %v1160 = vunpack.c.l.b16 %v593
        %v1161 = vunpack.c.h.b16 %v593
        %v1162 = vunpack.c.l.b16 %v594
        %v1163 = vunpack.c.h.b16 %v594
        %v1164 = vunpack.c.l.b16 %v595
        %v1165 = vunpack.c.h.b16 %v595
        %v1166 = vunpack.c.l.b16 %v596
        %v1167 = vunpack.c.h.b16 %v596
        %v1168 = vunpack.c.l.b16 %v597
        %v1169 = vunpack.c.h.b16 %v597
        %v1170 = vunpack.c.l.b16 %v598
        %v1171 = vunpack.c.h.b16 %v598
        %v1172 = vunpack.c.l.b16 %v599
        %v1173 = vunpack.c.h.b16 %v599
        %v1174 = vunpack.c.l.b16 %v600
        %v1175 = vunpack.c.h.b16 %v600
        %v1176 = vunpack.c.l.b16 %v601
        %v1177 = vunpack.c.h.b16 %v601
        %v1178 = vunpack.c.l.b16 %v602
        %v1179 = vunpack.c.h.b16 %v602
        %v1180 = vunpack.c.l.b16 %v603
        %v1181 = vunpack.c.h.b16 %v603
        %v1182 = vunpack.c.l.b16 %v604
        %v1183 = vunpack.c.h.b16 %v604
        %v1184 = vunpack.c.l.b16 %v605
        %v1185 = vunpack.c.h.b16 %v605
        %v1186 = vunpack.c.l.b16 %v606
        %v1187 = vunpack.c.h.b16 %v606
        %v1188 = vunpack.c.l.b16 %v607
        %v1189 = vunpack.c.h.b16 %v607
        %v1190 = vunpack.c.l.b16 %v608
        %v1191 = vunpack.c.h.b16 %v608
        %v1192 = vunpack.c.l.b16 %v609
        %v1193 = vunpack.c.h.b16 %v609
        %v1194 = vunpack.c.l.b16 %v610
        %v1195 = vunpack.c.h.b16 %v610
        %v1196 = vunpack.c.l.b16 %v611
        %v1197 = vunpack.c.h.b16 %v611
        %v1198 = vunpack.c.l.b16 %v612
        %v1199 = vunpack.c.h.b16 %v612
        %v1200 = vunpack.c.l.b16 %v613
        %v1201 = vunpack.c.h.b16 %v613
        %v1202 = vunpack.c.l.b16 %v614
        %v1203 = vunpack.c.h.b16 %v614
        %v1204 = vunpack.c.l.b16 %v615
        %v1205 = vunpack.c.h.b16 %v615
        %v1206 = vunpack.c.l.b16 %v616
        %v1207 = vunpack.c.h.b16 %v616
        %v1208 = vunpack.c.l.b16 %v617
        %v1209 = vunpack.c.h.b16 %v617
        %v1210 = vunpack.c.l.b16 %v618
        %v1211 = vunpack.c.h.b16 %v618
        %v1212 = vunpack.c.l.b16 %v619
        %v1213 = vunpack.c.h.b16 %v619
        %v1214 = vunpack.c.l.b16 %v620
        %v1215 = vunpack.c.h.b16 %v620
        %v1216 = vunpack.c.l.b16 %v621
        %v1217 = vunpack.c.h.b16 %v621
        %v1218 = vunpack.c.l.b16 %v622
        %v1219 = vunpack.c.h.b16 %v622
        %v1220 = vunpack.c.l.b16 %v623
        %v1221 = vunpack.c.h.b16 %v623
        %v1222 = vunpack.c.l.b16 %v624
        %v1223 = vunpack.c.h.b16 %v624
        %v1224 = vunpack.c.l.b16 %v625
        %v1225 = vunpack.c.h.b16 %v625
        %v1226 = vunpack.c.l.b16 %v626
        %v1227 = vunpack.c.h.b16 %v626
        %v1228 = vunpack.c.l.b16 %v627
        %v1229 = vunpack.c.h.b16 %v627
        %v1230 = vunpack.c.l.b16 %v628
        %v1231 = vunpack.c.h.b16 %v628
        %v1232 = vunpack.c.l.b16 %v629
        %v1233 = vunpack.c.h.b16 %v629
        %v1234 = vunpack.c.l.b16 %v630
        %v1235 = vunpack.c.h.b16 %v630
        %v1236 = vunpack.c.l.b16 %v631
        %v1237 = vunpack.c.h.b16 %v631
        %v1238 = vunpack.c.l.b16 %v632
        %v1239 = vunpack.c.h.b16 %v632
        %v1240 = vunpack.c.l.b16 %v633
        %v1241 = vunpack.c.h.b16 %v633
        %v1242 = vunpack.c.l.b16 %v634
        %v1243 = vunpack.c.h.b16 %v634
        %v1244 = vunpack.c.l.b16 %v635
        %v1245 = vunpack.c.h.b16 %v635
        %v1246 = vunpack.c.l.b16 %v636
        %v1247 = vunpack.c.h.b16 %v636
        %v1248 = vunpack.c.l.b16 %v637
        %v1249 = vunpack.c.h.b16 %v637
        %v1250 = vunpack.c.l.b16 %v638
        %v1251 = vunpack.c.h.b16 %v638
        %v1252 = vunpack.c.l.b16 %v639
        %v1253 = vunpack.c.h.b16 %v639
        %v1254 = vunpack.c.l.b16 %v640
        %v1255 = vunpack.c.h.b16 %v640
        %v1256 = vunpack.c.l.b16 %v641
        %v1257 = vunpack.c.h.b16 %v641
        %v1258 = vunpack.c.l.b16 %v642
        %v1259 = vunpack.c.h.b16 %v642
        %v1260 = vunpack.c.l.b16 %v643
        %v1261 = vunpack.c.h.b16 %v643
        %v1262 = vunpack.c.l.b16 %v644
        %v1263 = vunpack.c.h.b16 %v644
        %v1264 = vunpack.c.l.b16 %v645
        %v1265 = vunpack.c.h.b16 %v645
        %v1266 = vunpack.c.l.b16 %v646
        %v1267 = vunpack.c.h.b16 %v646
        %v1268 = vunpack.c.l.b16 %v647
        %v1269 = vunpack.c.h.b16 %v647
        %v1270 = vunpack.c.l.b16 %v648
        %v1271 = vunpack.c.h.b16 %v648
        %v1272 = vunpack.c.l.b16 %v649
        %v1273 = vunpack.c.h.b16 %v649
        %v1274 = vunpack.c.l.b16 %v650
        %v1275 = vunpack.c.h.b16 %v650
        %v1276 = vunpack.c.l.b16 %v651
        %v1277 = vunpack.c.h.b16 %v651
        %v1278 = vunpack.c.l.b16 %v652
        %v1279 = vunpack.c.h.b16 %v652
        %v1280 = vunpack.c.l.b16 %v653
        %v1281 = vunpack.c.h.b16 %v653
        %v1282 = vunpack.c.l.b16 %v654
        %v1283 = vunpack.c.h.b16 %v654
        %v1284 = vunpack.c.l.b16 %v655
        %v1285 = vunpack.c.h.b16 %v655
        %v1286 = vunpack.c.l.b16 %v656
        %v1287 = vunpack.c.h.b16 %v656
        %v1288 = vunpack.c.l.b16 %v657
        %v1289 = vunpack.c.h.b16 %v657
        %v1290 = vunpack.c.l.b16 %v658
        %v1291 = vunpack.c.h.b16 %v658
        %v1292 = vunpack.c.l.b16 %v659
        %v1293 = vunpack.c.h.b16 %v659
        %v1294 = vunpack.c.l.b16 %v660
        %v1295 = vunpack.c.h.b16 %v660
        %v1296 = vunpack.c.l.b16 %v661
        %v1297 = vunpack.c.h.b16 %v661
        %v1298 = vunpack.c.l.b16 %v662
        %v1299 = vunpack.c.h.b16 %v662
        %v1300 = vunpack.c.l.b16 %v663
        %v1301 = vunpack.c.h.b16 %v663
        %v1302 = vunpack.c.l.b16 %v664
        %v1303 = vunpack.c.h.b16 %v664
        %v1304 = vunpack.c.l.b16 %v665
        %v1305 = vunpack.c.h.b16 %v665
        %v1306 = vunpack.c.l.b16 %v666
        %v1307 = vunpack.c.h.b16 %v666
        %v1308 = vunpack.c.l.b16 %v667
        %v1309 = vunpack.c.h.b16 %v667
        %v1310 = vunpack.c.l.b16 %v668
        %v1311 = vunpack.c.h.b16 %v668
        %v1312 = vunpack.c.l.b16 %v669
        %v1313 = vunpack.c.h.b16 %v669
        %v1314 = vunpack.c.l.b16 %v670
        %v1315 = vunpack.c.h.b16 %v670
        %v1316 = vunpack.c.l.b16 %v671
        %v1317 = vunpack.c.h.b16 %v671
        %v1318 = vunpack.c.l.b16 %v672
        %v1319 = vunpack.c.h.b16 %v672
        %v1320 = vunpack.c.l.b16 %v673
        %v1321 = vunpack.c.h.b16 %v673
        %v1322 = vunpack.c.l.b16 %v674
        %v1323 = vunpack.c.h.b16 %v674
        %v1324 = vunpack.c.l.b16 %v675
        %v1325 = vunpack.c.h.b16 %v675
        %v1326 = vunpack.c.l.b16 %v676
        %v1327 = vunpack.c.h.b16 %v676
        %v1328 = vunpack.c.l.b16 %v677
        %v1329 = vunpack.c.h.b16 %v677
        %v1330 = vunpack.c.l.b16 %v678
        %v1331 = vunpack.c.h.b16 %v678
        %v1332 = vunpack.c.l.b16 %v679
        %v1333 = vunpack.c.h.b16 %v679
        %v1334 = vunpack.c.l.b16 %v680
        %v1335 = vunpack.c.h.b16 %v680
        %v1336 = vunpack.c.l.b16 %v681
        %v1337 = vunpack.c.h.b16 %v681
        %v1338 = vunpack.c.l.b16 %v682
        %v1339 = vunpack.c.h.b16 %v682
        %v1340 = vunpack.c.l.b16 %v683
        %v1341 = vunpack.c.h.b16 %v683
        %v1342 = vunpack.c.l.b16 %v684
        %v1343 = vunpack.c.h.b16 %v684
        %v1344 = vunpack.c.l.b16 %v685
        %v1345 = vunpack.c.h.b16 %v685
        %v1346 = vunpack.c.l.b16 %v686
        %v1347 = vunpack.c.h.b16 %v686
        %v1348 = vunpack.c.l.b16 %v687
        %v1349 = vunpack.c.h.b16 %v687
        %v1350 = vunpack.c.l.b16 %v688
        %v1351 = vunpack.c.h.b16 %v688
        %v1352 = vunpack.c.l.b16 %v689
        %v1353 = vunpack.c.h.b16 %v689
        %v1354 = vunpack.c.l.b16 %v690
        %v1355 = vunpack.c.h.b16 %v690
        %v1356 = vunpack.c.l.b16 %v691
        %v1357 = vunpack.c.h.b16 %v691
        %v1358 = vunpack.c.l.b16 %v692
        %v1359 = vunpack.c.h.b16 %v692
        %v1360 = vunpack.c.l.b16 %v693
        %v1361 = vunpack.c.h.b16 %v693
        %v1362 = vunpack.c.l.b16 %v694
        %v1363 = vunpack.c.h.b16 %v694
        %v1364 = vunpack.c.l.b16 %v695
        %v1365 = vunpack.c.h.b16 %v695
        %v1366 = vunpack.c.l.b16 %v696
        %v1367 = vunpack.c.h.b16 %v696
        %v1368 = vunpack.c.l.b16 %v697
        %v1369 = vunpack.c.h.b16 %v697
        %v1370 = vunpack.c.l.b16 %v698
        %v1371 = vunpack.c.h.b16 %v698
        %v1372 = vunpack.c.l.b16 %v699
        %v1373 = vunpack.c.h.b16 %v699
        %v1374 = vunpack.c.l.b16 %v700
        %v1375 = vunpack.c.h.b16 %v700
        %v1376 = vunpack.c.l.b16 %v701
        %v1377 = vunpack.c.h.b16 %v701
        %v1378 = vunpack.c.l.b16 %v702
        %v1379 = vunpack.c.h.b16 %v702
        %v1380 = vunpack.c.l.b16 %v703
        %v1381 = vunpack.c.h.b16 %v703
        %v1382 = vunpack.c.l.b16 %v704
        %v1383 = vunpack.c.h.b16 %v704
        %v1384 = vunpack.c.l.b16 %v705
        %v1385 = vunpack.c.h.b16 %v705
        %v1386 = vunpack.c.l.b16 %v706
        %v1387 = vunpack.c.h.b16 %v706
        %v1388 = vunpack.c.l.b16 %v707
        %v1389 = vunpack.c.h.b16 %v707
        %v1390 = vunpack.c.l.b16 %v708
        %v1391 = vunpack.c.h.b16 %v708
        %v1392 = vunpack.c.l.b16 %v709
        %v1393 = vunpack.c.h.b16 %v709
        %v1394 = vunpack.c.l.b16 %v710
        %v1395 = vunpack.c.h.b16 %v710
        %v1396 = vunpack.c.l.b16 %v711
        %v1397 = vunpack.c.h.b16 %v711
        %v1398 = vunpack.c.l.b16 %v712
        %v1399 = vunpack.c.h.b16 %v712
        %v1400 = vunpack.c.l.b16 %v713
        %v1401 = vunpack.c.h.b16 %v713
        %v1402 = vunpack.c.l.b16 %v714
        %v1403 = vunpack.c.h.b16 %v714
        %v1404 = vunpack.c.l.b16 %v715
        %v1405 = vunpack.c.h.b16 %v715
        %v1406 = vunpack.c.l.b16 %v716
        %v1407 = vunpack.c.h.b16 %v716
        %v1408 = vunpack.c.l.b16 %v717
        %v1409 = vunpack.c.h.b16 %v717
        %v1410 = vunpack.c.l.b16 %v718
        %v1411 = vunpack.c.h.b16 %v718
        %v1412 = vunpack.c.l.b16 %v719
        %v1413 = vunpack.c.h.b16 %v719
        %v1414 = vunpack.c.l.b16 %v720
        %v1415 = vunpack.c.h.b16 %v720
        %v1416 = vunpack.c.l.b16 %v721
        %v1417 = vunpack.c.h.b16 %v721
        %v1418 = vunpack.c.l.b16 %v722
        %v1419 = vunpack.c.h.b16 %v722
        %v1420 = vunpack.c.l.b16 %v723
        %v1421 = vunpack.c.h.b16 %v723
        %v1422 = vunpack.c.l.b16 %v724
        %v1423 = vunpack.c.h.b16 %v724
        %v1424 = vunpack.c.l.b16 %v725
        %v1425 = vunpack.c.h.b16 %v725
        %v1426 = vunpack.c.l.b16 %v726
        %v1427 = vunpack.c.h.b16 %v726
        %v1428 = vunpack.c.l.b16 %v727
        %v1429 = vunpack.c.h.b16 %v727
        %v1430 = vunpack.c.l.b16 %v728
        %v1431 = vunpack.c.h.b16 %v728
        %v1432 = vunpack.c.l.b16 %v729
        %v1433 = vunpack.c.h.b16 %v729
        %v1434 = vunpack.c.l.b16 %v730
        %v1435 = vunpack.c.h.b16 %v730
        %v1436 = vunpack.c.l.b16 %v731
        %v1437 = vunpack.c.h.b16 %v731
        %v1438 = vunpack.c.l.b16 %v732
        %v1439 = vunpack.c.h.b16 %v732
        %v1440 = vunpack.c.l.b16 %v733
        %v1441 = vunpack.c.h.b16 %v733
        %v1442 = vunpack.c.l.b16 %v734
        %v1443 = vunpack.c.h.b16 %v734
        %v1444 = vunpack.c.l.b16 %v735
        %v1445 = vunpack.c.h.b16 %v735
        %v1446 = vunpack.c.l.b16 %v736
        %v1447 = vunpack.c.h.b16 %v736
        %v1448 = vunpack.c.l.b16 %v737
        %v1449 = vunpack.c.h.b16 %v737
        %v1450 = vunpack.c.l.b16 %v738
        %v1451 = vunpack.c.h.b16 %v738
        %v1452 = vunpack.c.l.b16 %v739
        %v1453 = vunpack.c.h.b16 %v739
        %v1454 = vunpack.c.l.b16 %v740
        %v1455 = vunpack.c.h.b16 %v740
        %v1456 = vunpack.c.l.b16 %v741
        %v1457 = vunpack.c.h.b16 %v741
        %v1458 = vunpack.c.l.b16 %v742
        %v1459 = vunpack.c.h.b16 %v742
        %v1460 = vunpack.c.l.b16 %v743
        %v1461 = vunpack.c.h.b16 %v743
        %v1462 = vunpack.c.l.b16 %v744
        %v1463 = vunpack.c.h.b16 %v744
        %v1464 = vunpack.c.l.b16 %v745
        %v1465 = vunpack.c.h.b16 %v745
        %v1466 = vunpack.c.l.b16 %v746
        %v1467 = vunpack.c.h.b16 %v746
        %v1468 = vunpack.c.l.b16 %v747
        %v1469 = vunpack.c.h.b16 %v747
        %v1470 = vunpack.c.l.b16 %v748
        %v1471 = vunpack.c.h.b16 %v748
        %v1472 = vunpack.c.l.b16 %v749
        %v1473 = vunpack.c.h.b16 %v749
        %v1474 = vunpack.c.l.b16 %v750
        %v1475 = vunpack.c.h.b16 %v750
        %v1476 = vunpack.c.l.b16 %v751
        %v1477 = vunpack.c.h.b16 %v751
        %v1478 = vunpack.c.l.b16 %v752
        %v1479 = vunpack.c.h.b16 %v752
        %v1480 = vunpack.c.l.b16 %v753
        %v1481 = vunpack.c.h.b16 %v753
        %v1482 = vunpack.c.l.b16 %v754
        %v1483 = vunpack.c.h.b16 %v754
        %v1484 = vunpack.c.l.b16 %v755
        %v1485 = vunpack.c.h.b16 %v755
        %v1486 = vunpack.c.l.b16 %v756
        %v1487 = vunpack.c.h.b16 %v756
        %v1488 = vunpack.c.l.b16 %v757
        %v1489 = vunpack.c.h.b16 %v757
        %v1490 = vunpack.c.l.b16 %v758
        %v1491 = vunpack.c.h.b16 %v758
        %v1492 = vunpack.c.l.b16 %v759
        %v1493 = vunpack.c.h.b16 %v759
        %v1494 = vunpack.c.l.b16 %v760
        %v1495 = vunpack.c.h.b16 %v760
        %v1496 = vunpack.c.l.b16 %v761
        %v1497 = vunpack.c.h.b16 %v761
        %v1498 = vunpack.c.l.b16 %v762
        %v1499 = vunpack.c.h.b16 %v762
        %v1500 = vunpack.c.l.b16 %v763
        %v1501 = vunpack.c.h.b16 %v763
        %v1502 = vunpack.c.l.b16 %v764
        %v1503 = vunpack.c.h.b16 %v764
        %v1504 = vunpack.c.l.b16 %v765
        %v1505 = vunpack.c.h.b16 %v765
        %v1506 = vunpack.c.l.b16 %v766
        %v1507 = vunpack.c.h.b16 %v766
        %v1508 = vunpack.c.l.b16 %v767
        %v1509 = vunpack.c.h.b16 %v767
        %v1510 = vunpack.c.l.b16 %v768
        %v1511 = vunpack.c.h.b16 %v768
        %v1512 = vunpack.c.l.b16 %v769
        %v1513 = vunpack.c.h.b16 %v769
        %v1514 = vunpack.c.l.b16 %v770
        %v1515 = vunpack.c.h.b16 %v770
        %v1516 = vunpack.c.l.b16 %v771
        %v1517 = vunpack.c.h.b16 %v771
        %v1518 = vunpack.c.l.b16 %v772
        %v1519 = vunpack.c.h.b16 %v772
        %v1520 = vunpack.c.l.b16 %v773
        %v1521 = vunpack.c.h.b16 %v773
        %v1522 = vunpack.c.l.b16 %v774
        %v1523 = vunpack.c.h.b16 %v774
        %v1524 = vunpack.c.l.b16 %v775
        %v1525 = vunpack.c.h.b16 %v775
        %v1526 = vunpack.c.l.b16 %v776
        %v1527 = vunpack.c.h.b16 %v776
        %v1528 = vunpack.c.l.b16 %v777
        %v1529 = vunpack.c.h.b16 %v777
        %v1530 = vunpack.c.l.b16 %v778
        %v1531 = vunpack.c.h.b16 %v778
        %v1532 = vunpack.c.l.b16 %v779
        %v1533 = vunpack.c.h.b16 %v779
        %v1534 = vunpack.c.l.b16 %v780
        %v1535 = vunpack.c.h.b16 %v780
        %v1536 = vunpack.c.l.b16 %v781
        %v1537 = vunpack.c.h.b16 %v781
        %v1538 = vunpack.c.l.b16 %v782
        %v1539 = vunpack.c.h.b16 %v782
        %v1540 = vunpack.c.l.b16 %v783
        %v1541 = vunpack.c.h.b16 %v783
        %v1542 = vunpack.c.l.b16 %v784
        %v1543 = vunpack.c.h.b16 %v784
        %v1544 = vunpack.c.l.b16 %v785
        %v1545 = vunpack.c.h.b16 %v785
        %v1546 = vunpack.c.l.b16 %v786
        %v1547 = vunpack.c.h.b16 %v786
        %v1548 = vunpack.c.l.b16 %v787
        %v1549 = vunpack.c.h.b16 %v787
        %v1550 = vunpack.c.l.b16 %v788
        %v1551 = vunpack.c.h.b16 %v788
        %v1552 = vunpack.c.l.b16 %v789
        %v1553 = vunpack.c.h.b16 %v789
        %v1554 = vunpack.c.l.b16 %v790
        %v1555 = vunpack.c.h.b16 %v790
        %v1556 = vunpack.c.l.b16 %v791
        %v1557 = vunpack.c.h.b16 %v791
        %v1558 = vunpack.c.l.b16 %v792
        %v1559 = vunpack.c.h.b16 %v792
        %v1560 = vunpack.c.l.b16 %v793
        %v1561 = vunpack.c.h.b16 %v793
        %v1562 = vpack.c.b16 %v1058, %v1050
        %v1563 = vpack.c.b16 %v1059, %v1051
        %v1564 = vpack.c.b16 %v1060, %v1052
        %v1565 = vpack.c.b16 %v1061, %v1053
        %v1566 = vpack.c.b16 %v1062, %v1054
        %v1567 = vpack.c.b16 %v1063, %v1055
        %v1568 = vpack.c.b16 %v1064, %v1056
        %v1569 = vpack.c.b16 %v1065, %v1057
        %v1570 = vpack.c.b16 %v1074, %v1066
        %v1571 = vpack.c.b16 %v1075, %v1067
        %v1572 = vpack.c.b16 %v1076, %v1068
        %v1573 = vpack.c.b16 %v1077, %v1069
        %v1574 = vpack.c.b16 %v1078, %v1070
        %v1575 = vpack.c.b16 %v1079, %v1071
        %v1576 = vpack.c.b16 %v1080, %v1072
        %v1577 = vpack.c.b16 %v1081, %v1073
        %v1578 = vpack.c.b16 %v1090, %v1082
        %v1579 = vpack.c.b16 %v1091, %v1083
        %v1580 = vpack.c.b16 %v1092, %v1084
        %v1581 = vpack.c.b16 %v1093, %v1085
        %v1582 = vpack.c.b16 %v1094, %v1086
        %v1583 = vpack.c.b16 %v1095, %v1087
        %v1584 = vpack.c.b16 %v1096, %v1088
        %v1585 = vpack.c.b16 %v1097, %v1089
        %v1586 = vpack.c.b16 %v1106, %v1098
        %v1587 = vpack.c.b16 %v1107, %v1099
        %v1588 = vpack.c.b16 %v1108, %v1100
        %v1589 = vpack.c.b16 %v1109, %v1101
        %v1590 = vpack.c.b16 %v1110, %v1102
        %v1591 = vpack.c.b16 %v1111, %v1103
        %v1592 = vpack.c.b16 %v1112, %v1104
        %v1593 = vpack.c.b16 %v1113, %v1105
        %v1594 = vpack.c.b16 %v1122, %v1114
        %v1595 = vpack.c.b16 %v1123, %v1115
        %v1596 = vpack.c.b16 %v1124, %v1116
        %v1597 = vpack.c.b16 %v1125, %v1117
        %v1598 = vpack.c.b16 %v1126, %v1118
        %v1599 = vpack.c.b16 %v1127, %v1119
        %v1600 = vpack.c.b16 %v1128, %v1120
        %v1601 = vpack.c.b16 %v1129, %v1121
        %v1602 = vpack.c.b16 %v1138, %v1130
        %v1603 = vpack.c.b16 %v1139, %v1131
        %v1604 = vpack.c.b16 %v1140, %v1132
        %v1605 = vpack.c.b16 %v1141, %v1133
        %v1606 = vpack.c.b16 %v1142, %v1134
        %v1607 = vpack.c.b16 %v1143, %v1135
        %v1608 = vpack.c.b16 %v1144, %v1136
        %v1609 = vpack.c.b16 %v1145, %v1137
        %v1610 = vpack.c.b16 %v1154, %v1146
        %v1611 = vpack.c.b16 %v1155, %v1147
        %v1612 = vpack.c.b16 %v1156, %v1148
        %v1613 = vpack.c.b16 %v1157, %v1149
        %v1614 = vpack.c.b16 %v1158, %v1150
        %v1615 = vpack.c.b16 %v1159, %v1151
        %v1616 = vpack.c.b16 %v1160, %v1152
        %v1617 = vpack.c.b16 %v1161, %v1153
        %v1618 = vpack.c.b16 %v1170, %v1162
        %v1619 = vpack.c.b16 %v1171, %v1163
        %v1620 = vpack.c.b16 %v1172, %v1164
        %v1621 = vpack.c.b16 %v1173, %v1165
        %v1622 = vpack.c.b16 %v1174, %v1166
        %v1623 = vpack.c.b16 %v1175, %v1167
        %v1624 = vpack.c.b16 %v1176, %v1168
        %v1625 = vpack.c.b16 %v1177, %v1169
        %v1626 = vpack.c.b16 %v1186, %v1178
        %v1627 = vpack.c.b16 %v1187, %v1179
        %v1628 = vpack.c.b16 %v1188, %v1180
        %v1629 = vpack.c.b16 %v1189, %v1181
        %v1630 = vpack.c.b16 %v1190, %v1182
        %v1631 = vpack.c.b16 %v1191, %v1183
        %v1632 = vpack.c.b16 %v1192, %v1184
        %v1633 = vpack.c.b16 %v1193, %v1185
        %v1634 = vpack.c.b16 %v1202, %v1194
        %v1635 = vpack.c.b16 %v1203, %v1195
        %v1636 = vpack.c.b16 %v1204, %v1196
        %v1637 = vpack.c.b16 %v1205, %v1197
        %v1638 = vpack.c.b16 %v1206, %v1198
        %v1639 = vpack.c.b16 %v1207, %v1199
        %v1640 = vpack.c.b16 %v1208, %v1200
        %v1641 = vpack.c.b16 %v1209, %v1201
        %v1642 = vpack.c.b16 %v1218, %v1210
        %v1643 = vpack.c.b16 %v1219, %v1211
        %v1644 = vpack.c.b16 %v1220, %v1212
        %v1645 = vpack.c.b16 %v1221, %v1213
        %v1646 = vpack.c.b16 %v1222, %v1214
        %v1647 = vpack.c.b16 %v1223, %v1215
        %v1648 = vpack.c.b16 %v1224, %v1216
        %v1649 = vpack.c.b16 %v1225, %v1217
        %v1650 = vpack.c.b16 %v1234, %v1226
        %v1651 = vpack.c.b16 %v1235, %v1227
        %v1652 = vpack.c.b16 %v1236, %v1228
        %v1653 = vpack.c.b16 %v1237, %v1229
        %v1654 = vpack.c.b16 %v1238, %v1230
        %v1655 = vpack.c.b16 %v1239, %v1231
        %v1656 = vpack.c.b16 %v1240, %v1232
        %v1657 = vpack.c.b16 %v1241, %v1233
        %v1658 = vpack.c.b16 %v1250, %v1242
        %v1659 = vpack.c.b16 %v1251, %v1243
        %v1660 = vpack.c.b16 %v1252, %v1244
        %v1661 = vpack.c.b16 %v1253, %v1245
        %v1662 = vpack.c.b16 %v1254, %v1246
        %v1663 = vpack.c.b16 %v1255, %v1247
        %v1664 = vpack.c.b16 %v1256, %v1248
        %v1665 = vpack.c.b16 %v1257, %v1249
        %v1666 = vpack.c.b16 %v1266, %v1258
        %v1667 = vpack.c.b16 %v1267, %v1259
        %v1668 = vpack.c.b16 %v1268, %v1260
        %v1669 = vpack.c.b16 %v1269, %v1261
        %v1670 = vpack.c.b16 %v1270, %v1262
        %v1671 = vpack.c.b16 %v1271, %v1263
        %v1672 = vpack.c.b16 %v1272, %v1264
        %v1673 = vpack.c.b16 %v1273, %v1265
        %v1674 = vpack.c.b16 %v1282, %v1274
        %v1675 = vpack.c.b16 %v1283, %v1275
        %v1676 = vpack.c.b16 %v1284, %v1276
        %v1677 = vpack.c.b16 %v1285, %v1277
        %v1678 = vpack.c.b16 %v1286, %v1278
        %v1679 = vpack.c.b16 %v1287, %v1279
        %v1680 = vpack.c.b16 %v1288, %v1280
        %v1681 = vpack.c.b16 %v1289, %v1281
        %v1682 = vpack.c.b16 %v1298, %v1290
        %v1683 = vpack.c.b16 %v1299, %v1291
        %v1684 = vpack.c.b16 %v1300, %v1292
        %v1685 = vpack.c.b16 %v1301, %v1293
        %v1686 = vpack.c.b16 %v1302, %v1294
        %v1687 = vpack.c.b16 %v1303, %v1295
        %v1688 = vpack.c.b16 %v1304, %v1296
        %v1689 = vpack.c.b16 %v1305, %v1297
        %v1690 = vpack.c.b16 %v1314, %v1306
        %v1691 = vpack.c.b16 %v1315, %v1307
        %v1692 = vpack.c.b16 %v1316, %v1308
        %v1693 = vpack.c.b16 %v1317, %v1309
        %v1694 = vpack.c.b16 %v1318, %v1310
        %v1695 = vpack.c.b16 %v1319, %v1311
        %v1696 = vpack.c.b16 %v1320, %v1312
        %v1697 = vpack.c.b16 %v1321, %v1313
        %v1698 = vpack.c.b16 %v1330, %v1322
        %v1699 = vpack.c.b16 %v1331, %v1323
        %v1700 = vpack.c.b16 %v1332, %v1324
        %v1701 = vpack.c.b16 %v1333, %v1325
        %v1702 = vpack.c.b16 %v1334, %v1326
        %v1703 = vpack.c.b16 %v1335, %v1327
        %v1704 = vpack.c.b16 %v1336, %v1328
        %v1705 = vpack.c.b16 %v1337, %v1329
        %v1706 = vpack.c.b16 %v1346, %v1338
        %v1707 = vpack.c.b16 %v1347, %v1339
        %v1708 = vpack.c.b16 %v1348, %v1340
        %v1709 = vpack.c.b16 %v1349, %v1341
        %v1710 = vpack.c.b16 %v1350, %v1342
        %v1711 = vpack.c.b16 %v1351, %v1343
        %v1712 = vpack.c.b16 %v1352, %v1344
        %v1713 = vpack.c.b16 %v1353, %v1345
        %v1714 = vpack.c.b16 %v1362, %v1354
        %v1715 = vpack.c.b16 %v1363, %v1355
        %v1716 = vpack.c.b16 %v1364, %v1356
        %v1717 = vpack.c.b16 %v1365, %v1357
        %v1718 = vpack.c.b16 %v1366, %v1358
        %v1719 = vpack.c.b16 %v1367, %v1359
        %v1720 = vpack.c.b16 %v1368, %v1360
        %v1721 = vpack.c.b16 %v1369, %v1361
        %v1722 = vpack.c.b16 %v1378, %v1370
        %v1723 = vpack.c.b16 %v1379, %v1371
        %v1724 = vpack.c.b16 %v1380, %v1372
        %v1725 = vpack.c.b16 %v1381, %v1373
        %v1726 = vpack.c.b16 %v1382, %v1374
        %v1727 = vpack.c.b16 %v1383, %v1375
        %v1728 = vpack.c.b16 %v1384, %v1376
        %v1729 = vpack.c.b16 %v1385, %v1377
        %v1730 = vpack.c.b16 %v1394, %v1386
        %v1731 = vpack.c.b16 %v1395, %v1387
        %v1732 = vpack.c.b16 %v1396, %v1388
        %v1733 = vpack.c.b16 %v1397, %v1389
        %v1734 = vpack.c.b16 %v1398, %v1390
        %v1735 = vpack.c.b16 %v1399, %v1391
        %v1736 = vpack.c.b16 %v1400, %v1392
        %v1737 = vpack.c.b16 %v1401, %v1393
        %v1738 = vpack.c.b16 %v1410, %v1402
        %v1739 = vpack.c.b16 %v1411, %v1403
        %v1740 = vpack.c.b16 %v1412, %v1404
        %v1741 = vpack.c.b16 %v1413, %v1405
        %v1742 = vpack.c.b16 %v1414, %v1406
        %v1743 = vpack.c.b16 %v1415, %v1407
        %v1744 = vpack.c.b16 %v1416, %v1408
        %v1745 = vpack.c.b16 %v1417, %v1409
        %v1746 = vpack.c.b16 %v1426, %v1418
        %v1747 = vpack.c.b16 %v1427, %v1419
        %v1748 = vpack.c.b16 %v1428, %v1420
        %v1749 = vpack.c.b16 %v1429, %v1421
        %v1750 = vpack.c.b16 %v1430, %v1422
        %v1751 = vpack.c.b16 %v1431, %v1423
        %v1752 = vpack.c.b16 %v1432, %v1424
        %v1753 = vpack.c.b16 %v1433, %v1425
        %v1754 = vpack.c.b16 %v1442, %v1434
        %v1755 = vpack.c.b16 %v1443, %v1435
        %v1756 = vpack.c.b16 %v1444, %v1436
        %v1757 = vpack.c.b16 %v1445, %v1437
        %v1758 = vpack.c.b16 %v1446, %v1438
        %v1759 = vpack.c.b16 %v1447, %v1439
        %v1760 = vpack.c.b16 %v1448, %v1440
        %v1761 = vpack.c.b16 %v1449, %v1441
        %v1762 = vpack.c.b16 %v1458, %v1450
        %v1763 = vpack.c.b16 %v1459, %v1451
        %v1764 = vpack.c.b16 %v1460, %v1452
        %v1765 = vpack.c.b16 %v1461, %v1453
        %v1766 = vpack.c.b16 %v1462, %v1454
        %v1767 = vpack.c.b16 %v1463, %v1455
        %v1768 = vpack.c.b16 %v1464, %v1456
        %v1769 = vpack.c.b16 %v1465, %v1457
        %v1770 = vpack.c.b16 %v1474, %v1466
        %v1771 = vpack.c.b16 %v1475, %v1467
        %v1772 = vpack.c.b16 %v1476, %v1468
        %v1773 = vpack.c.b16 %v1477, %v1469
        %v1774 = vpack.c.b16 %v1478, %v1470
        %v1775 = vpack.c.b16 %v1479, %v1471
        %v1776 = vpack.c.b16 %v1480, %v1472
        %v1777 = vpack.c.b16 %v1481, %v1473
        %v1778 = vpack.c.b16 %v1490, %v1482
        %v1779 = vpack.c.b16 %v1491, %v1483
        %v1780 = vpack.c.b16 %v1492, %v1484
        %v1781 = vpack.c.b16 %v1493, %v1485
        %v1782 = vpack.c.b16 %v1494, %v1486
        %v1783 = vpack.c.b16 %v1495, %v1487
        %v1784 = vpack.c.b16 %v1496, %v1488
        %v1785 = vpack.c.b16 %v1497, %v1489
        %v1786 = vpack.c.b16 %v1506, %v1498
        %v1787 = vpack.c.b16 %v1507, %v1499
        %v1788 = vpack.c.b16 %v1508, %v1500
        %v1789 = vpack.c.b16 %v1509, %v1501
        %v1790 = vpack.c.b16 %v1510, %v1502
        %v1791 = vpack.c.b16 %v1511, %v1503
        %v1792 = vpack.c.b16 %v1512, %v1504
        %v1793 = vpack.c.b16 %v1513, %v1505
        %v1794 = vpack.c.b16 %v1522, %v1514
        %v1795 = vpack.c.b16 %v1523, %v1515
        %v1796 = vpack.c.b16 %v1524, %v1516
        %v1797 = vpack.c.b16 %v1525, %v1517
        %v1798 = vpack.c.b16 %v1526, %v1518
        %v1799 = vpack.c.b16 %v1527, %v1519
        %v1800 = vpack.c.b16 %v1528, %v1520
        %v1801 = vpack.c.b16 %v1529, %v1521
        %v1802 = vpack.c.b16 %v1538, %v1530
        %v1803 = vpack.c.b16 %v1539, %v1531
        %v1804 = vpack.c.b16 %v1540, %v1532
        %v1805 = vpack.c.b16 %v1541, %v1533
        %v1806 = vpack.c.b16 %v1542, %v1534
        %v1807 = vpack.c.b16 %v1543, %v1535
        %v1808 = vpack.c.b16 %v1544, %v1536
        %v1809 = vpack.c.b16 %v1545, %v1537
        %v1810 = vpack.c.b16 %v1554, %v1546
        %v1811 = vpack.c.b16 %v1555, %v1547
        %v1812 = vpack.c.b16 %v1556, %v1548
        %v1813 = vpack.c.b16 %v1557, %v1549
        %v1814 = vpack.c.b16 %v1558, %v1550
        %v1815 = vpack.c.b16 %v1559, %v1551
        %v1816 = vpack.c.b16 %v1560, %v1552
        %v1817 = vpack.c.b16 %v1561, %v1553
        %2074 = vmatpush.bf16.msra.mxu0 %v1618
        %2075 = vmatpush.bf16.msra.mxu0 %v1610
        %2076 = vmatpush.bf16.msra.mxu0 %v1602
        %2077 = vmatpush.bf16.msra.mxu0 %v1594
        %2078 = vmatpush.bf16.msra.mxu0 %v1586
        %2079 = vmatpush.bf16.msra.mxu0 %v1578
        %2080 = vmatpush.bf16.msra.mxu0 %v1570
        %2081 = vmatpush.bf16.msra.mxu0 %v1562
        %2082 = vmatmul.bf16.gmra.mxu0 %v530
        %v2083 = vpop.f32.mrf.mxu0
        %v2084 = vadd.f32 0.0, %v2083
        %v2085 = vpop.f32.mrf.mxu0
        %v2086 = vadd.f32 0.0, %v2085
        %2087 = vmatmul.bf16.gmra.mxu0 %v534
        %v2088 = vpop.f32.mrf.mxu0
        %v2089 = vadd.f32 0.0, %v2088
        %v2090 = vpop.f32.mrf.mxu0
        %v2091 = vadd.f32 0.0, %v2090
        %2092 = vdwg.mxu0
        %2093 = vmatpush.bf16.msra.mxu0 %v1682
        %2094 = vmatpush.bf16.msra.mxu0 %v1674
        %2095 = vmatpush.bf16.msra.mxu0 %v1666
        %2096 = vmatpush.bf16.msra.mxu0 %v1658
        %2097 = vmatpush.bf16.msra.mxu0 %v1650
        %2098 = vmatpush.bf16.msra.mxu0 %v1642
        %2099 = vmatpush.bf16.msra.mxu0 %v1634
        %2100 = vmatpush.bf16.msra.mxu0 %v1626
        %2101 = vmatmul.bf16.gmra.mxu0 %v531
        %v2102 = vpop.f32.mrf.mxu0
        %v2103 = vadd.f32 %v2084, %v2102
        %v2104 = vpop.f32.mrf.mxu0
        %v2105 = vadd.f32 %v2086, %v2104
        %2106 = vmatmul.bf16.gmra.mxu0 %v535
        %v2107 = vpop.f32.mrf.mxu0
        %v2108 = vadd.f32 %v2089, %v2107
        %v2109 = vpop.f32.mrf.mxu0
        %v2110 = vadd.f32 %v2091, %v2109
        %2111 = vdwg.mxu0
        %2112 = vmatpush.bf16.msra.mxu0 %v1746
        %2113 = vmatpush.bf16.msra.mxu0 %v1738
        %2114 = vmatpush.bf16.msra.mxu0 %v1730
        %2115 = vmatpush.bf16.msra.mxu0 %v1722
        %2116 = vmatpush.bf16.msra.mxu0 %v1714
        %2117 = vmatpush.bf16.msra.mxu0 %v1706
        %2118 = vmatpush.bf16.msra.mxu0 %v1698
        %2119 = vmatpush.bf16.msra.mxu0 %v1690
        %2120 = vmatmul.bf16.gmra.mxu0 %v532
        %v2121 = vpop.f32.mrf.mxu0
        %v2122 = vadd.f32 %v2103, %v2121
        %v2123 = vpop.f32.mrf.mxu0
        %v2124 = vadd.f32 %v2105, %v2123
        %2125 = vmatmul.bf16.gmra.mxu0 %v536
        %v2126 = vpop.f32.mrf.mxu0
        %v2127 = vadd.f32 %v2108, %v2126
        %v2128 = vpop.f32.mrf.mxu0
        %v2129 = vadd.f32 %v2110, %v2128
        %2130 = vdwg.mxu0
        %2131 = vmatpush.bf16.msra.mxu0 %v1810
        %2132 = vmatpush.bf16.msra.mxu0 %v1802
        %2133 = vmatpush.bf16.msra.mxu0 %v1794
        %2134 = vmatpush.bf16.msra.mxu0 %v1786
        %2135 = vmatpush.bf16.msra.mxu0 %v1778
        %2136 = vmatpush.bf16.msra.mxu0 %v1770
        %2137 = vmatpush.bf16.msra.mxu0 %v1762
        %2138 = vmatpush.bf16.msra.mxu0 %v1754
        %2139 = vmatmul.bf16.gmra.mxu0 %v533
        %v2140 = vpop.f32.mrf.mxu0
        %v2141 = vadd.f32 %v2122, %v2140
        %v2142 = vpop.f32.mrf.mxu0
        %v2143 = vadd.f32 %v2124, %v2142
        %2144 = vmatmul.bf16.gmra.mxu0 %v537
        %v2145 = vpop.f32.mrf.mxu0
        %v2146 = vadd.f32 %v2127, %v2145
        %v2147 = vpop.f32.mrf.mxu0
        %v2148 = vadd.f32 %v2129, %v2147
        %2149 = vdwg.mxu0
        %2150 = vmatpush.bf16.msra.mxu0 %v1619
        %2151 = vmatpush.bf16.msra.mxu0 %v1611
        %2152 = vmatpush.bf16.msra.mxu0 %v1603
        %2153 = vmatpush.bf16.msra.mxu0 %v1595
        %2154 = vmatpush.bf16.msra.mxu0 %v1587
        %2155 = vmatpush.bf16.msra.mxu0 %v1579
        %2156 = vmatpush.bf16.msra.mxu0 %v1571
        %2157 = vmatpush.bf16.msra.mxu0 %v1563
        %2158 = vmatmul.bf16.gmra.mxu0 %v530
        %v2159 = vpop.f32.mrf.mxu0
        %v2160 = vadd.f32 0.0, %v2159
        %v2161 = vpop.f32.mrf.mxu0
        %v2162 = vadd.f32 0.0, %v2161
        %2163 = vmatmul.bf16.gmra.mxu0 %v534
        %v2164 = vpop.f32.mrf.mxu0
        %v2165 = vadd.f32 0.0, %v2164
        %v2166 = vpop.f32.mrf.mxu0
        %v2167 = vadd.f32 0.0, %v2166
        %2168 = vdwg.mxu0
        %2169 = vmatpush.bf16.msra.mxu0 %v1683
        %2170 = vmatpush.bf16.msra.mxu0 %v1675
        %2171 = vmatpush.bf16.msra.mxu0 %v1667
        %2172 = vmatpush.bf16.msra.mxu0 %v1659
        %2173 = vmatpush.bf16.msra.mxu0 %v1651
        %2174 = vmatpush.bf16.msra.mxu0 %v1643
        %2175 = vmatpush.bf16.msra.mxu0 %v1635
        %2176 = vmatpush.bf16.msra.mxu0 %v1627
        %2177 = vmatmul.bf16.gmra.mxu0 %v531
        %v2178 = vpop.f32.mrf.mxu0
        %v2179 = vadd.f32 %v2160, %v2178
        %v2180 = vpop.f32.mrf.mxu0
        %v2181 = vadd.f32 %v2162, %v2180
        %2182 = vmatmul.bf16.gmra.mxu0 %v535
        %v2183 = vpop.f32.mrf.mxu0
        %v2184 = vadd.f32 %v2165, %v2183
        %v2185 = vpop.f32.mrf.mxu0
        %v2186 = vadd.f32 %v2167, %v2185
        %2187 = vdwg.mxu0
        %2188 = vmatpush.bf16.msra.mxu0 %v1747
        %2189 = vmatpush.bf16.msra.mxu0 %v1739
        %2190 = vmatpush.bf16.msra.mxu0 %v1731
        %2191 = vmatpush.bf16.msra.mxu0 %v1723
        %2192 = vmatpush.bf16.msra.mxu0 %v1715
        %2193 = vmatpush.bf16.msra.mxu0 %v1707
        %2194 = vmatpush.bf16.msra.mxu0 %v1699
        %2195 = vmatpush.bf16.msra.mxu0 %v1691
        %2196 = vmatmul.bf16.gmra.mxu0 %v532
        %v2197 = vpop.f32.mrf.mxu0
        %v2198 = vadd.f32 %v2179, %v2197
        %v2199 = vpop.f32.mrf.mxu0
        %v2200 = vadd.f32 %v2181, %v2199
        %2201 = vmatmul.bf16.gmra.mxu0 %v536
        %v2202 = vpop.f32.mrf.mxu0
        %v2203 = vadd.f32 %v2184, %v2202
        %v2204 = vpop.f32.mrf.mxu0
        %v2205 = vadd.f32 %v2186, %v2204
        %2206 = vdwg.mxu0
        %2207 = vmatpush.bf16.msra.mxu0 %v1811
        %2208 = vmatpush.bf16.msra.mxu0 %v1803
        %2209 = vmatpush.bf16.msra.mxu0 %v1795
        %2210 = vmatpush.bf16.msra.mxu0 %v1787
        %2211 = vmatpush.bf16.msra.mxu0 %v1779
        %2212 = vmatpush.bf16.msra.mxu0 %v1771
        %2213 = vmatpush.bf16.msra.mxu0 %v1763
        %2214 = vmatpush.bf16.msra.mxu0 %v1755
        %2215 = vmatmul.bf16.gmra.mxu0 %v533
        %v2216 = vpop.f32.mrf.mxu0
        %v2217 = vadd.f32 %v2198, %v2216
        %v2218 = vpop.f32.mrf.mxu0
        %v2219 = vadd.f32 %v2200, %v2218
        %2220 = vmatmul.bf16.gmra.mxu0 %v537
        %v2221 = vpop.f32.mrf.mxu0
        %v2222 = vadd.f32 %v2203, %v2221
        %v2223 = vpop.f32.mrf.mxu0
        %v2224 = vadd.f32 %v2205, %v2223
        %2225 = vdwg.mxu0
        %2226 = vmatpush.bf16.msra.mxu0 %v1620
        %2227 = vmatpush.bf16.msra.mxu0 %v1612
        %2228 = vmatpush.bf16.msra.mxu0 %v1604
        %2229 = vmatpush.bf16.msra.mxu0 %v1596
        %2230 = vmatpush.bf16.msra.mxu0 %v1588
        %2231 = vmatpush.bf16.msra.mxu0 %v1580
        %2232 = vmatpush.bf16.msra.mxu0 %v1572
        %2233 = vmatpush.bf16.msra.mxu0 %v1564
        %2234 = vmatmul.bf16.gmra.mxu0 %v530
        %v2235 = vpop.f32.mrf.mxu0
        %v2236 = vadd.f32 0.0, %v2235
        %v2237 = vpop.f32.mrf.mxu0
        %v2238 = vadd.f32 0.0, %v2237
        %2239 = vmatmul.bf16.gmra.mxu0 %v534
        %v2240 = vpop.f32.mrf.mxu0
        %v2241 = vadd.f32 0.0, %v2240
        %v2242 = vpop.f32.mrf.mxu0
        %v2243 = vadd.f32 0.0, %v2242
        %2244 = vdwg.mxu0
        %2245 = vmatpush.bf16.msra.mxu0 %v1684
        %2246 = vmatpush.bf16.msra.mxu0 %v1676
        %2247 = vmatpush.bf16.msra.mxu0 %v1668
        %2248 = vmatpush.bf16.msra.mxu0 %v1660
        %2249 = vmatpush.bf16.msra.mxu0 %v1652
        %2250 = vmatpush.bf16.msra.mxu0 %v1644
        %2251 = vmatpush.bf16.msra.mxu0 %v1636
        %2252 = vmatpush.bf16.msra.mxu0 %v1628
        %2253 = vmatmul.bf16.gmra.mxu0 %v531
        %v2254 = vpop.f32.mrf.mxu0
        %v2255 = vadd.f32 %v2236, %v2254
        %v2256 = vpop.f32.mrf.mxu0
        %v2257 = vadd.f32 %v2238, %v2256
        %2258 = vmatmul.bf16.gmra.mxu0 %v535
        %v2259 = vpop.f32.mrf.mxu0
        %v2260 = vadd.f32 %v2241, %v2259
        %v2261 = vpop.f32.mrf.mxu0
        %v2262 = vadd.f32 %v2243, %v2261
        %2263 = vdwg.mxu0
        %2264 = vmatpush.bf16.msra.mxu0 %v1748
        %2265 = vmatpush.bf16.msra.mxu0 %v1740
        %2266 = vmatpush.bf16.msra.mxu0 %v1732
        %2267 = vmatpush.bf16.msra.mxu0 %v1724
        %2268 = vmatpush.bf16.msra.mxu0 %v1716
        %2269 = vmatpush.bf16.msra.mxu0 %v1708
        %2270 = vmatpush.bf16.msra.mxu0 %v1700
        %2271 = vmatpush.bf16.msra.mxu0 %v1692
        %2272 = vmatmul.bf16.gmra.mxu0 %v532
        %v2273 = vpop.f32.mrf.mxu0
        %v2274 = vadd.f32 %v2255, %v2273
        %v2275 = vpop.f32.mrf.mxu0
        %v2276 = vadd.f32 %v2257, %v2275
        %2277 = vmatmul.bf16.gmra.mxu0 %v536
        %v2278 = vpop.f32.mrf.mxu0
        %v2279 = vadd.f32 %v2260, %v2278
        %v2280 = vpop.f32.mrf.mxu0
        %v2281 = vadd.f32 %v2262, %v2280
        %2282 = vdwg.mxu0
        %2283 = vmatpush.bf16.msra.mxu0 %v1812
        %2284 = vmatpush.bf16.msra.mxu0 %v1804
        %2285 = vmatpush.bf16.msra.mxu0 %v1796
        %2286 = vmatpush.bf16.msra.mxu0 %v1788
        %2287 = vmatpush.bf16.msra.mxu0 %v1780
        %2288 = vmatpush.bf16.msra.mxu0 %v1772
        %2289 = vmatpush.bf16.msra.mxu0 %v1764
        %2290 = vmatpush.bf16.msra.mxu0 %v1756
        %2291 = vmatmul.bf16.gmra.mxu0 %v533
        %v2292 = vpop.f32.mrf.mxu0
        %v2293 = vadd.f32 %v2274, %v2292
        %v2294 = vpop.f32.mrf.mxu0
        %v2295 = vadd.f32 %v2276, %v2294
        %2296 = vmatmul.bf16.gmra.mxu0 %v537
        %v2297 = vpop.f32.mrf.mxu0
        %v2298 = vadd.f32 %v2279, %v2297
        %v2299 = vpop.f32.mrf.mxu0
        %v2300 = vadd.f32 %v2281, %v2299
        %2301 = vdwg.mxu0
        %2302 = vmatpush.bf16.msra.mxu0 %v1621
        %2303 = vmatpush.bf16.msra.mxu0 %v1613
        %2304 = vmatpush.bf16.msra.mxu0 %v1605
        %2305 = vmatpush.bf16.msra.mxu0 %v1597
        %2306 = vmatpush.bf16.msra.mxu0 %v1589
        %2307 = vmatpush.bf16.msra.mxu0 %v1581
        %2308 = vmatpush.bf16.msra.mxu0 %v1573
        %2309 = vmatpush.bf16.msra.mxu0 %v1565
        %2310 = vmatmul.bf16.gmra.mxu0 %v530
        %v2311 = vpop.f32.mrf.mxu0
        %v2312 = vadd.f32 0.0, %v2311
        %v2313 = vpop.f32.mrf.mxu0
        %v2314 = vadd.f32 0.0, %v2313
        %2315 = vmatmul.bf16.gmra.mxu0 %v534
        %v2316 = vpop.f32.mrf.mxu0
        %v2317 = vadd.f32 0.0, %v2316
        %v2318 = vpop.f32.mrf.mxu0
        %v2319 = vadd.f32 0.0, %v2318
        %2320 = vdwg.mxu0
        %2321 = vmatpush.bf16.msra.mxu0 %v1685
        %2322 = vmatpush.bf16.msra.mxu0 %v1677
        %2323 = vmatpush.bf16.msra.mxu0 %v1669
        %2324 = vmatpush.bf16.msra.mxu0 %v1661
        %2325 = vmatpush.bf16.msra.mxu0 %v1653
        %2326 = vmatpush.bf16.msra.mxu0 %v1645
        %2327 = vmatpush.bf16.msra.mxu0 %v1637
        %2328 = vmatpush.bf16.msra.mxu0 %v1629
        %2329 = vmatmul.bf16.gmra.mxu0 %v531
        %v2330 = vpop.f32.mrf.mxu0
        %v2331 = vadd.f32 %v2312, %v2330
        %v2332 = vpop.f32.mrf.mxu0
        %v2333 = vadd.f32 %v2314, %v2332
        %2334 = vmatmul.bf16.gmra.mxu0 %v535
        %v2335 = vpop.f32.mrf.mxu0
        %v2336 = vadd.f32 %v2317, %v2335
        %v2337 = vpop.f32.mrf.mxu0
        %v2338 = vadd.f32 %v2319, %v2337
        %2339 = vdwg.mxu0
        %2340 = vmatpush.bf16.msra.mxu0 %v1749
        %2341 = vmatpush.bf16.msra.mxu0 %v1741
        %2342 = vmatpush.bf16.msra.mxu0 %v1733
        %2343 = vmatpush.bf16.msra.mxu0 %v1725
        %2344 = vmatpush.bf16.msra.mxu0 %v1717
        %2345 = vmatpush.bf16.msra.mxu0 %v1709
        %2346 = vmatpush.bf16.msra.mxu0 %v1701
        %2347 = vmatpush.bf16.msra.mxu0 %v1693
        %2348 = vmatmul.bf16.gmra.mxu0 %v532
        %v2349 = vpop.f32.mrf.mxu0
        %v2350 = vadd.f32 %v2331, %v2349
        %v2351 = vpop.f32.mrf.mxu0
        %v2352 = vadd.f32 %v2333, %v2351
        %2353 = vmatmul.bf16.gmra.mxu0 %v536
        %v2354 = vpop.f32.mrf.mxu0
        %v2355 = vadd.f32 %v2336, %v2354
        %v2356 = vpop.f32.mrf.mxu0
        %v2357 = vadd.f32 %v2338, %v2356
        %2358 = vdwg.mxu0
        %2359 = vmatpush.bf16.msra.mxu0 %v1813
        %2360 = vmatpush.bf16.msra.mxu0 %v1805
        %2361 = vmatpush.bf16.msra.mxu0 %v1797
        %2362 = vmatpush.bf16.msra.mxu0 %v1789
        %2363 = vmatpush.bf16.msra.mxu0 %v1781
        %2364 = vmatpush.bf16.msra.mxu0 %v1773
        %2365 = vmatpush.bf16.msra.mxu0 %v1765
        %2366 = vmatpush.bf16.msra.mxu0 %v1757
        %2367 = vmatmul.bf16.gmra.mxu0 %v533
        %v2368 = vpop.f32.mrf.mxu0
        %v2369 = vadd.f32 %v2350, %v2368
        %v2370 = vpop.f32.mrf.mxu0
        %v2371 = vadd.f32 %v2352, %v2370
        %2372 = vmatmul.bf16.gmra.mxu0 %v537
        %v2373 = vpop.f32.mrf.mxu0
        %v2374 = vadd.f32 %v2355, %v2373
        %v2375 = vpop.f32.mrf.mxu0
        %v2376 = vadd.f32 %v2357, %v2375
        %2377 = vdwg.mxu0
        %2378 = vmatpush.bf16.msra.mxu0 %v1622
        %2379 = vmatpush.bf16.msra.mxu0 %v1614
        %2380 = vmatpush.bf16.msra.mxu0 %v1606
        %2381 = vmatpush.bf16.msra.mxu0 %v1598
        %2382 = vmatpush.bf16.msra.mxu0 %v1590
        %2383 = vmatpush.bf16.msra.mxu0 %v1582
        %2384 = vmatpush.bf16.msra.mxu0 %v1574
        %2385 = vmatpush.bf16.msra.mxu0 %v1566
        %2386 = vmatmul.bf16.gmra.mxu0 %v530
        %v2387 = vpop.f32.mrf.mxu0
        %v2388 = vadd.f32 0.0, %v2387
        %v2389 = vpop.f32.mrf.mxu0
        %v2390 = vadd.f32 0.0, %v2389
        %2391 = vmatmul.bf16.gmra.mxu0 %v534
        %v2392 = vpop.f32.mrf.mxu0
        %v2393 = vadd.f32 0.0, %v2392
        %v2394 = vpop.f32.mrf.mxu0
        %v2395 = vadd.f32 0.0, %v2394
        %2396 = vdwg.mxu0
        %2397 = vmatpush.bf16.msra.mxu0 %v1686
        %2398 = vmatpush.bf16.msra.mxu0 %v1678
        %2399 = vmatpush.bf16.msra.mxu0 %v1670
        %2400 = vmatpush.bf16.msra.mxu0 %v1662
        %2401 = vmatpush.bf16.msra.mxu0 %v1654
        %2402 = vmatpush.bf16.msra.mxu0 %v1646
        %2403 = vmatpush.bf16.msra.mxu0 %v1638
        %2404 = vmatpush.bf16.msra.mxu0 %v1630
        %2405 = vmatmul.bf16.gmra.mxu0 %v531
        %v2406 = vpop.f32.mrf.mxu0
        %v2407 = vadd.f32 %v2388, %v2406
        %v2408 = vpop.f32.mrf.mxu0
        %v2409 = vadd.f32 %v2390, %v2408
        %2410 = vmatmul.bf16.gmra.mxu0 %v535
        %v2411 = vpop.f32.mrf.mxu0
        %v2412 = vadd.f32 %v2393, %v2411
        %v2413 = vpop.f32.mrf.mxu0
        %v2414 = vadd.f32 %v2395, %v2413
        %2415 = vdwg.mxu0
        %2416 = vmatpush.bf16.msra.mxu0 %v1750
        %2417 = vmatpush.bf16.msra.mxu0 %v1742
        %2418 = vmatpush.bf16.msra.mxu0 %v1734
        %2419 = vmatpush.bf16.msra.mxu0 %v1726
        %2420 = vmatpush.bf16.msra.mxu0 %v1718
        %2421 = vmatpush.bf16.msra.mxu0 %v1710
        %2422 = vmatpush.bf16.msra.mxu0 %v1702
        %2423 = vmatpush.bf16.msra.mxu0 %v1694
        %2424 = vmatmul.bf16.gmra.mxu0 %v532
        %v2425 = vpop.f32.mrf.mxu0
        %v2426 = vadd.f32 %v2407, %v2425
        %v2427 = vpop.f32.mrf.mxu0
        %v2428 = vadd.f32 %v2409, %v2427
        %2429 = vmatmul.bf16.gmra.mxu0 %v536
        %v2430 = vpop.f32.mrf.mxu0
        %v2431 = vadd.f32 %v2412, %v2430
        %v2432 = vpop.f32.mrf.mxu0
        %v2433 = vadd.f32 %v2414, %v2432
        %2434 = vdwg.mxu0
        %2435 = vmatpush.bf16.msra.mxu0 %v1814
        %2436 = vmatpush.bf16.msra.mxu0 %v1806
        %2437 = vmatpush.bf16.msra.mxu0 %v1798
        %2438 = vmatpush.bf16.msra.mxu0 %v1790
        %2439 = vmatpush.bf16.msra.mxu0 %v1782
        %2440 = vmatpush.bf16.msra.mxu0 %v1774
        %2441 = vmatpush.bf16.msra.mxu0 %v1766
        %2442 = vmatpush.bf16.msra.mxu0 %v1758
        %2443 = vmatmul.bf16.gmra.mxu0 %v533
        %v2444 = vpop.f32.mrf.mxu0
        %v2445 = vadd.f32 %v2426, %v2444
        %v2446 = vpop.f32.mrf.mxu0
        %v2447 = vadd.f32 %v2428, %v2446
        %2448 = vmatmul.bf16.gmra.mxu0 %v537
        %v2449 = vpop.f32.mrf.mxu0
        %v2450 = vadd.f32 %v2431, %v2449
        %v2451 = vpop.f32.mrf.mxu0
        %v2452 = vadd.f32 %v2433, %v2451
        %2453 = vdwg.mxu0
        %2454 = vmatpush.bf16.msra.mxu0 %v1623
        %2455 = vmatpush.bf16.msra.mxu0 %v1615
        %2456 = vmatpush.bf16.msra.mxu0 %v1607
        %2457 = vmatpush.bf16.msra.mxu0 %v1599
        %2458 = vmatpush.bf16.msra.mxu0 %v1591
        %2459 = vmatpush.bf16.msra.mxu0 %v1583
        %2460 = vmatpush.bf16.msra.mxu0 %v1575
        %2461 = vmatpush.bf16.msra.mxu0 %v1567
        %2462 = vmatmul.bf16.gmra.mxu0 %v530
        %v2463 = vpop.f32.mrf.mxu0
        %v2464 = vadd.f32 0.0, %v2463
        %v2465 = vpop.f32.mrf.mxu0
        %v2466 = vadd.f32 0.0, %v2465
        %2467 = vmatmul.bf16.gmra.mxu0 %v534
        %v2468 = vpop.f32.mrf.mxu0
        %v2469 = vadd.f32 0.0, %v2468
        %v2470 = vpop.f32.mrf.mxu0
        %v2471 = vadd.f32 0.0, %v2470
        %2472 = vdwg.mxu0
        %2473 = vmatpush.bf16.msra.mxu0 %v1687
        %2474 = vmatpush.bf16.msra.mxu0 %v1679
        %2475 = vmatpush.bf16.msra.mxu0 %v1671
        %2476 = vmatpush.bf16.msra.mxu0 %v1663
        %2477 = vmatpush.bf16.msra.mxu0 %v1655
        %2478 = vmatpush.bf16.msra.mxu0 %v1647
        %2479 = vmatpush.bf16.msra.mxu0 %v1639
        %2480 = vmatpush.bf16.msra.mxu0 %v1631
        %2481 = vmatmul.bf16.gmra.mxu0 %v531
        %v2482 = vpop.f32.mrf.mxu0
        %v2483 = vadd.f32 %v2464, %v2482
        %v2484 = vpop.f32.mrf.mxu0
        %v2485 = vadd.f32 %v2466, %v2484
        %2486 = vmatmul.bf16.gmra.mxu0 %v535
        %v2487 = vpop.f32.mrf.mxu0
        %v2488 = vadd.f32 %v2469, %v2487
        %v2489 = vpop.f32.mrf.mxu0
        %v2490 = vadd.f32 %v2471, %v2489
        %2491 = vdwg.mxu0
        %2492 = vmatpush.bf16.msra.mxu0 %v1751
        %2493 = vmatpush.bf16.msra.mxu0 %v1743
        %2494 = vmatpush.bf16.msra.mxu0 %v1735
        %2495 = vmatpush.bf16.msra.mxu0 %v1727
        %2496 = vmatpush.bf16.msra.mxu0 %v1719
        %2497 = vmatpush.bf16.msra.mxu0 %v1711
        %2498 = vmatpush.bf16.msra.mxu0 %v1703
        %2499 = vmatpush.bf16.msra.mxu0 %v1695
        %2500 = vmatmul.bf16.gmra.mxu0 %v532
        %v2501 = vpop.f32.mrf.mxu0
        %v2502 = vadd.f32 %v2483, %v2501
        %v2503 = vpop.f32.mrf.mxu0
        %v2504 = vadd.f32 %v2485, %v2503
        %2505 = vmatmul.bf16.gmra.mxu0 %v536
        %v2506 = vpop.f32.mrf.mxu0
        %v2507 = vadd.f32 %v2488, %v2506
        %v2508 = vpop.f32.mrf.mxu0
        %v2509 = vadd.f32 %v2490, %v2508
        %2510 = vdwg.mxu0
        %2511 = vmatpush.bf16.msra.mxu0 %v1815
        %2512 = vmatpush.bf16.msra.mxu0 %v1807
        %2513 = vmatpush.bf16.msra.mxu0 %v1799
        %2514 = vmatpush.bf16.msra.mxu0 %v1791
        %2515 = vmatpush.bf16.msra.mxu0 %v1783
        %2516 = vmatpush.bf16.msra.mxu0 %v1775
        %2517 = vmatpush.bf16.msra.mxu0 %v1767
        %2518 = vmatpush.bf16.msra.mxu0 %v1759
        %2519 = vmatmul.bf16.gmra.mxu0 %v533
        %v2520 = vpop.f32.mrf.mxu0
        %v2521 = vadd.f32 %v2502, %v2520
        %v2522 = vpop.f32.mrf.mxu0
        %v2523 = vadd.f32 %v2504, %v2522
        %2524 = vmatmul.bf16.gmra.mxu0 %v537
        %v2525 = vpop.f32.mrf.mxu0
        %v2526 = vadd.f32 %v2507, %v2525
        %v2527 = vpop.f32.mrf.mxu0
        %v2528 = vadd.f32 %v2509, %v2527
        %2529 = vdwg.mxu0
        %2530 = vmatpush.bf16.msra.mxu0 %v1624
        %2531 = vmatpush.bf16.msra.mxu0 %v1616
        %2532 = vmatpush.bf16.msra.mxu0 %v1608
        %2533 = vmatpush.bf16.msra.mxu0 %v1600
        %2534 = vmatpush.bf16.msra.mxu0 %v1592
        %2535 = vmatpush.bf16.msra.mxu0 %v1584
        %2536 = vmatpush.bf16.msra.mxu0 %v1576
        %2537 = vmatpush.bf16.msra.mxu0 %v1568
        %2538 = vmatmul.bf16.gmra.mxu0 %v530
        %v2539 = vpop.f32.mrf.mxu0
        %v2540 = vadd.f32 0.0, %v2539
        %v2541 = vpop.f32.mrf.mxu0
        %v2542 = vadd.f32 0.0, %v2541
        %2543 = vmatmul.bf16.gmra.mxu0 %v534
        %v2544 = vpop.f32.mrf.mxu0
        %v2545 = vadd.f32 0.0, %v2544
        %v2546 = vpop.f32.mrf.mxu0
        %v2547 = vadd.f32 0.0, %v2546
        %2548 = vdwg.mxu0
        %2549 = vmatpush.bf16.msra.mxu0 %v1688
        %2550 = vmatpush.bf16.msra.mxu0 %v1680
        %2551 = vmatpush.bf16.msra.mxu0 %v1672
        %2552 = vmatpush.bf16.msra.mxu0 %v1664
        %2553 = vmatpush.bf16.msra.mxu0 %v1656
        %2554 = vmatpush.bf16.msra.mxu0 %v1648
        %2555 = vmatpush.bf16.msra.mxu0 %v1640
        %2556 = vmatpush.bf16.msra.mxu0 %v1632
        %2557 = vmatmul.bf16.gmra.mxu0 %v531
        %v2558 = vpop.f32.mrf.mxu0
        %v2559 = vadd.f32 %v2540, %v2558
        %v2560 = vpop.f32.mrf.mxu0
        %v2561 = vadd.f32 %v2542, %v2560
        %2562 = vmatmul.bf16.gmra.mxu0 %v535
        %v2563 = vpop.f32.mrf.mxu0
        %v2564 = vadd.f32 %v2545, %v2563
        %v2565 = vpop.f32.mrf.mxu0
        %v2566 = vadd.f32 %v2547, %v2565
        %2567 = vdwg.mxu0
        %2568 = vmatpush.bf16.msra.mxu0 %v1752
        %2569 = vmatpush.bf16.msra.mxu0 %v1744
        %2570 = vmatpush.bf16.msra.mxu0 %v1736
        %2571 = vmatpush.bf16.msra.mxu0 %v1728
        %2572 = vmatpush.bf16.msra.mxu0 %v1720
        %2573 = vmatpush.bf16.msra.mxu0 %v1712
        %2574 = vmatpush.bf16.msra.mxu0 %v1704
        %2575 = vmatpush.bf16.msra.mxu0 %v1696
        %2576 = vmatmul.bf16.gmra.mxu0 %v532
        %v2577 = vpop.f32.mrf.mxu0
        %v2578 = vadd.f32 %v2559, %v2577
        %v2579 = vpop.f32.mrf.mxu0
        %v2580 = vadd.f32 %v2561, %v2579
        %2581 = vmatmul.bf16.gmra.mxu0 %v536
        %v2582 = vpop.f32.mrf.mxu0
        %v2583 = vadd.f32 %v2564, %v2582
        %v2584 = vpop.f32.mrf.mxu0
        %v2585 = vadd.f32 %v2566, %v2584
        %2586 = vdwg.mxu0
        %2587 = vmatpush.bf16.msra.mxu0 %v1816
        %2588 = vmatpush.bf16.msra.mxu0 %v1808
        %2589 = vmatpush.bf16.msra.mxu0 %v1800
        %2590 = vmatpush.bf16.msra.mxu0 %v1792
        %2591 = vmatpush.bf16.msra.mxu0 %v1784
        %2592 = vmatpush.bf16.msra.mxu0 %v1776
        %2593 = vmatpush.bf16.msra.mxu0 %v1768
        %2594 = vmatpush.bf16.msra.mxu0 %v1760
        %2595 = vmatmul.bf16.gmra.mxu0 %v533
        %v2596 = vpop.f32.mrf.mxu0
        %v2597 = vadd.f32 %v2578, %v2596
        %v2598 = vpop.f32.mrf.mxu0
        %v2599 = vadd.f32 %v2580, %v2598
        %2600 = vmatmul.bf16.gmra.mxu0 %v537
        %v2601 = vpop.f32.mrf.mxu0
        %v2602 = vadd.f32 %v2583, %v2601
        %v2603 = vpop.f32.mrf.mxu0
        %v2604 = vadd.f32 %v2585, %v2603
        %2605 = vdwg.mxu0
        %2606 = vmatpush.bf16.msra.mxu0 %v1625
        %2607 = vmatpush.bf16.msra.mxu0 %v1617
        %2608 = vmatpush.bf16.msra.mxu0 %v1609
        %2609 = vmatpush.bf16.msra.mxu0 %v1601
        %2610 = vmatpush.bf16.msra.mxu0 %v1593
        %2611 = vmatpush.bf16.msra.mxu0 %v1585
        %2612 = vmatpush.bf16.msra.mxu0 %v1577
        %2613 = vmatpush.bf16.msra.mxu0 %v1569
        %2614 = vmatmul.bf16.gmra.mxu0 %v530
        %v2615 = vpop.f32.mrf.mxu0
        %v2616 = vadd.f32 0.0, %v2615
        %v2617 = vpop.f32.mrf.mxu0
        %v2618 = vadd.f32 0.0, %v2617
        %2619 = vmatmul.bf16.gmra.mxu0 %v534
        %v2620 = vpop.f32.mrf.mxu0
        %v2621 = vadd.f32 0.0, %v2620
        %v2622 = vpop.f32.mrf.mxu0
        %v2623 = vadd.f32 0.0, %v2622
        %2624 = vdwg.mxu0
        %2625 = vmatpush.bf16.msra.mxu0 %v1689
        %2626 = vmatpush.bf16.msra.mxu0 %v1681
        %2627 = vmatpush.bf16.msra.mxu0 %v1673
        %2628 = vmatpush.bf16.msra.mxu0 %v1665
        %2629 = vmatpush.bf16.msra.mxu0 %v1657
        %2630 = vmatpush.bf16.msra.mxu0 %v1649
        %2631 = vmatpush.bf16.msra.mxu0 %v1641
        %2632 = vmatpush.bf16.msra.mxu0 %v1633
        %2633 = vmatmul.bf16.gmra.mxu0 %v531
        %v2634 = vpop.f32.mrf.mxu0
        %v2635 = vadd.f32 %v2616, %v2634
        %v2636 = vpop.f32.mrf.mxu0
        %v2637 = vadd.f32 %v2618, %v2636
        %2638 = vmatmul.bf16.gmra.mxu0 %v535
        %v2639 = vpop.f32.mrf.mxu0
        %v2640 = vadd.f32 %v2621, %v2639
        %v2641 = vpop.f32.mrf.mxu0
        %v2642 = vadd.f32 %v2623, %v2641
        %2643 = vdwg.mxu0
        %2644 = vmatpush.bf16.msra.mxu0 %v1753
        %2645 = vmatpush.bf16.msra.mxu0 %v1745
        %2646 = vmatpush.bf16.msra.mxu0 %v1737
        %2647 = vmatpush.bf16.msra.mxu0 %v1729
        %2648 = vmatpush.bf16.msra.mxu0 %v1721
        %2649 = vmatpush.bf16.msra.mxu0 %v1713
        %2650 = vmatpush.bf16.msra.mxu0 %v1705
        %2651 = vmatpush.bf16.msra.mxu0 %v1697
        %2652 = vmatmul.bf16.gmra.mxu0 %v532
        %v2653 = vpop.f32.mrf.mxu0
        %v2654 = vadd.f32 %v2635, %v2653
        %v2655 = vpop.f32.mrf.mxu0
        %v2656 = vadd.f32 %v2637, %v2655
        %2657 = vmatmul.bf16.gmra.mxu0 %v536
        %v2658 = vpop.f32.mrf.mxu0
        %v2659 = vadd.f32 %v2640, %v2658
        %v2660 = vpop.f32.mrf.mxu0
        %v2661 = vadd.f32 %v2642, %v2660
        %2662 = vdwg.mxu0
        %2663 = vmatpush.bf16.msra.mxu0 %v1817
        %2664 = vmatpush.bf16.msra.mxu0 %v1809
        %2665 = vmatpush.bf16.msra.mxu0 %v1801
        %2666 = vmatpush.bf16.msra.mxu0 %v1793
        %2667 = vmatpush.bf16.msra.mxu0 %v1785
        %2668 = vmatpush.bf16.msra.mxu0 %v1777
        %2669 = vmatpush.bf16.msra.mxu0 %v1769
        %2670 = vmatpush.bf16.msra.mxu0 %v1761
        %2671 = vmatmul.bf16.gmra.mxu0 %v533
        %v2672 = vpop.f32.mrf.mxu0
        %v2673 = vadd.f32 %v2654, %v2672
        %v2674 = vpop.f32.mrf.mxu0
        %v2675 = vadd.f32 %v2656, %v2674
        %2676 = vmatmul.bf16.gmra.mxu0 %v537
        %v2677 = vpop.f32.mrf.mxu0
        %v2678 = vadd.f32 %v2659, %v2677
        %v2679 = vpop.f32.mrf.mxu0
        %v2680 = vadd.f32 %v2661, %v2679
        %2681 = vdwg.mxu0
        %v2682 = vld [vmem:[#allocation8] sm:$0xff]
        %v2683 = vld [vmem:[#allocation8 + $0x8] sm:$0xff]
        %v2684 = vld [vmem:[#allocation8 + $0x10] sm:$0xff]
        %v2685 = vld [vmem:[#allocation8 + $0x18] sm:$0xff]
        %v2686 = vld [vmem:[#allocation10] sm:$0xff]
        %v2687 = vld [vmem:[#allocation10 + $0x8] sm:$0xff]
        %v2688 = vld [vmem:[#allocation10 + $0x10] sm:$0xff]
        %v2689 = vld [vmem:[#allocation10 + $0x18] sm:$0xff]
        %v2690 = vmul.f32 %v2141, %v2682
        %v2691 = vmul.f32 %v2143, %v2683
        %v2692 = vmul.f32 %v2146, %v2684
        %v2693 = vmul.f32 %v2148, %v2685
        %2694 = vrot.lane.b32.xlu0 %v2141, 64
        %v2695 = vpop.permute.xlu0 %2694
        %2696 = vrot.lane.b32.xlu0 %v2143, 64
        %v2697 = vpop.permute.xlu0 %2696
        %2698 = vrot.lane.b32.xlu0 %v2146, 64
        %v2699 = vpop.permute.xlu0 %2698
        %2700 = vrot.lane.b32.xlu0 %v2148, 64
        %v2701 = vpop.permute.xlu0 %2700
        %v2702 = vmul.f32 %v2695, %v2686
        %v2703 = vmul.f32 %v2697, %v2687
        %v2704 = vmul.f32 %v2699, %v2688
        %v2705 = vmul.f32 %v2701, %v2689
        %v2706 = vadd.f32 %v2690, %v2702
        %v2707 = vadd.f32 %v2691, %v2703
        %v2708 = vadd.f32 %v2692, %v2704
        %v2709 = vadd.f32 %v2693, %v2705
        %v2710 = vpack.c.bf16 %v2706, %v2706
        %v2711 = vpack.c.bf16 %v2707, %v2707
        %v2712 = vpack.c.bf16 %v2708, %v2708
        %v2713 = vpack.c.bf16 %v2709, %v2709
        %2714 = vst [vmem:[%s366] sm:$0xf] %v2710
        %2715 = vst [vmem:[%s366 + $0x4] sm:$0xf] %v2711
        %2716 = vst [vmem:[%s366 + $0x8] sm:$0xf] %v2712
        %2717 = vst [vmem:[%s366 + $0xc] sm:$0xf] %v2713
        %v2718 = vmul.f32 %v2217, %v2682
        %v2719 = vmul.f32 %v2219, %v2683
        %v2720 = vmul.f32 %v2222, %v2684
        %v2721 = vmul.f32 %v2224, %v2685
        %2722 = vrot.lane.b32.xlu0 %v2217, 64
        %v2723 = vpop.permute.xlu0 %2722
        %2724 = vrot.lane.b32.xlu0 %v2219, 64
        %v2725 = vpop.permute.xlu0 %2724
        %2726 = vrot.lane.b32.xlu0 %v2222, 64
        %v2727 = vpop.permute.xlu0 %2726
        %2728 = vrot.lane.b32.xlu0 %v2224, 64
        %v2729 = vpop.permute.xlu0 %2728
        %v2730 = vmul.f32 %v2723, %v2686
        %v2731 = vmul.f32 %v2725, %v2687
        %v2732 = vmul.f32 %v2727, %v2688
        %v2733 = vmul.f32 %v2729, %v2689
        %v2734 = vadd.f32 %v2718, %v2730
        %v2735 = vadd.f32 %v2719, %v2731
        %v2736 = vadd.f32 %v2720, %v2732
        %v2737 = vadd.f32 %v2721, %v2733
        %v2738 = vpack.c.bf16 %v2734, %v2734
        %v2739 = vpack.c.bf16 %v2735, %v2735
        %v2740 = vpack.c.bf16 %v2736, %v2736
        %v2741 = vpack.c.bf16 %v2737, %v2737
        %s2742 = scalar_lea.vmem %s366, 16 [#allocation11]
        %2743 = vst [vmem:[%s2742] sm:$0xf] %v2738
        %2744 = vst [vmem:[%s2742 + $0x4] sm:$0xf] %v2739
        %2745 = vst [vmem:[%s2742 + $0x8] sm:$0xf] %v2740
        %2746 = vst [vmem:[%s2742 + $0xc] sm:$0xf] %v2741
        %v2747 = vmul.f32 %v2293, %v2682
        %v2748 = vmul.f32 %v2295, %v2683
        %v2749 = vmul.f32 %v2298, %v2684
        %v2750 = vmul.f32 %v2300, %v2685
        %2751 = vrot.lane.b32.xlu0 %v2293, 64
        %v2752 = vpop.permute.xlu0 %2751
        %2753 = vrot.lane.b32.xlu0 %v2295, 64
        %v2754 = vpop.permute.xlu0 %2753
        %2755 = vrot.lane.b32.xlu0 %v2298, 64
        %v2756 = vpop.permute.xlu0 %2755
        %2757 = vrot.lane.b32.xlu0 %v2300, 64
        %v2758 = vpop.permute.xlu0 %2757
        %v2759 = vmul.f32 %v2752, %v2686
        %v2760 = vmul.f32 %v2754, %v2687
        %v2761 = vmul.f32 %v2756, %v2688
        %v2762 = vmul.f32 %v2758, %v2689
        %v2763 = vadd.f32 %v2747, %v2759
        %v2764 = vadd.f32 %v2748, %v2760
        %v2765 = vadd.f32 %v2749, %v2761
        %v2766 = vadd.f32 %v2750, %v2762
        %v2767 = vpack.c.bf16 %v2763, %v2763
        %v2768 = vpack.c.bf16 %v2764, %v2764
        %v2769 = vpack.c.bf16 %v2765, %v2765
        %v2770 = vpack.c.bf16 %v2766, %v2766
        %s2771 = scalar_lea.vmem %s366, 32 [#allocation11]
        %2772 = vst [vmem:[%s2771] sm:$0xf] %v2767
        %2773 = vst [vmem:[%s2771 + $0x4] sm:$0xf] %v2768
        %2774 = vst [vmem:[%s2771 + $0x8] sm:$0xf] %v2769
        %2775 = vst [vmem:[%s2771 + $0xc] sm:$0xf] %v2770
        %v2776 = vmul.f32 %v2369, %v2682
        %v2777 = vmul.f32 %v2371, %v2683
        %v2778 = vmul.f32 %v2374, %v2684
        %v2779 = vmul.f32 %v2376, %v2685
        %2780 = vrot.lane.b32.xlu0 %v2369, 64
        %v2781 = vpop.permute.xlu0 %2780
        %2782 = vrot.lane.b32.xlu0 %v2371, 64
        %v2783 = vpop.permute.xlu0 %2782
        %2784 = vrot.lane.b32.xlu0 %v2374, 64
        %v2785 = vpop.permute.xlu0 %2784
        %2786 = vrot.lane.b32.xlu0 %v2376, 64
        %v2787 = vpop.permute.xlu0 %2786
        %v2788 = vmul.f32 %v2781, %v2686
        %v2789 = vmul.f32 %v2783, %v2687
        %v2790 = vmul.f32 %v2785, %v2688
        %v2791 = vmul.f32 %v2787, %v2689
        %v2792 = vadd.f32 %v2776, %v2788
        %v2793 = vadd.f32 %v2777, %v2789
        %v2794 = vadd.f32 %v2778, %v2790
        %v2795 = vadd.f32 %v2779, %v2791
        %v2796 = vpack.c.bf16 %v2792, %v2792
        %v2797 = vpack.c.bf16 %v2793, %v2793
        %v2798 = vpack.c.bf16 %v2794, %v2794
        %v2799 = vpack.c.bf16 %v2795, %v2795
        %s2800 = scalar_lea.vmem %s366, 48 [#allocation11]
        %2801 = vst [vmem:[%s2800] sm:$0xf] %v2796
        %2802 = vst [vmem:[%s2800 + $0x4] sm:$0xf] %v2797
        %2803 = vst [vmem:[%s2800 + $0x8] sm:$0xf] %v2798
        %2804 = vst [vmem:[%s2800 + $0xc] sm:$0xf] %v2799
        %v2805 = vmul.f32 %v2445, %v2682
        %v2806 = vmul.f32 %v2447, %v2683
        %v2807 = vmul.f32 %v2450, %v2684
        %v2808 = vmul.f32 %v2452, %v2685
        %2809 = vrot.lane.b32.xlu0 %v2445, 64
        %v2810 = vpop.permute.xlu0 %2809
        %2811 = vrot.lane.b32.xlu0 %v2447, 64
        %v2812 = vpop.permute.xlu0 %2811
        %2813 = vrot.lane.b32.xlu0 %v2450, 64
        %v2814 = vpop.permute.xlu0 %2813
        %2815 = vrot.lane.b32.xlu0 %v2452, 64
        %v2816 = vpop.permute.xlu0 %2815
        %v2817 = vmul.f32 %v2810, %v2686
        %v2818 = vmul.f32 %v2812, %v2687
        %v2819 = vmul.f32 %v2814, %v2688
        %v2820 = vmul.f32 %v2816, %v2689
        %v2821 = vadd.f32 %v2805, %v2817
        %v2822 = vadd.f32 %v2806, %v2818
        %v2823 = vadd.f32 %v2807, %v2819
        %v2824 = vadd.f32 %v2808, %v2820
        %v2825 = vpack.c.bf16 %v2821, %v2821
        %v2826 = vpack.c.bf16 %v2822, %v2822
        %v2827 = vpack.c.bf16 %v2823, %v2823
        %v2828 = vpack.c.bf16 %v2824, %v2824
        %2829 = vst [vmem:[%s373] sm:$0xf] %v2825
        %2830 = vst [vmem:[%s373 + $0x4] sm:$0xf] %v2826
        %2831 = vst [vmem:[%s373 + $0x8] sm:$0xf] %v2827
        %2832 = vst [vmem:[%s373 + $0xc] sm:$0xf] %v2828
        %v2833 = vpack.c.bf16 %v2597, %v2597
        %v2834 = vpack.c.bf16 %v2599, %v2599
        %v2835 = vpack.c.bf16 %v2602, %v2602
        %v2836 = vpack.c.bf16 %v2604, %v2604
        %2837 = vst [vmem:[%s380] sm:$0xf] %v2833
        %2838 = vst [vmem:[%s380 + $0x4] sm:$0xf] %v2834
        %2839 = vst [vmem:[%s380 + $0x8] sm:$0xf] %v2835
        %2840 = vst [vmem:[%s380 + $0xc] sm:$0xf] %v2836
        %v2841 = vmul.f32 %v2521, %v2682
        %v2842 = vmul.f32 %v2523, %v2683
        %v2843 = vmul.f32 %v2526, %v2684
        %v2844 = vmul.f32 %v2528, %v2685
        %2845 = vrot.lane.b32.xlu0 %v2521, 64
        %v2846 = vpop.permute.xlu0 %2845
        %2847 = vrot.lane.b32.xlu0 %v2523, 64
        %v2848 = vpop.permute.xlu0 %2847
        %2849 = vrot.lane.b32.xlu0 %v2526, 64
        %v2850 = vpop.permute.xlu0 %2849
        %2851 = vrot.lane.b32.xlu0 %v2528, 64
        %v2852 = vpop.permute.xlu0 %2851
        %v2853 = vmul.f32 %v2846, %v2686
        %v2854 = vmul.f32 %v2848, %v2687
        %v2855 = vmul.f32 %v2850, %v2688
        %v2856 = vmul.f32 %v2852, %v2689
        %v2857 = vadd.f32 %v2841, %v2853
        %v2858 = vadd.f32 %v2842, %v2854
        %v2859 = vadd.f32 %v2843, %v2855
        %v2860 = vadd.f32 %v2844, %v2856
        %v2861 = vpack.c.bf16 %v2857, %v2857
        %v2862 = vpack.c.bf16 %v2858, %v2858
        %v2863 = vpack.c.bf16 %v2859, %v2859
        %v2864 = vpack.c.bf16 %v2860, %v2860
        %s2865 = scalar_lea.vmem %s373, 16 [#allocation12]
        %2866 = vst [vmem:[%s2865] sm:$0xf] %v2861
        %2867 = vst [vmem:[%s2865 + $0x4] sm:$0xf] %v2862
        %2868 = vst [vmem:[%s2865 + $0x8] sm:$0xf] %v2863
        %2869 = vst [vmem:[%s2865 + $0xc] sm:$0xf] %v2864
        %v2870 = vpack.c.bf16 %v2673, %v2673
        %v2871 = vpack.c.bf16 %v2675, %v2675
        %v2872 = vpack.c.bf16 %v2678, %v2678
        %v2873 = vpack.c.bf16 %v2680, %v2680
        %s2874 = scalar_lea.vmem %s380, 16 [#allocation14]
        %2875 = vst [vmem:[%s2874] sm:$0xf] %v2870
        %2876 = vst [vmem:[%s2874 + $0x4] sm:$0xf] %v2871
        %2877 = vst [vmem:[%s2874 + $0x8] sm:$0xf] %v2872
        %2878 = vst [vmem:[%s2874 + $0xc] sm:$0xf] %v2873
        %s2879 = sand.u32 %s148, 1
        %s2880 = scalar_lea.sflag [#allocation4], %s2879
        %s2881 = sand.u32 %s148, 1
        %s2882 = smul.addr %s2881, 64
        %s2883 = scalar_lea.vmem [#allocation11], %s2882
        %s2884 = sand.u32 %s30, 1
        %s2885 = scalar_lea.sflag [#allocation13], %s2884
        %s2886 = sand.u32 %s174, 1
        %s2887 = smul.addr %s2886, 32
        %s2888 = scalar_lea.vmem [#allocation12], %s2887
        %s2889 = sand.u32 %s30, 1
        %s2890 = scalar_lea.sflag [#allocation13], %s2889
        %s2891 = sand.u32 %s200, 1
        %s2892 = smul.addr %s2891, 32
        %s2893 = scalar_lea.vmem [#allocation14], %s2892
        // Predicated region
        $region61: #{tpu_custom_call.1} parent=39 // pred_check
          %p2894 = pneg %p158
        $region62: #{tpu_custom_call.1} parent=39 // pred_check_branch
          %2896 = sbr.rel (%p2894) target = $region64
        $region63: #{tpu_custom_call.1} parent=39 // pred_region
          %2898 = vsyncadd %s2880, 0
          %s2899 = smul.addr %s30, 16
          %s2900 = smul.addr %s2899, 4
          %s2901 = scalar_lea.hbm %s5, %s2900
          %s2902 = sshll.u32 %s2883, 4
          %s2903 = int_to_ptr.vmem [resolvable:$true] %s2902
          %s2904 = sshll.u32 %s2901, 4
          %s2905 = int_to_ptr.hbm [resolvable:$true] %s2904
          %2910 = dma.vmem_to_hbm [thread:$0]  %s2903, 1024, %s2905, %s2880, 64, 64, 4
        $region64: #{tpu_custom_call.1} parent=39 // pred_fallthru
          _
        // Predicated region
        $region65: #{tpu_custom_call.1} parent=39 // pred_check
          %p2911 = pneg %p184
        $region66: #{tpu_custom_call.1} parent=39 // pred_check_branch
          %2913 = sbr.rel (%p2911) target = $region68
        $region67: #{tpu_custom_call.1} parent=39 // pred_region
          %2915 = vsyncadd %s2885, 0
          %s2916 = smul.addr %s30, 8
          %s2917 = smul.addr %s2916, 4
          %s2918 = scalar_lea.hbm %s6, %s2917
          %s2919 = sshll.u32 %s2888, 4
          %s2920 = int_to_ptr.vmem [resolvable:$true] %s2919
          %s2921 = sshll.u32 %s2918, 4
          %s2922 = int_to_ptr.hbm [resolvable:$true] %s2921
          %2927 = dma.vmem_to_hbm [thread:$0]  %s2920, 512, %s2922, %s2885, 64, 64, 4
        $region68: #{tpu_custom_call.1} parent=39 // pred_fallthru
          _
        // Predicated region
        $region69: #{tpu_custom_call.1} parent=39 // pred_check
          %p2928 = pneg %p210
        $region70: #{tpu_custom_call.1} parent=39 // pred_check_branch
          %2930 = sbr.rel (%p2928) target = $region72
        $region71: #{tpu_custom_call.1} parent=39 // pred_region
          %2932 = vsyncadd %s2890, 0
          %s2933 = smul.addr %s30, 8
          %s2934 = smul.addr %s2933, 4
          %s2935 = scalar_lea.hbm %s7, %s2934
          %s2936 = sshll.u32 %s2893, 4
          %s2937 = int_to_ptr.vmem [resolvable:$true] %s2936
          %s2938 = sshll.u32 %s2935, 4
          %s2939 = int_to_ptr.hbm [resolvable:$true] %s2938
          %2944 = dma.vmem_to_hbm [thread:$0]  %s2937, 512, %s2939, %s2890, 64, 64, 4
        $region72: #{tpu_custom_call.1} parent=39 // pred_fallthru
          _
      $region40: #{tpu_custom_call.1} parent=5 // pred_fallthru
        _
      %p2945 = scmp.le.s32.totalorder 2, %s25
      // Predicated region
      $region73: #{tpu_custom_call.1} parent=5 // pred_check
        %p2946 = pneg %p2945
      $region74: #{tpu_custom_call.1} parent=5 // pred_check_branch
        %2948 = sbr.rel (%p2946) target = $region76
      $region75: #{tpu_custom_call.1} parent=5 // pred_region
        %s2949 = ssub.s32 %s25, 2
        // Predicated region
        $region77: #{tpu_custom_call.1} parent=75 // pred_check
          %p2950 = pneg %p164
        $region78: #{tpu_custom_call.1} parent=75 // pred_check_branch
          %2952 = sbr.rel (%p2950) target = $region80
        $region79: #{tpu_custom_call.1} parent=75 // pred_region
          %s2953 = sand.u32 %s149, 1
          %s2954 = scalar_lea.sflag [#allocation4], %s2953
          %s2955 = sand.u32 %s149, 1
          %s2956 = smul.addr %s2955, 64
          %s2957 = scalar_lea.vmem [#allocation11], %s2956
          %2959 = dma.done %s2954, 1024
        $region80: #{tpu_custom_call.1} parent=75 // pred_fallthru
          _
        // Predicated region
        $region81: #{tpu_custom_call.1} parent=75 // pred_check
          %p2960 = pneg %p190
        $region82: #{tpu_custom_call.1} parent=75 // pred_check_branch
          %2962 = sbr.rel (%p2960) target = $region84
        $region83: #{tpu_custom_call.1} parent=75 // pred_region
          %s2963 = sand.u32 %s31, 1
          %s2964 = scalar_lea.sflag [#allocation13], %s2963
          %s2965 = sand.u32 %s175, 1
          %s2966 = smul.addr %s2965, 32
          %s2967 = scalar_lea.vmem [#allocation12], %s2966
          %2969 = dma.done %s2964, 512
        $region84: #{tpu_custom_call.1} parent=75 // pred_fallthru
          _
        // Predicated region
        $region85: #{tpu_custom_call.1} parent=75 // pred_check
          %p2970 = pneg %p216
        $region86: #{tpu_custom_call.1} parent=75 // pred_check_branch
          %2972 = sbr.rel (%p2970) target = $region88
        $region87: #{tpu_custom_call.1} parent=75 // pred_region
          %s2973 = sand.u32 %s31, 1
          %s2974 = scalar_lea.sflag [#allocation13], %s2973
          %s2975 = sand.u32 %s201, 1
          %s2976 = smul.addr %s2975, 32
          %s2977 = scalar_lea.vmem [#allocation14], %s2976
          %2979 = dma.done %s2974, 512
        $region88: #{tpu_custom_call.1} parent=75 // pred_fallthru
          _
      $region76: #{tpu_custom_call.1} parent=5 // pred_fallthru
        _
    $region6: #{tpu_custom_call.1} parent=1 // loop_footer
      %s29 = sadd.s32 1, %s25
    $region7: #{tpu_custom_call.1} parent=1 // loop_footer_branch
      %24 = sbr.rel target = $region3
    $region8: #{tpu_custom_call.1} parent=1 // loop_exit
      _
    %2980 = vsyncpa [#allocation3], 1
    %s2981 = scalar_lea.sflag [#allocation3], 1
    %2982 = vsyncpa %s2981, 1
    %2983 = vsyncpa [#allocation6], 1
    %2984 = vsyncpa [#allocation9], 1
    %2985 = vsyncpa [#allocation4], 1
    %s2986 = scalar_lea.sflag [#allocation4], 1
    %2987 = vsyncpa %s2986, 1
    %2988 = vsyncpa [#allocation13], 1
    %s2989 = scalar_lea.sflag [#allocation13], 1
    %2990 = vsyncpa %s2989, 1

// kernel: tpu_custom_call.1
$region0: #{tpu_custom_call.1}
  #allocation0 [shape = 'u32[]', space=smem, size = 0x4, offset = 0x4, fixed_abs, tag = 'smem constant byte address 0x4 - core index']
  #allocation1 [shape = 'u32[72,128]{1,0:T(1,128)}', space=vmem, size = 0x9000, scoped, tag = 'internal scratch']
  %s0 = inlined_call_operand.hbm [shape: f32[2,32,512], index: 0, kind: input, shape index: {}]
  %s1 = inlined_call_operand.hbm [shape: f32[1,512], index: 1, kind: input, shape index: {}]
  %s2 = inlined_call_operand.hbm [shape: bf16[512,1024], index: 2, kind: input, shape index: {}]
  %s3 = inlined_call_operand.hbm [shape: f32[32,128], index: 3, kind: input, shape index: {}]
  %s4 = inlined_call_operand.hbm [shape: f32[32,128], index: 4, kind: input, shape index: {}]
  %s5 = inlined_call_operand.hbm [shape: bf16[2,4,32,128], index: 5, kind: output, shape index: {0}]
  %s6 = inlined_call_operand.hbm [shape: bf16[2,2,32,128], index: 6, kind: output, shape index: {1}]
  %s7 = inlined_call_operand.hbm [shape: bf16[2,2,32,128], index: 7, kind: output, shape index: {2}]
  %8 = xla_tuple %s5, %s6, %s7
  %s9 = sld [smem:[#allocation0]]
  $region89: #{tpu_custom_call.1} parent=0
    _
  %s11 = ssub.s32 1, %s9
  %s12 = scalar_select 0, %s11, %s9
  $region1: #{tpu_custom_call.1} parent=0
    #allocation2 [shape = 'u8[131072]{0}', space=vmem, size = 0x20000, scoped, tag = 'input window, operand 0']
    #allocation3 [shape = 's32[2]{0}', space=sflag, size = 0x8, scoped, tag = 'scoped memory for tpu_custom_call.1']
    #allocation4 [shape = 's32[2]{0}', space=sflag, size = 0x8, scoped, tag = 'scoped memory for tpu_custom_call.1']
    #allocation5 [shape = 'u8[2048]{0}', space=vmem, size = 0x800, scoped, tag = 'input window, operand 1, single buffered']
    #allocation6 [shape = 's32[1]{0}', space=sflag, size = 0x4, scoped, tag = 'scoped memory for tpu_custom_call.1']
    #allocation7 [shape = 'u8[1048576]{0}', space=vmem, size = 0x100000, scoped, tag = 'input window, operand 2, single buffered']
    #allocation8 [shape = 'u8[16384]{0}', space=vmem, size = 0x4000, scoped, tag = 'input window, operand 3, single buffered']
    #allocation9 [shape = 's32[1]{0}', space=sflag, size = 0x4, scoped, tag = 'scoped memory for tpu_custom_call.1']
    #allocation10 [shape = 'u8[16384]{0}', space=vmem, size = 0x4000, scoped, tag = 'input window, operand 4, single buffered']
    #allocation11 [shape = 'u8[65536]{0}', space=vmem, size = 0x10000, scoped, tag = 'output window, operand 0']
    #allocation12 [shape = 'u8[32768]{0}', space=vmem, size = 0x8000, scoped, tag = 'output window, operand 1']
    #allocation13 [shape = 's32[2]{0}', space=sflag, size = 0x8, scoped, tag = 'scoped memory for tpu_custom_call.1']
    #allocation14 [shape = 'u8[32768]{0}', space=vmem, size = 0x8000, scoped, tag = 'output window, operand 2']
    %13 = vsyncpa [#allocation3], 0
    %s14 = scalar_lea.sflag [#allocation3], 1
    %15 = vsyncpa %s14, 0
    %16 = vsyncpa [#allocation6], 0
    %17 = vsyncpa [#allocation9], 0
    %18 = vsyncpa [#allocation4], 0
    %s19 = scalar_lea.sflag [#allocation4], 1
    %20 = vsyncpa %s19, 0
    %21 = vsyncpa [#allocation13], 0
    %s22 = scalar_lea.sflag [#allocation13], 1
    %23 = vsyncpa %s22, 0
    loop: start=0, step=1, limit=4
    $region2: #{tpu_custom_call.1} parent=1 // loop_pre_header
      _
    $region3: #{tpu_custom_call.1} parent=1 // loop_header
      %s25 = sphi 0, %s29
      %p26 = scmp.ge.s32.totalorder %s25, 4
      %s35 = sphi 0, %s37
      %s38 = sphi 0, %s35
      %s39 = sphi 0, %s38
      %s55 = sphi 0, %s39
      %s59 = sphi 0, %s59
      %s61 = sphi 0, %s59
      %s62 = sphi 0, %s61
      %s76 = sphi 0, %s62
      %s80 = sphi 0, %s80
      %s82 = sphi 0, %s80
      %s83 = sphi 0, %s82
      %s97 = sphi 0, %s83
      %s101 = sphi 0, %s101
      %s103 = sphi 0, %s101
      %s104 = sphi 0, %s103
      %s118 = sphi 0, %s104
      %s122 = sphi 0, %s122
      %s124 = sphi 0, %s122
      %s125 = sphi 0, %s124
      %s139 = sphi 0, %s125
      %s145 = sphi 0, %s147
      %s148 = sphi 0, %s145
      %s149 = sphi 0, %s148
      %s165 = sphi 0, %s149
      %s171 = sphi 0, %s173
      %s174 = sphi 0, %s171
      %s175 = sphi 0, %s174
      %s191 = sphi 0, %s175
      %s197 = sphi 0, %s199
      %s200 = sphi 0, %s197
      %s201 = sphi 0, %s200
      %s217 = sphi 0, %s201
    $region4: #{tpu_custom_call.1} parent=1 // loop_header_branch
      %28 = sbr.rel (%p26) target = $region8
    $region5: #{tpu_custom_call.1} parent=1 // loop_body
      %s30 = ssub.s32 %s25, 1
      %s31 = ssub.s32 %s25, 2
      %s32 = sadd.s32 %s25, 1
      %s33 = ssub.s32 %s25, %s32
      %p34 = scmp.eq.s32.totalorder %s33, 0
      %s36 = sadd.s32 %s35, 1
      %s37 = scalar_select %p34, %s35, %s36
      %p40 = pneg %p34
      %p41 = scmp.eq.s32.totalorder %s25, 1
      %p42 = por %p40, %p41
      %p43 = scmp.ne.s32.totalorder %s35, %s38
      %p44 = scmp.eq.s32.totalorder %s25, 0
      %p45 = por %p43, %p44
      %p46 = scmp.ne.s32.totalorder %s35, %s38
      %p47 = scmp.eq.s32.totalorder %s30, 1
      %p48 = por %p46, %p47
      %p49 = scmp.ne.s32.totalorder %s38, %s39
      %p50 = scmp.eq.s32.totalorder %s30, 0
      %p51 = por %p49, %p50
      %p52 = scmp.ne.s32.totalorder %s38, %s39
      %p53 = scmp.eq.s32.totalorder %s31, 1
      %p54 = por %p52, %p53
      %p56 = scmp.ne.s32.totalorder %s39, %s55
      %p57 = scmp.eq.s32.totalorder %s31, 0
      %p58 = por %p56, %p57
      %s60 = sadd.s32 %s59, 1
      %p63 = scmp.eq.s32.totalorder %s25, 1
      %p64 = scmp.ne.s32.totalorder %s59, %s61
      %p65 = scmp.eq.s32.totalorder %s25, 0
      %p66 = por %p64, %p65
      %p67 = scmp.ne.s32.totalorder %s59, %s61
      %p68 = scmp.eq.s32.totalorder %s30, 1
      %p69 = por %p67, %p68
      %p70 = scmp.ne.s32.totalorder %s61, %s62
      %p71 = scmp.eq.s32.totalorder %s30, 0
      %p72 = por %p70, %p71
      %p73 = scmp.ne.s32.totalorder %s61, %s62
      %p74 = scmp.eq.s32.totalorder %s31, 1
      %p75 = por %p73, %p74
      %p77 = scmp.ne.s32.totalorder %s62, %s76
      %p78 = scmp.eq.s32.totalorder %s31, 0
      %p79 = por %p77, %p78
      %s81 = sadd.s32 %s80, 1
      %p84 = scmp.eq.s32.totalorder %s25, 1
      %p85 = scmp.ne.s32.totalorder %s80, %s82
      %p86 = scmp.eq.s32.totalorder %s25, 0
      %p87 = por %p85, %p86
      %p88 = scmp.ne.s32.totalorder %s80, %s82
      %p89 = scmp.eq.s32.totalorder %s30, 1
      %p90 = por %p88, %p89
      %p91 = scmp.ne.s32.totalorder %s82, %s83
      %p92 = scmp.eq.s32.totalorder %s30, 0
      %p93 = por %p91, %p92
      %p94 = scmp.ne.s32.totalorder %s82, %s83
      %p95 = scmp.eq.s32.totalorder %s31, 1
      %p96 = por %p94, %p95
      %p98 = scmp.ne.s32.totalorder %s83, %s97
      %p99 = scmp.eq.s32.totalorder %s31, 0
      %p100 = por %p98, %p99
      %s102 = sadd.s32 %s101, 1
      %p105 = scmp.eq.s32.totalorder %s25, 1
      %p106 = scmp.ne.s32.totalorder %s101, %s103
      %p107 = scmp.eq.s32.totalorder %s25, 0
      %p108 = por %p106, %p107
      %p109 = scmp.ne.s32.totalorder %s101, %s103
      %p110 = scmp.eq.s32.totalorder %s30, 1
      %p111 = por %p109, %p110
      %p112 = scmp.ne.s32.totalorder %s103, %s104
      %p113 = scmp.eq.s32.totalorder %s30, 0
      %p114 = por %p112, %p113
      %p115 = scmp.ne.s32.totalorder %s103, %s104
      %p116 = scmp.eq.s32.totalorder %s31, 1
      %p117 = por %p115, %p116
      %p119 = scmp.ne.s32.totalorder %s104, %s118
      %p120 = scmp.eq.s32.totalorder %s31, 0
      %p121 = por %p119, %p120
      %s123 = sadd.s32 %s122, 1
      %p126 = scmp.eq.s32.totalorder %s25, 1
      %p127 = scmp.ne.s32.totalorder %s122, %s124
      %p128 = scmp.eq.s32.totalorder %s25, 0
      %p129 = por %p127, %p128
      %p130 = scmp.ne.s32.totalorder %s122, %s124
      %p131 = scmp.eq.s32.totalorder %s30, 1
      %p132 = por %p130, %p131
      %p133 = scmp.ne.s32.totalorder %s124, %s125
      %p134 = scmp.eq.s32.totalorder %s30, 0
      %p135 = por %p133, %p134
      %p136 = scmp.ne.s32.totalorder %s124, %s125
      %p137 = scmp.eq.s32.totalorder %s31, 1
      %p138 = por %p136, %p137
      %p140 = scmp.ne.s32.totalorder %s125, %s139
      %p141 = scmp.eq.s32.totalorder %s31, 0
      %p142 = por %p140, %p141
      %s143 = ssub.s32 %s25, %s32
      %p144 = scmp.eq.s32.totalorder %s143, 0
      %s146 = sadd.s32 %s145, 1
      %s147 = scalar_select %p144, %s145, %s146
      %p150 = pneg %p144
      %p151 = scmp.eq.s32.totalorder %s25, 1
      %p152 = por %p150, %p151
      %p153 = scmp.ne.s32.totalorder %s145, %s148
      %p154 = scmp.eq.s32.totalorder %s25, 0
      %p155 = por %p153, %p154
      %p156 = scmp.ne.s32.totalorder %s145, %s148
      %p157 = scmp.eq.s32.totalorder %s30, 1
      %p158 = por %p156, %p157
      %p159 = scmp.ne.s32.totalorder %s148, %s149
      %p160 = scmp.eq.s32.totalorder %s30, 0
      %p161 = por %p159, %p160
      %p162 = scmp.ne.s32.totalorder %s148, %s149
      %p163 = scmp.eq.s32.totalorder %s31, 1
      %p164 = por %p162, %p163
      %p166 = scmp.ne.s32.totalorder %s149, %s165
      %p167 = scmp.eq.s32.totalorder %s31, 0
      %p168 = por %p166, %p167
      %s169 = ssub.s32 %s25, %s32
      %p170 = scmp.eq.s32.totalorder %s169, 0
      %s172 = sadd.s32 %s171, 1
      %s173 = scalar_select %p170, %s171, %s172
      %p176 = pneg %p170
      %p177 = scmp.eq.s32.totalorder %s25, 1
      %p178 = por %p176, %p177
      %p179 = scmp.ne.s32.totalorder %s171, %s174
      %p180 = scmp.eq.s32.totalorder %s25, 0
      %p181 = por %p179, %p180
      %p182 = scmp.ne.s32.totalorder %s171, %s174
      %p183 = scmp.eq.s32.totalorder %s30, 1
      %p184 = por %p182, %p183
      %p185 = scmp.ne.s32.totalorder %s174, %s175
      %p186 = scmp.eq.s32.totalorder %s30, 0
      %p187 = por %p185, %p186
      %p188 = scmp.ne.s32.totalorder %s174, %s175
      %p189 = scmp.eq.s32.totalorder %s31, 1
      %p190 = por %p188, %p189
      %p192 = scmp.ne.s32.totalorder %s175, %s191
      %p193 = scmp.eq.s32.totalorder %s31, 0
      %p194 = por %p192, %p193
      %s195 = ssub.s32 %s25, %s32
      %p196 = scmp.eq.s32.totalorder %s195, 0
      %s198 = sadd.s32 %s197, 1
      %s199 = scalar_select %p196, %s197, %s198
      %p202 = pneg %p196
      %p203 = scmp.eq.s32.totalorder %s25, 1
      %p204 = por %p202, %p203
      %p205 = scmp.ne.s32.totalorder %s197, %s200
      %p206 = scmp.eq.s32.totalorder %s25, 0
      %p207 = por %p205, %p206
      %p208 = scmp.ne.s32.totalorder %s197, %s200
      %p209 = scmp.eq.s32.totalorder %s30, 1
      %p210 = por %p208, %p209
      %p211 = scmp.ne.s32.totalorder %s200, %s201
      %p212 = scmp.eq.s32.totalorder %s30, 0
      %p213 = por %p211, %p212
      %p214 = scmp.ne.s32.totalorder %s200, %s201
      %p215 = scmp.eq.s32.totalorder %s31, 1
      %p216 = por %p214, %p215
      %p218 = scmp.ne.s32.totalorder %s201, %s217
      %p219 = scmp.eq.s32.totalorder %s31, 0
      %p220 = por %p218, %p219
      %p221 = scmp.le.s32.totalorder 1, %s25
      %p222 = scmp.lt.s32.totalorder %s25, 3
      %p223 = pnand %p221, %p222
      %p224 = pneg %p223
      // Predicated region
      $region9: #{tpu_custom_call.1} parent=5 // pred_check
        _
      $region10: #{tpu_custom_call.1} parent=5 // pred_check_branch
        %226 = sbr.rel (%p223) target = $region12
      $region11: #{tpu_custom_call.1} parent=5 // pred_region
        %s227 = ssub.s32 %s25, 1
        // Predicated region
        $region13: #{tpu_custom_call.1} parent=11 // pred_check
          %p228 = pneg %p72
        $region14: #{tpu_custom_call.1} parent=11 // pred_check_branch
          %230 = sbr.rel (%p228) target = $region16
        $region15: #{tpu_custom_call.1} parent=11 // pred_region
          %232 = vsyncadd [#allocation6], 0
          %s234 = sshll.u32 %s1, 4
          %s235 = int_to_ptr.hbm [resolvable:$true] %s234
          %s236 = sshll.u32 [#allocation5], 4
          %s237 = int_to_ptr.vmem [resolvable:$true] %s236
          %239 = dma.hbm_to_vmem [thread:$0]  %s235, 64, %s237, [#allocation6]
        $region16: #{tpu_custom_call.1} parent=11 // pred_fallthru
          _
        // Predicated region
        $region17: #{tpu_custom_call.1} parent=11 // pred_check
          %p240 = pneg %p93
        $region18: #{tpu_custom_call.1} parent=11 // pred_check_branch
          %242 = sbr.rel (%p240) target = $region20
        $region19: #{tpu_custom_call.1} parent=11 // pred_region
          %244 = vsyncadd [#allocation6], 0
          %s245 = sshll.u32 %s2, 4
          %s246 = int_to_ptr.hbm [resolvable:$true] %s245
          %s247 = sshll.u32 [#allocation7], 4
          %s248 = int_to_ptr.vmem [resolvable:$true] %s247
          %253 = dma.hbm_to_vmem [thread:$0]  %s246, 32768, %s248, [#allocation6], 512, 512, 32
        $region20: #{tpu_custom_call.1} parent=11 // pred_fallthru
          _
        // Predicated region
        $region21: #{tpu_custom_call.1} parent=11 // pred_check
          %p254 = pneg %p114
        $region22: #{tpu_custom_call.1} parent=11 // pred_check_branch
          %256 = sbr.rel (%p254) target = $region24
        $region23: #{tpu_custom_call.1} parent=11 // pred_region
          %258 = vsyncadd [#allocation9], 0
          %s259 = sshll.u32 %s3, 4
          %s260 = int_to_ptr.hbm [resolvable:$true] %s259
          %s261 = sshll.u32 [#allocation8], 4
          %s262 = int_to_ptr.vmem [resolvable:$true] %s261
          %267 = dma.hbm_to_vmem [thread:$0]  %s260, 512, %s262, [#allocation9], 128, 128, 8
        $region24: #{tpu_custom_call.1} parent=11 // pred_fallthru
          _
        // Predicated region
        $region25: #{tpu_custom_call.1} parent=11 // pred_check
          %p268 = pneg %p135
        $region26: #{tpu_custom_call.1} parent=11 // pred_check_branch
          %270 = sbr.rel (%p268) target = $region28
        $region27: #{tpu_custom_call.1} parent=11 // pred_region
          %272 = vsyncadd [#allocation9], 0
          %s273 = sshll.u32 %s4, 4
          %s274 = int_to_ptr.hbm [resolvable:$true] %s273
          %s275 = sshll.u32 [#allocation10], 4
          %s276 = int_to_ptr.vmem [resolvable:$true] %s275
          %281 = dma.hbm_to_vmem [thread:$0]  %s274, 512, %s276, [#allocation9], 128, 128, 8
        $region28: #{tpu_custom_call.1} parent=11 // pred_fallthru
          _
      $region12: #{tpu_custom_call.1} parent=5 // pred_fallthru
        _
      %p282 = scmp.lt.s32.totalorder %s25, 2
      // Predicated region
      $region29: #{tpu_custom_call.1} parent=5 // pred_check
        %p283 = pneg %p282
      $region30: #{tpu_custom_call.1} parent=5 // pred_check_branch
        %285 = sbr.rel (%p283) target = $region32
      $region31: #{tpu_custom_call.1} parent=5 // pred_region
        // Predicated region
        $region33: #{tpu_custom_call.1} parent=31 // pred_check
          %p286 = pneg %p45
        $region34: #{tpu_custom_call.1} parent=31 // pred_check_branch
          %288 = sbr.rel (%p286) target = $region36
        $region35: #{tpu_custom_call.1} parent=31 // pred_region
          %s289 = sand.u32 %s35, 1
          %s290 = scalar_lea.sflag [#allocation3], %s289
          %s291 = sand.u32 %s35, 1
          %s292 = smul.addr %s291, 128
          %s293 = scalar_lea.vmem [#allocation2], %s292
          %295 = vsyncadd %s290, 0
          %s296 = smul.addr %s25, 16
          %s297 = smul.addr %s296, 8
          %s298 = scalar_lea.hbm %s0, %s297
          %s299 = sshll.u32 %s298, 4
          %s300 = int_to_ptr.hbm [resolvable:$true] %s299
          %s301 = sshll.u32 %s293, 4
          %s302 = int_to_ptr.vmem [resolvable:$true] %s301
          %307 = dma.hbm_to_vmem [thread:$0]  %s300, 2048, %s302, %s290, 512, 512, 32
        $region36: #{tpu_custom_call.1} parent=31 // pred_fallthru
          _
      $region32: #{tpu_custom_call.1} parent=5 // pred_fallthru
        _
      %p308 = scmp.le.s32.totalorder 1, %s25
      %p309 = scmp.lt.s32.totalorder %s25, 3
      %p310 = pnand %p308, %p309
      %p311 = pneg %p310
      // Predicated region
      $region37: #{tpu_custom_call.1} parent=5 // pred_check
        _
      $region38: #{tpu_custom_call.1} parent=5 // pred_check_branch
        %313 = sbr.rel (%p310) target = $region40
      $region39: #{tpu_custom_call.1} parent=5 // pred_region
        %s314 = ssub.s32 %s25, 1
        %s315 = sand.u32 %s38, 1
        %s316 = scalar_lea.sflag [#allocation3], %s315
        %s317 = sand.u32 %s38, 1
        %s318 = smul.addr %s317, 128
        %s319 = scalar_lea.vmem [#allocation2], %s318
        // Predicated region
        $region41: #{tpu_custom_call.1} parent=39 // pred_check
          %p320 = pneg %p51
        $region42: #{tpu_custom_call.1} parent=39 // pred_check_branch
          %322 = sbr.rel (%p320) target = $region44
        $region43: #{tpu_custom_call.1} parent=39 // pred_region
          %324 = dma.done %s316, 2048
        $region44: #{tpu_custom_call.1} parent=39 // pred_fallthru
          _
        // Predicated region
        $region45: #{tpu_custom_call.1} parent=39 // pred_check
          %p325 = pneg %p72
        $region46: #{tpu_custom_call.1} parent=39 // pred_check_branch
          %327 = sbr.rel (%p325) target = $region48
        $region47: #{tpu_custom_call.1} parent=39 // pred_region
          %329 = dma.done [#allocation6], 64
        $region48: #{tpu_custom_call.1} parent=39 // pred_fallthru
          _
        // Predicated region
        $region49: #{tpu_custom_call.1} parent=39 // pred_check
          %p330 = pneg %p93
        $region50: #{tpu_custom_call.1} parent=39 // pred_check_branch
          %332 = sbr.rel (%p330) target = $region52
        $region51: #{tpu_custom_call.1} parent=39 // pred_region
          %334 = dma.done [#allocation6], 32768
        $region52: #{tpu_custom_call.1} parent=39 // pred_fallthru
          _
        // Predicated region
        $region53: #{tpu_custom_call.1} parent=39 // pred_check
          %p335 = pneg %p114
        $region54: #{tpu_custom_call.1} parent=39 // pred_check_branch
          %337 = sbr.rel (%p335) target = $region56
        $region55: #{tpu_custom_call.1} parent=39 // pred_region
          %339 = dma.done [#allocation9], 512
        $region56: #{tpu_custom_call.1} parent=39 // pred_fallthru
          _
        // Predicated region
        $region57: #{tpu_custom_call.1} parent=39 // pred_check
          %p340 = pneg %p135
        $region58: #{tpu_custom_call.1} parent=39 // pred_check_branch
          %342 = sbr.rel (%p340) target = $region60
        $region59: #{tpu_custom_call.1} parent=39 // pred_region
          %344 = dma.done [#allocation9], 512
        $region60: #{tpu_custom_call.1} parent=39 // pred_fallthru
          _
        %s345 = sand.u32 %s38, 1
        %s346 = scalar_lea.sflag [#allocation3], %s345
        %s347 = sand.u32 %s38, 1
        %s348 = smul.addr %s347, 128
        %s349 = scalar_lea.vmem [#allocation2], %s348
        %p350 = pneg %p51
        %p351 = pneg %p48
        %p352 = pneg %p72
        %p353 = pneg %p69
        %p354 = pneg %p93
        %p355 = pneg %p90
        %p356 = pneg %p114
        %p357 = pneg %p111
        %p358 = pneg %p135
        %p359 = pneg %p132
        %p360 = pneg %p161
        %p361 = pneg %p158
        %s362 = sand.u32 %s148, 1
        %s363 = scalar_lea.sflag [#allocation4], %s362
        %s364 = sand.u32 %s148, 1
        %s365 = smul.addr %s364, 64
        %s366 = scalar_lea.vmem [#allocation11], %s365
        %p367 = pneg %p187
        %p368 = pneg %p184
        %s369 = sand.u32 %s30, 1
        %s370 = scalar_lea.sflag [#allocation13], %s369
        %s371 = sand.u32 %s174, 1
        %s372 = smul.addr %s371, 32
        %s373 = scalar_lea.vmem [#allocation12], %s372
        %p374 = pneg %p213
        %p375 = pneg %p210
        %s376 = sand.u32 %s30, 1
        %s377 = scalar_lea.sflag [#allocation13], %s376
        %s378 = sand.u32 %s200, 1
        %s379 = smul.addr %s378, 32
        %s380 = scalar_lea.vmem [#allocation14], %s379
        %v381 = vld [vmem:[%s319] sm:$0xff]
        %v382 = vld [vmem:[%s319 + $0x8] sm:$0xff]
        %v383 = vld [vmem:[%s319 + $0x10] sm:$0xff]
        %v384 = vld [vmem:[%s319 + $0x18] sm:$0xff]
        %v385 = vld [vmem:[%s319 + $0x20] sm:$0xff]
        %v386 = vld [vmem:[%s319 + $0x28] sm:$0xff]
        %v387 = vld [vmem:[%s319 + $0x30] sm:$0xff]
        %v388 = vld [vmem:[%s319 + $0x38] sm:$0xff]
        %v389 = vld [vmem:[%s319 + $0x40] sm:$0xff]
        %v390 = vld [vmem:[%s319 + $0x48] sm:$0xff]
        %v391 = vld [vmem:[%s319 + $0x50] sm:$0xff]
        %v392 = vld [vmem:[%s319 + $0x58] sm:$0xff]
        %v393 = vld [vmem:[%s319 + $0x60] sm:$0xff]
        %v394 = vld [vmem:[%s319 + $0x68] sm:$0xff]
        %v395 = vld [vmem:[%s319 + $0x70] sm:$0xff]
        %v396 = vld [vmem:[%s319 + $0x78] sm:$0xff]
        %v397 = vmul.f32 %v381, %v381
        %v398 = vmul.f32 %v382, %v382
        %v399 = vmul.f32 %v383, %v383
        %v400 = vmul.f32 %v384, %v384
        %v401 = vmul.f32 %v385, %v385
        %v402 = vmul.f32 %v386, %v386
        %v403 = vmul.f32 %v387, %v387
        %v404 = vmul.f32 %v388, %v388
        %v405 = vmul.f32 %v389, %v389
        %v406 = vmul.f32 %v390, %v390
        %v407 = vmul.f32 %v391, %v391
        %v408 = vmul.f32 %v392, %v392
        %v409 = vmul.f32 %v393, %v393
        %v410 = vmul.f32 %v394, %v394
        %v411 = vmul.f32 %v395, %v395
        %v412 = vmul.f32 %v396, %v396
        %v413 = vadd.f32 %v397, %v398
        %v414 = vadd.f32 %v413, %v399
        %v415 = vadd.f32 %v414, %v400
        %416 = vadd.xlane.f32.xlu0 %v415
        %v417 = vpop.xlane.xlu0 %416
        %v418 = vadd.f32 %v401, %v402
        %v419 = vadd.f32 %v418, %v403
        %v420 = vadd.f32 %v419, %v404
        %421 = vadd.xlane.f32.xlu0 %v420
        %v422 = vpop.xlane.xlu0 %421
        %v423 = vadd.f32 %v405, %v406
        %v424 = vadd.f32 %v423, %v407
        %v425 = vadd.f32 %v424, %v408
        %426 = vadd.xlane.f32.xlu0 %v425
        %v427 = vpop.xlane.xlu0 %426
        %v428 = vadd.f32 %v409, %v410
        %v429 = vadd.f32 %v428, %v411
        %v430 = vadd.f32 %v429, %v412
        %431 = vadd.xlane.f32.xlu0 %v430
        %v432 = vpop.xlane.xlu0 %431
        %v433 = vrcp.pop 512.0
        %v434 = vmul.f32 512.0, %v433
        %v435 = vsub.f32 1.0, %v434
        %v436 = vmul.f32 %v433, %v435
        %v437 = vadd.f32 %v433, %v436
        %vm438 = vweird.f32 %v433
        %v439 = vsel %vm438, %v433, %v437
        %v440 = vmul.f32 %v417, %v439
        %v441 = vmul.f32 %v422, %v439
        %v442 = vmul.f32 %v427, %v439
        %v443 = vmul.f32 %v432, %v439
        %v444 = vadd.f32 %v440, 1e-05
        %v445 = vadd.f32 %v441, 1e-05
        %v446 = vadd.f32 %v442, 1e-05
        %v447 = vadd.f32 %v443, 1e-05
        %v448 = vrsqrt.pop %v444
        %v449 = vmul.f32 %v448, %v444
        %v450 = vmul.f32 %v449, %v448
        %v451 = vmul.f32 0.5, %v450
        %v452 = vsub.f32 1.5, %v451
        %v453 = vmul.f32 %v448, %v452
        %vm454 = vweird.f32 %v444
        %vm455 = vweird.f32 %v448
        %vm456 = vmor %vm454, %vm455
        %v457 = vsel %vm456, %v448, %v453
        %v458 = vrsqrt.pop %v445
        %v459 = vmul.f32 %v458, %v445
        %v460 = vmul.f32 %v459, %v458
        %v461 = vmul.f32 0.5, %v460
        %v462 = vsub.f32 1.5, %v461
        %v463 = vmul.f32 %v458, %v462
        %vm464 = vweird.f32 %v445
        %vm465 = vweird.f32 %v458
        %vm466 = vmor %vm464, %vm465
        %v467 = vsel %vm466, %v458, %v463
        %v468 = vrsqrt.pop %v446
        %v469 = vmul.f32 %v468, %v446
        %v470 = vmul.f32 %v469, %v468
        %v471 = vmul.f32 0.5, %v470
        %v472 = vsub.f32 1.5, %v471
        %v473 = vmul.f32 %v468, %v472
        %vm474 = vweird.f32 %v446
        %vm475 = vweird.f32 %v468
        %vm476 = vmor %vm474, %vm475
        %v477 = vsel %vm476, %v468, %v473
        %v478 = vrsqrt.pop %v447
        %v479 = vmul.f32 %v478, %v447
        %v480 = vmul.f32 %v479, %v478
        %v481 = vmul.f32 0.5, %v480
        %v482 = vsub.f32 1.5, %v481
        %v483 = vmul.f32 %v478, %v482
        %vm484 = vweird.f32 %v447
        %vm485 = vweird.f32 %v478
        %vm486 = vmor %vm484, %vm485
        %v487 = vsel %vm486, %v478, %v483
        %v488 = vmul.f32 %v381, %v457
        %v489 = vmul.f32 %v382, %v457
        %v490 = vmul.f32 %v383, %v457
        %v491 = vmul.f32 %v384, %v457
        %v492 = vmul.f32 %v385, %v467
        %v493 = vmul.f32 %v386, %v467
        %v494 = vmul.f32 %v387, %v467
        %v495 = vmul.f32 %v388, %v467
        %v496 = vmul.f32 %v389, %v477
        %v497 = vmul.f32 %v390, %v477
        %v498 = vmul.f32 %v391, %v477
        %v499 = vmul.f32 %v392, %v477
        %v500 = vmul.f32 %v393, %v487
        %v501 = vmul.f32 %v394, %v487
        %v502 = vmul.f32 %v395, %v487
        %v503 = vmul.f32 %v396, %v487
        %v504 = vld [vmem:[#allocation5] sm:$0xf]
        %v506 = vperm.slane %v504, 0
        %v507 = vperm.slane %v504, 1
        %v508 = vperm.slane %v504, 2
        %v509 = vperm.slane %v504, 3
        %v514 = vmul.f32 %v488, %v506
        %v515 = vmul.f32 %v489, %v507
        %v516 = vmul.f32 %v490, %v508
        %v517 = vmul.f32 %v491, %v509
        %v518 = vmul.f32 %v492, %v506
        %v519 = vmul.f32 %v493, %v507
        %v520 = vmul.f32 %v494, %v508
        %v521 = vmul.f32 %v495, %v509
        %v522 = vmul.f32 %v496, %v506
        %v523 = vmul.f32 %v497, %v507
        %v524 = vmul.f32 %v498, %v508
        %v525 = vmul.f32 %v499, %v509
        %v526 = vmul.f32 %v500, %v506
        %v527 = vmul.f32 %v501, %v507
        %v528 = vmul.f32 %v502, %v508
        %v529 = vmul.f32 %v503, %v509
        %v530 = vpack.c.bf16 %v518, %v514
        %v531 = vpack.c.bf16 %v519, %v515
        %v532 = vpack.c.bf16 %v520, %v516
        %v533 = vpack.c.bf16 %v521, %v517
        %v534 = vpack.c.bf16 %v526, %v522
        %v535 = vpack.c.bf16 %v527, %v523
        %v536 = vpack.c.bf16 %v528, %v524
        %v537 = vpack.c.bf16 %v529, %v525
        %v538 = vld [vmem:[#allocation7] sm:$0xff]
        %v539 = vld [vmem:[#allocation7 + $0x8] sm:$0xff]
        %v540 = vld [vmem:[#allocation7 + $0x10] sm:$0xff]
        %v541 = vld [vmem:[#allocation7 + $0x18] sm:$0xff]
        %v542 = vld [vmem:[#allocation7 + $0x20] sm:$0xff]
        %v543 = vld [vmem:[#allocation7 + $0x28] sm:$0xff]
        %v544 = vld [vmem:[#allocation7 + $0x30] sm:$0xff]
        %v545 = vld [vmem:[#allocation7 + $0x38] sm:$0xff]
        %v546 = vld [vmem:[#allocation7 + $0x40] sm:$0xff]
        %v547 = vld [vmem:[#allocation7 + $0x48] sm:$0xff]
        %v548 = vld [vmem:[#allocation7 + $0x50] sm:$0xff]
        %v549 = vld [vmem:[#allocation7 + $0x58] sm:$0xff]
        %v550 = vld [vmem:[#allocation7 + $0x60] sm:$0xff]
        %v551 = vld [vmem:[#allocation7 + $0x68] sm:$0xff]
        %v552 = vld [vmem:[#allocation7 + $0x70] sm:$0xff]
        %v553 = vld [vmem:[#allocation7 + $0x78] sm:$0xff]
        %v554 = vld [vmem:[#allocation7 + $0x80] sm:$0xff]
        %v555 = vld [vmem:[#allocation7 + $0x88] sm:$0xff]
        %v556 = vld [vmem:[#allocation7 + $0x90] sm:$0xff]
        %v557 = vld [vmem:[#allocation7 + $0x98] sm:$0xff]
        %v558 = vld [vmem:[#allocation7 + $0xa0] sm:$0xff]
        %v559 = vld [vmem:[#allocation7 + $0xa8] sm:$0xff]
        %v560 = vld [vmem:[#allocation7 + $0xb0] sm:$0xff]
        %v561 = vld [vmem:[#allocation7 + $0xb8] sm:$0xff]
        %v562 = vld [vmem:[#allocation7 + $0xc0] sm:$0xff]
        %v563 = vld [vmem:[#allocation7 + $0xc8] sm:$0xff]
        %v564 = vld [vmem:[#allocation7 + $0xd0] sm:$0xff]
        %v565 = vld [vmem:[#allocation7 + $0xd8] sm:$0xff]
        %v566 = vld [vmem:[#allocation7 + $0xe0] sm:$0xff]
        %v567 = vld [vmem:[#allocation7 + $0xe8] sm:$0xff]
        %v568 = vld [vmem:[#allocation7 + $0xf0] sm:$0xff]
        %v569 = vld [vmem:[#allocation7 + $0xf8] sm:$0xff]
        %v570 = vld [vmem:[#allocation7 + $0x100] sm:$0xff]
        %v571 = vld [vmem:[#allocation7 + $0x108] sm:$0xff]
        %v572 = vld [vmem:[#allocation7 + $0x110] sm:$0xff]
        %v573 = vld [vmem:[#allocation7 + $0x118] sm:$0xff]
        %v574 = vld [vmem:[#allocation7 + $0x120] sm:$0xff]
        %v575 = vld [vmem:[#allocation7 + $0x128] sm:$0xff]
        %v576 = vld [vmem:[#allocation7 + $0x130] sm:$0xff]
        %v577 = vld [vmem:[#allocation7 + $0x138] sm:$0xff]
        %v578 = vld [vmem:[#allocation7 + $0x140] sm:$0xff]
        %v579 = vld [vmem:[#allocation7 + $0x148] sm:$0xff]
        %v580 = vld [vmem:[#allocation7 + $0x150] sm:$0xff]
        %v581 = vld [vmem:[#allocation7 + $0x158] sm:$0xff]
        %v582 = vld [vmem:[#allocation7 + $0x160] sm:$0xff]
        %v583 = vld [vmem:[#allocation7 + $0x168] sm:$0xff]
        %v584 = vld [vmem:[#allocation7 + $0x170] sm:$0xff]
        %v585 = vld [vmem:[#allocation7 + $0x178] sm:$0xff]
        %v586 = vld [vmem:[#allocation7 + $0x180] sm:$0xff]
        %v587 = vld [vmem:[#allocation7 + $0x188] sm:$0xff]
        %v588 = vld [vmem:[#allocation7 + $0x190] sm:$0xff]
        %v589 = vld [vmem:[#allocation7 + $0x198] sm:$0xff]
        %v590 = vld [vmem:[#allocation7 + $0x1a0] sm:$0xff]
        %v591 = vld [vmem:[#allocation7 + $0x1a8] sm:$0xff]
        %v592 = vld [vmem:[#allocation7 + $0x1b0] sm:$0xff]
        %v593 = vld [vmem:[#allocation7 + $0x1b8] sm:$0xff]
        %v594 = vld [vmem:[#allocation7 + $0x1c0] sm:$0xff]
        %v595 = vld [vmem:[#allocation7 + $0x1c8] sm:$0xff]
        %v596 = vld [vmem:[#allocation7 + $0x1d0] sm:$0xff]
        %v597 = vld [vmem:[#allocation7 + $0x1d8] sm:$0xff]
        %v598 = vld [vmem:[#allocation7 + $0x1e0] sm:$0xff]
        %v599 = vld [vmem:[#allocation7 + $0x1e8] sm:$0xff]
        %v600 = vld [vmem:[#allocation7 + $0x1f0] sm:$0xff]
        %v601 = vld [vmem:[#allocation7 + $0x1f8] sm:$0xff]
        %v602 = vld [vmem:[#allocation7 + $0x200] sm:$0xff]
        %v603 = vld [vmem:[#allocation7 + $0x208] sm:$0xff]
        %v604 = vld [vmem:[#allocation7 + $0x210] sm:$0xff]
        %v605 = vld [vmem:[#allocation7 + $0x218] sm:$0xff]
        %v606 = vld [vmem:[#allocation7 + $0x220] sm:$0xff]
        %v607 = vld [vmem:[#allocation7 + $0x228] sm:$0xff]
        %v608 = vld [vmem:[#allocation7 + $0x230] sm:$0xff]
        %v609 = vld [vmem:[#allocation7 + $0x238] sm:$0xff]
        %v610 = vld [vmem:[#allocation7 + $0x240] sm:$0xff]
        %v611 = vld [vmem:[#allocation7 + $0x248] sm:$0xff]
        %v612 = vld [vmem:[#allocation7 + $0x250] sm:$0xff]
        %v613 = vld [vmem:[#allocation7 + $0x258] sm:$0xff]
        %v614 = vld [vmem:[#allocation7 + $0x260] sm:$0xff]
        %v615 = vld [vmem:[#allocation7 + $0x268] sm:$0xff]
        %v616 = vld [vmem:[#allocation7 + $0x270] sm:$0xff]
        %v617 = vld [vmem:[#allocation7 + $0x278] sm:$0xff]
        %v618 = vld [vmem:[#allocation7 + $0x280] sm:$0xff]
        %v619 = vld [vmem:[#allocation7 + $0x288] sm:$0xff]
        %v620 = vld [vmem:[#allocation7 + $0x290] sm:$0xff]
        %v621 = vld [vmem:[#allocation7 + $0x298] sm:$0xff]
        %v622 = vld [vmem:[#allocation7 + $0x2a0] sm:$0xff]
        %v623 = vld [vmem:[#allocation7 + $0x2a8] sm:$0xff]
        %v624 = vld [vmem:[#allocation7 + $0x2b0] sm:$0xff]
        %v625 = vld [vmem:[#allocation7 + $0x2b8] sm:$0xff]
        %v626 = vld [vmem:[#allocation7 + $0x2c0] sm:$0xff]
        %v627 = vld [vmem:[#allocation7 + $0x2c8] sm:$0xff]
        %v628 = vld [vmem:[#allocation7 + $0x2d0] sm:$0xff]
        %v629 = vld [vmem:[#allocation7 + $0x2d8] sm:$0xff]
        %v630 = vld [vmem:[#allocation7 + $0x2e0] sm:$0xff]
        %v631 = vld [vmem:[#allocation7 + $0x2e8] sm:$0xff]
        %v632 = vld [vmem:[#allocation7 + $0x2f0] sm:$0xff]
        %v633 = vld [vmem:[#allocation7 + $0x2f8] sm:$0xff]
        %v634 = vld [vmem:[#allocation7 + $0x300] sm:$0xff]
        %v635 = vld [vmem:[#allocation7 + $0x308] sm:$0xff]
        %v636 = vld [vmem:[#allocation7 + $0x310] sm:$0xff]
        %v637 = vld [vmem:[#allocation7 + $0x318] sm:$0xff]
        %v638 = vld [vmem:[#allocation7 + $0x320] sm:$0xff]
        %v639 = vld [vmem:[#allocation7 + $0x328] sm:$0xff]
        %v640 = vld [vmem:[#allocation7 + $0x330] sm:$0xff]
        %v641 = vld [vmem:[#allocation7 + $0x338] sm:$0xff]
        %v642 = vld [vmem:[#allocation7 + $0x340] sm:$0xff]
        %v643 = vld [vmem:[#allocation7 + $0x348] sm:$0xff]
        %v644 = vld [vmem:[#allocation7 + $0x350] sm:$0xff]
        %v645 = vld [vmem:[#allocation7 + $0x358] sm:$0xff]
        %v646 = vld [vmem:[#allocation7 + $0x360] sm:$0xff]
        %v647 = vld [vmem:[#allocation7 + $0x368] sm:$0xff]
        %v648 = vld [vmem:[#allocation7 + $0x370] sm:$0xff]
        %v649 = vld [vmem:[#allocation7 + $0x378] sm:$0xff]
        %v650 = vld [vmem:[#allocation7 + $0x380] sm:$0xff]
        %v651 = vld [vmem:[#allocation7 + $0x388] sm:$0xff]
        %v652 = vld [vmem:[#allocation7 + $0x390] sm:$0xff]
        %v653 = vld [vmem:[#allocation7 + $0x398] sm:$0xff]
        %v654 = vld [vmem:[#allocation7 + $0x3a0] sm:$0xff]
        %v655 = vld [vmem:[#allocation7 + $0x3a8] sm:$0xff]
        %v656 = vld [vmem:[#allocation7 + $0x3b0] sm:$0xff]
        %v657 = vld [vmem:[#allocation7 + $0x3b8] sm:$0xff]
        %v658 = vld [vmem:[#allocation7 + $0x3c0] sm:$0xff]
        %v659 = vld [vmem:[#allocation7 + $0x3c8] sm:$0xff]
        %v660 = vld [vmem:[#allocation7 + $0x3d0] sm:$0xff]
        %v661 = vld [vmem:[#allocation7 + $0x3d8] sm:$0xff]
        %v662 = vld [vmem:[#allocation7 + $0x3e0] sm:$0xff]
        %v663 = vld [vmem:[#allocation7 + $0x3e8] sm:$0xff]
        %v664 = vld [vmem:[#allocation7 + $0x3f0] sm:$0xff]
        %v665 = vld [vmem:[#allocation7 + $0x3f8] sm:$0xff]
        %v666 = vld [vmem:[#allocation7 + $0x400] sm:$0xff]
        %v667 = vld [vmem:[#allocation7 + $0x408] sm:$0xff]
        %v668 = vld [vmem:[#allocation7 + $0x410] sm:$0xff]
        %v669 = vld [vmem:[#allocation7 + $0x418] sm:$0xff]
        %v670 = vld [vmem:[#allocation7 + $0x420] sm:$0xff]
        %v671 = vld [vmem:[#allocation7 + $0x428] sm:$0xff]
        %v672 = vld [vmem:[#allocation7 + $0x430] sm:$0xff]
        %v673 = vld [vmem:[#allocation7 + $0x438] sm:$0xff]
        %v674 = vld [vmem:[#allocation7 + $0x440] sm:$0xff]
        %v675 = vld [vmem:[#allocation7 + $0x448] sm:$0xff]
        %v676 = vld [vmem:[#allocation7 + $0x450] sm:$0xff]
        %v677 = vld [vmem:[#allocation7 + $0x458] sm:$0xff]
        %v678 = vld [vmem:[#allocation7 + $0x460] sm:$0xff]
        %v679 = vld [vmem:[#allocation7 + $0x468] sm:$0xff]
        %v680 = vld [vmem:[#allocation7 + $0x470] sm:$0xff]
        %v681 = vld [vmem:[#allocation7 + $0x478] sm:$0xff]
        %v682 = vld [vmem:[#allocation7 + $0x480] sm:$0xff]
        %v683 = vld [vmem:[#allocation7 + $0x488] sm:$0xff]
        %v684 = vld [vmem:[#allocation7 + $0x490] sm:$0xff]
        %v685 = vld [vmem:[#allocation7 + $0x498] sm:$0xff]
        %v686 = vld [vmem:[#allocation7 + $0x4a0] sm:$0xff]
        %v687 = vld [vmem:[#allocation7 + $0x4a8] sm:$0xff]
        %v688 = vld [vmem:[#allocation7 + $0x4b0] sm:$0xff]
        %v689 = vld [vmem:[#allocation7 + $0x4b8] sm:$0xff]
        %v690 = vld [vmem:[#allocation7 + $0x4c0] sm:$0xff]
        %v691 = vld [vmem:[#allocation7 + $0x4c8] sm:$0xff]
        %v692 = vld [vmem:[#allocation7 + $0x4d0] sm:$0xff]
        %v693 = vld [vmem:[#allocation7 + $0x4d8] sm:$0xff]
        %v694 = vld [vmem:[#allocation7 + $0x4e0] sm:$0xff]
        %v695 = vld [vmem:[#allocation7 + $0x4e8] sm:$0xff]
        %v696 = vld [vmem:[#allocation7 + $0x4f0] sm:$0xff]
        %v697 = vld [vmem:[#allocation7 + $0x4f8] sm:$0xff]
        %v698 = vld [vmem:[#allocation7 + $0x500] sm:$0xff]
        %v699 = vld [vmem:[#allocation7 + $0x508] sm:$0xff]
        %v700 = vld [vmem:[#allocation7 + $0x510] sm:$0xff]
        %v701 = vld [vmem:[#allocation7 + $0x518] sm:$0xff]
        %v702 = vld [vmem:[#allocation7 + $0x520] sm:$0xff]
        %v703 = vld [vmem:[#allocation7 + $0x528] sm:$0xff]
        %v704 = vld [vmem:[#allocation7 + $0x530] sm:$0xff]
        %v705 = vld [vmem:[#allocation7 + $0x538] sm:$0xff]
        %v706 = vld [vmem:[#allocation7 + $0x540] sm:$0xff]
        %v707 = vld [vmem:[#allocation7 + $0x548] sm:$0xff]
        %v708 = vld [vmem:[#allocation7 + $0x550] sm:$0xff]
        %v709 = vld [vmem:[#allocation7 + $0x558] sm:$0xff]
        %v710 = vld [vmem:[#allocation7 + $0x560] sm:$0xff]
        %v711 = vld [vmem:[#allocation7 + $0x568] sm:$0xff]
        %v712 = vld [vmem:[#allocation7 + $0x570] sm:$0xff]
        %v713 = vld [vmem:[#allocation7 + $0x578] sm:$0xff]
        %v714 = vld [vmem:[#allocation7 + $0x580] sm:$0xff]
        %v715 = vld [vmem:[#allocation7 + $0x588] sm:$0xff]
        %v716 = vld [vmem:[#allocation7 + $0x590] sm:$0xff]
        %v717 = vld [vmem:[#allocation7 + $0x598] sm:$0xff]
        %v718 = vld [vmem:[#allocation7 + $0x5a0] sm:$0xff]
        %v719 = vld [vmem:[#allocation7 + $0x5a8] sm:$0xff]
        %v720 = vld [vmem:[#allocation7 + $0x5b0] sm:$0xff]
        %v721 = vld [vmem:[#allocation7 + $0x5b8] sm:$0xff]
        %v722 = vld [vmem:[#allocation7 + $0x5c0] sm:$0xff]
        %v723 = vld [vmem:[#allocation7 + $0x5c8] sm:$0xff]
        %v724 = vld [vmem:[#allocation7 + $0x5d0] sm:$0xff]
        %v725 = vld [vmem:[#allocation7 + $0x5d8] sm:$0xff]
        %v726 = vld [vmem:[#allocation7 + $0x5e0] sm:$0xff]
        %v727 = vld [vmem:[#allocation7 + $0x5e8] sm:$0xff]
        %v728 = vld [vmem:[#allocation7 + $0x5f0] sm:$0xff]
        %v729 = vld [vmem:[#allocation7 + $0x5f8] sm:$0xff]
        %v730 = vld [vmem:[#allocation7 + $0x600] sm:$0xff]
        %v731 = vld [vmem:[#allocation7 + $0x608] sm:$0xff]
        %v732 = vld [vmem:[#allocation7 + $0x610] sm:$0xff]
        %v733 = vld [vmem:[#allocation7 + $0x618] sm:$0xff]
        %v734 = vld [vmem:[#allocation7 + $0x620] sm:$0xff]
        %v735 = vld [vmem:[#allocation7 + $0x628] sm:$0xff]
        %v736 = vld [vmem:[#allocation7 + $0x630] sm:$0xff]
        %v737 = vld [vmem:[#allocation7 + $0x638] sm:$0xff]
        %v738 = vld [vmem:[#allocation7 + $0x640] sm:$0xff]
        %v739 = vld [vmem:[#allocation7 + $0x648] sm:$0xff]
        %v740 = vld [vmem:[#allocation7 + $0x650] sm:$0xff]
        %v741 = vld [vmem:[#allocation7 + $0x658] sm:$0xff]
        %v742 = vld [vmem:[#allocation7 + $0x660] sm:$0xff]
        %v743 = vld [vmem:[#allocation7 + $0x668] sm:$0xff]
        %v744 = vld [vmem:[#allocation7 + $0x670] sm:$0xff]
        %v745 = vld [vmem:[#allocation7 + $0x678] sm:$0xff]
        %v746 = vld [vmem:[#allocation7 + $0x680] sm:$0xff]
        %v747 = vld [vmem:[#allocation7 + $0x688] sm:$0xff]
        %v748 = vld [vmem:[#allocation7 + $0x690] sm:$0xff]
        %v749 = vld [vmem:[#allocation7 + $0x698] sm:$0xff]
        %v750 = vld [vmem:[#allocation7 + $0x6a0] sm:$0xff]
        %v751 = vld [vmem:[#allocation7 + $0x6a8] sm:$0xff]
        %v752 = vld [vmem:[#allocation7 + $0x6b0] sm:$0xff]
        %v753 = vld [vmem:[#allocation7 + $0x6b8] sm:$0xff]
        %v754 = vld [vmem:[#allocation7 + $0x6c0] sm:$0xff]
        %v755 = vld [vmem:[#allocation7 + $0x6c8] sm:$0xff]
        %v756 = vld [vmem:[#allocation7 + $0x6d0] sm:$0xff]
        %v757 = vld [vmem:[#allocation7 + $0x6d8] sm:$0xff]
        %v758 = vld [vmem:[#allocation7 + $0x6e0] sm:$0xff]
        %v759 = vld [vmem:[#allocation7 + $0x6e8] sm:$0xff]
        %v760 = vld [vmem:[#allocation7 + $0x6f0] sm:$0xff]
        %v761 = vld [vmem:[#allocation7 + $0x6f8] sm:$0xff]
        %v762 = vld [vmem:[#allocation7 + $0x700] sm:$0xff]
        %v763 = vld [vmem:[#allocation7 + $0x708] sm:$0xff]
        %v764 = vld [vmem:[#allocation7 + $0x710] sm:$0xff]
        %v765 = vld [vmem:[#allocation7 + $0x718] sm:$0xff]
        %v766 = vld [vmem:[#allocation7 + $0x720] sm:$0xff]
        %v767 = vld [vmem:[#allocation7 + $0x728] sm:$0xff]
        %v768 = vld [vmem:[#allocation7 + $0x730] sm:$0xff]
        %v769 = vld [vmem:[#allocation7 + $0x738] sm:$0xff]
        %v770 = vld [vmem:[#allocation7 + $0x740] sm:$0xff]
        %v771 = vld [vmem:[#allocation7 + $0x748] sm:$0xff]
        %v772 = vld [vmem:[#allocation7 + $0x750] sm:$0xff]
        %v773 = vld [vmem:[#allocation7 + $0x758] sm:$0xff]
        %v774 = vld [vmem:[#allocation7 + $0x760] sm:$0xff]
        %v775 = vld [vmem:[#allocation7 + $0x768] sm:$0xff]
        %v776 = vld [vmem:[#allocation7 + $0x770] sm:$0xff]
        %v777 = vld [vmem:[#allocation7 + $0x778] sm:$0xff]
        %v778 = vld [vmem:[#allocation7 + $0x780] sm:$0xff]
        %v779 = vld [vmem:[#allocation7 + $0x788] sm:$0xff]
        %v780 = vld [vmem:[#allocation7 + $0x790] sm:$0xff]
        %v781 = vld [vmem:[#allocation7 + $0x798] sm:$0xff]
        %v782 = vld [vmem:[#allocation7 + $0x7a0] sm:$0xff]
        %v783 = vld [vmem:[#allocation7 + $0x7a8] sm:$0xff]
        %v784 = vld [vmem:[#allocation7 + $0x7b0] sm:$0xff]
        %v785 = vld [vmem:[#allocation7 + $0x7b8] sm:$0xff]
        %v786 = vld [vmem:[#allocation7 + $0x7c0] sm:$0xff]
        %v787 = vld [vmem:[#allocation7 + $0x7c8] sm:$0xff]
        %v788 = vld [vmem:[#allocation7 + $0x7d0] sm:$0xff]
        %v789 = vld [vmem:[#allocation7 + $0x7d8] sm:$0xff]
        %v790 = vld [vmem:[#allocation7 + $0x7e0] sm:$0xff]
        %v791 = vld [vmem:[#allocation7 + $0x7e8] sm:$0xff]
        %v792 = vld [vmem:[#allocation7 + $0x7f0] sm:$0xff]
        %v793 = vld [vmem:[#allocation7 + $0x7f8] sm:$0xff]
        %v1050 = vunpack.c.l.b16 %v538
        %v1051 = vunpack.c.h.b16 %v538
        %v1052 = vunpack.c.l.b16 %v539
        %v1053 = vunpack.c.h.b16 %v539
        %v1054 = vunpack.c.l.b16 %v540
        %v1055 = vunpack.c.h.b16 %v540
        %v1056 = vunpack.c.l.b16 %v541
        %v1057 = vunpack.c.h.b16 %v541
        %v1058 = vunpack.c.l.b16 %v542
        %v1059 = vunpack.c.h.b16 %v542
        %v1060 = vunpack.c.l.b16 %v543
        %v1061 = vunpack.c.h.b16 %v543
        %v1062 = vunpack.c.l.b16 %v544
        %v1063 = vunpack.c.h.b16 %v544
        %v1064 = vunpack.c.l.b16 %v545
        %v1065 = vunpack.c.h.b16 %v545
        %v1066 = vunpack.c.l.b16 %v546
        %v1067 = vunpack.c.h.b16 %v546
        %v1068 = vunpack.c.l.b16 %v547
        %v1069 = vunpack.c.h.b16 %v547
        %v1070 = vunpack.c.l.b16 %v548
        %v1071 = vunpack.c.h.b16 %v548
        %v1072 = vunpack.c.l.b16 %v549
        %v1073 = vunpack.c.h.b16 %v549
        %v1074 = vunpack.c.l.b16 %v550
        %v1075 = vunpack.c.h.b16 %v550
        %v1076 = vunpack.c.l.b16 %v551
        %v1077 = vunpack.c.h.b16 %v551
        %v1078 = vunpack.c.l.b16 %v552
        %v1079 = vunpack.c.h.b16 %v552
        %v1080 = vunpack.c.l.b16 %v553
        %v1081 = vunpack.c.h.b16 %v553
        %v1082 = vunpack.c.l.b16 %v554
        %v1083 = vunpack.c.h.b16 %v554
        %v1084 = vunpack.c.l.b16 %v555
        %v1085 = vunpack.c.h.b16 %v555
        %v1086 = vunpack.c.l.b16 %v556
        %v1087 = vunpack.c.h.b16 %v556
        %v1088 = vunpack.c.l.b16 %v557
        %v1089 = vunpack.c.h.b16 %v557
        %v1090 = vunpack.c.l.b16 %v558
        %v1091 = vunpack.c.h.b16 %v558
        %v1092 = vunpack.c.l.b16 %v559
        %v1093 = vunpack.c.h.b16 %v559
        %v1094 = vunpack.c.l.b16 %v560
        %v1095 = vunpack.c.h.b16 %v560
        %v1096 = vunpack.c.l.b16 %v561
        %v1097 = vunpack.c.h.b16 %v561
        %v1098 = vunpack.c.l.b16 %v562
        %v1099 = vunpack.c.h.b16 %v562
        %v1100 = vunpack.c.l.b16 %v563
        %v1101 = vunpack.c.h.b16 %v563
        %v1102 = vunpack.c.l.b16 %v564
        %v1103 = vunpack.c.h.b16 %v564
        %v1104 = vunpack.c.l.b16 %v565
        %v1105 = vunpack.c.h.b16 %v565
        %v1106 = vunpack.c.l.b16 %v566
        %v1107 = vunpack.c.h.b16 %v566
        %v1108 = vunpack.c.l.b16 %v567
        %v1109 = vunpack.c.h.b16 %v567
        %v1110 = vunpack.c.l.b16 %v568
        %v1111 = vunpack.c.h.b16 %v568
        %v1112 = vunpack.c.l.b16 %v569
        %v1113 = vunpack.c.h.b16 %v569
        %v1114 = vunpack.c.l.b16 %v570
        %v1115 = vunpack.c.h.b16 %v570
        %v1116 = vunpack.c.l.b16 %v571
        %v1117 = vunpack.c.h.b16 %v571
        %v1118 = vunpack.c.l.b16 %v572
        %v1119 = vunpack.c.h.b16 %v572
        %v1120 = vunpack.c.l.b16 %v573
        %v1121 = vunpack.c.h.b16 %v573
        %v1122 = vunpack.c.l.b16 %v574
        %v1123 = vunpack.c.h.b16 %v574
        %v1124 = vunpack.c.l.b16 %v575
        %v1125 = vunpack.c.h.b16 %v575
        %v1126 = vunpack.c.l.b16 %v576
        %v1127 = vunpack.c.h.b16 %v576
        %v1128 = vunpack.c.l.b16 %v577
        %v1129 = vunpack.c.h.b16 %v577
        %v1130 = vunpack.c.l.b16 %v578
        %v1131 = vunpack.c.h.b16 %v578
        %v1132 = vunpack.c.l.b16 %v579
        %v1133 = vunpack.c.h.b16 %v579
        %v1134 = vunpack.c.l.b16 %v580
        %v1135 = vunpack.c.h.b16 %v580
        %v1136 = vunpack.c.l.b16 %v581
        %v1137 = vunpack.c.h.b16 %v581
        %v1138 = vunpack.c.l.b16 %v582
        %v1139 = vunpack.c.h.b16 %v582
        %v1140 = vunpack.c.l.b16 %v583
        %v1141 = vunpack.c.h.b16 %v583
        %v1142 = vunpack.c.l.b16 %v584
        %v1143 = vunpack.c.h.b16 %v584
        %v1144 = vunpack.c.l.b16 %v585
        %v1145 = vunpack.c.h.b16 %v585
        %v1146 = vunpack.c.l.b16 %v586
        %v1147 = vunpack.c.h.b16 %v586
        %v1148 = vunpack.c.l.b16 %v587
        %v1149 = vunpack.c.h.b16 %v587
        %v1150 = vunpack.c.l.b16 %v588
        %v1151 = vunpack.c.h.b16 %v588
        %v1152 = vunpack.c.l.b16 %v589
        %v1153 = vunpack.c.h.b16 %v589
        %v1154 = vunpack.c.l.b16 %v590
        %v1155 = vunpack.c.h.b16 %v590
        %v1156 = vunpack.c.l.b16 %v591
        %v1157 = vunpack.c.h.b16 %v591
        %v1158 = vunpack.c.l.b16 %v592
        %v1159 = vunpack.c.h.b16 %v592
        %v1160 = vunpack.c.l.b16 %v593
        %v1161 = vunpack.c.h.b16 %v593
        %v1162 = vunpack.c.l.b16 %v594
        %v1163 = vunpack.c.h.b16 %v594
        %v1164 = vunpack.c.l.b16 %v595
        %v1165 = vunpack.c.h.b16 %v595
        %v1166 = vunpack.c.l.b16 %v596
        %v1167 = vunpack.c.h.b16 %v596
        %v1168 = vunpack.c.l.b16 %v597
        %v1169 = vunpack.c.h.b16 %v597
        %v1170 = vunpack.c.l.b16 %v598
        %v1171 = vunpack.c.h.b16 %v598
        %v1172 = vunpack.c.l.b16 %v599
        %v1173 = vunpack.c.h.b16 %v599
        %v1174 = vunpack.c.l.b16 %v600
        %v1175 = vunpack.c.h.b16 %v600
        %v1176 = vunpack.c.l.b16 %v601
        %v1177 = vunpack.c.h.b16 %v601
        %v1178 = vunpack.c.l.b16 %v602
        %v1179 = vunpack.c.h.b16 %v602
        %v1180 = vunpack.c.l.b16 %v603
        %v1181 = vunpack.c.h.b16 %v603
        %v1182 = vunpack.c.l.b16 %v604
        %v1183 = vunpack.c.h.b16 %v604
        %v1184 = vunpack.c.l.b16 %v605
        %v1185 = vunpack.c.h.b16 %v605
        %v1186 = vunpack.c.l.b16 %v606
        %v1187 = vunpack.c.h.b16 %v606
        %v1188 = vunpack.c.l.b16 %v607
        %v1189 = vunpack.c.h.b16 %v607
        %v1190 = vunpack.c.l.b16 %v608
        %v1191 = vunpack.c.h.b16 %v608
        %v1192 = vunpack.c.l.b16 %v609
        %v1193 = vunpack.c.h.b16 %v609
        %v1194 = vunpack.c.l.b16 %v610
        %v1195 = vunpack.c.h.b16 %v610
        %v1196 = vunpack.c.l.b16 %v611
        %v1197 = vunpack.c.h.b16 %v611
        %v1198 = vunpack.c.l.b16 %v612
        %v1199 = vunpack.c.h.b16 %v612
        %v1200 = vunpack.c.l.b16 %v613
        %v1201 = vunpack.c.h.b16 %v613
        %v1202 = vunpack.c.l.b16 %v614
        %v1203 = vunpack.c.h.b16 %v614
        %v1204 = vunpack.c.l.b16 %v615
        %v1205 = vunpack.c.h.b16 %v615
        %v1206 = vunpack.c.l.b16 %v616
        %v1207 = vunpack.c.h.b16 %v616
        %v1208 = vunpack.c.l.b16 %v617
        %v1209 = vunpack.c.h.b16 %v617
        %v1210 = vunpack.c.l.b16 %v618
        %v1211 = vunpack.c.h.b16 %v618
        %v1212 = vunpack.c.l.b16 %v619
        %v1213 = vunpack.c.h.b16 %v619
        %v1214 = vunpack.c.l.b16 %v620
        %v1215 = vunpack.c.h.b16 %v620
        %v1216 = vunpack.c.l.b16 %v621
        %v1217 = vunpack.c.h.b16 %v621
        %v1218 = vunpack.c.l.b16 %v622
        %v1219 = vunpack.c.h.b16 %v622
        %v1220 = vunpack.c.l.b16 %v623
        %v1221 = vunpack.c.h.b16 %v623
        %v1222 = vunpack.c.l.b16 %v624
        %v1223 = vunpack.c.h.b16 %v624
        %v1224 = vunpack.c.l.b16 %v625
        %v1225 = vunpack.c.h.b16 %v625
        %v1226 = vunpack.c.l.b16 %v626
        %v1227 = vunpack.c.h.b16 %v626
        %v1228 = vunpack.c.l.b16 %v627
        %v1229 = vunpack.c.h.b16 %v627
        %v1230 = vunpack.c.l.b16 %v628
        %v1231 = vunpack.c.h.b16 %v628
        %v1232 = vunpack.c.l.b16 %v629
        %v1233 = vunpack.c.h.b16 %v629
        %v1234 = vunpack.c.l.b16 %v630
        %v1235 = vunpack.c.h.b16 %v630
        %v1236 = vunpack.c.l.b16 %v631
        %v1237 = vunpack.c.h.b16 %v631
        %v1238 = vunpack.c.l.b16 %v632
        %v1239 = vunpack.c.h.b16 %v632
        %v1240 = vunpack.c.l.b16 %v633
        %v1241 = vunpack.c.h.b16 %v633
        %v1242 = vunpack.c.l.b16 %v634
        %v1243 = vunpack.c.h.b16 %v634
        %v1244 = vunpack.c.l.b16 %v635
        %v1245 = vunpack.c.h.b16 %v635
        %v1246 = vunpack.c.l.b16 %v636
        %v1247 = vunpack.c.h.b16 %v636
        %v1248 = vunpack.c.l.b16 %v637
        %v1249 = vunpack.c.h.b16 %v637
        %v1250 = vunpack.c.l.b16 %v638
        %v1251 = vunpack.c.h.b16 %v638
        %v1252 = vunpack.c.l.b16 %v639
        %v1253 = vunpack.c.h.b16 %v639
        %v1254 = vunpack.c.l.b16 %v640
        %v1255 = vunpack.c.h.b16 %v640
        %v1256 = vunpack.c.l.b16 %v641
        %v1257 = vunpack.c.h.b16 %v641
        %v1258 = vunpack.c.l.b16 %v642
        %v1259 = vunpack.c.h.b16 %v642
        %v1260 = vunpack.c.l.b16 %v643
        %v1261 = vunpack.c.h.b16 %v643
        %v1262 = vunpack.c.l.b16 %v644
        %v1263 = vunpack.c.h.b16 %v644
        %v1264 = vunpack.c.l.b16 %v645
        %v1265 = vunpack.c.h.b16 %v645
        %v1266 = vunpack.c.l.b16 %v646
        %v1267 = vunpack.c.h.b16 %v646
        %v1268 = vunpack.c.l.b16 %v647
        %v1269 = vunpack.c.h.b16 %v647
        %v1270 = vunpack.c.l.b16 %v648
        %v1271 = vunpack.c.h.b16 %v648
        %v1272 = vunpack.c.l.b16 %v649
        %v1273 = vunpack.c.h.b16 %v649
        %v1274 = vunpack.c.l.b16 %v650
        %v1275 = vunpack.c.h.b16 %v650
        %v1276 = vunpack.c.l.b16 %v651
        %v1277 = vunpack.c.h.b16 %v651
        %v1278 = vunpack.c.l.b16 %v652
        %v1279 = vunpack.c.h.b16 %v652
        %v1280 = vunpack.c.l.b16 %v653
        %v1281 = vunpack.c.h.b16 %v653
        %v1282 = vunpack.c.l.b16 %v654
        %v1283 = vunpack.c.h.b16 %v654
        %v1284 = vunpack.c.l.b16 %v655
        %v1285 = vunpack.c.h.b16 %v655
        %v1286 = vunpack.c.l.b16 %v656
        %v1287 = vunpack.c.h.b16 %v656
        %v1288 = vunpack.c.l.b16 %v657
        %v1289 = vunpack.c.h.b16 %v657
        %v1290 = vunpack.c.l.b16 %v658
        %v1291 = vunpack.c.h.b16 %v658
        %v1292 = vunpack.c.l.b16 %v659
        %v1293 = vunpack.c.h.b16 %v659
        %v1294 = vunpack.c.l.b16 %v660
        %v1295 = vunpack.c.h.b16 %v660
        %v1296 = vunpack.c.l.b16 %v661
        %v1297 = vunpack.c.h.b16 %v661
        %v1298 = vunpack.c.l.b16 %v662
        %v1299 = vunpack.c.h.b16 %v662
        %v1300 = vunpack.c.l.b16 %v663
        %v1301 = vunpack.c.h.b16 %v663
        %v1302 = vunpack.c.l.b16 %v664
        %v1303 = vunpack.c.h.b16 %v664
        %v1304 = vunpack.c.l.b16 %v665
        %v1305 = vunpack.c.h.b16 %v665
        %v1306 = vunpack.c.l.b16 %v666
        %v1307 = vunpack.c.h.b16 %v666
        %v1308 = vunpack.c.l.b16 %v667
        %v1309 = vunpack.c.h.b16 %v667
        %v1310 = vunpack.c.l.b16 %v668
        %v1311 = vunpack.c.h.b16 %v668
        %v1312 = vunpack.c.l.b16 %v669
        %v1313 = vunpack.c.h.b16 %v669
        %v1314 = vunpack.c.l.b16 %v670
        %v1315 = vunpack.c.h.b16 %v670
        %v1316 = vunpack.c.l.b16 %v671
        %v1317 = vunpack.c.h.b16 %v671
        %v1318 = vunpack.c.l.b16 %v672
        %v1319 = vunpack.c.h.b16 %v672
        %v1320 = vunpack.c.l.b16 %v673
        %v1321 = vunpack.c.h.b16 %v673
        %v1322 = vunpack.c.l.b16 %v674
        %v1323 = vunpack.c.h.b16 %v674
        %v1324 = vunpack.c.l.b16 %v675
        %v1325 = vunpack.c.h.b16 %v675
        %v1326 = vunpack.c.l.b16 %v676
        %v1327 = vunpack.c.h.b16 %v676
        %v1328 = vunpack.c.l.b16 %v677
        %v1329 = vunpack.c.h.b16 %v677
        %v1330 = vunpack.c.l.b16 %v678
        %v1331 = vunpack.c.h.b16 %v678
        %v1332 = vunpack.c.l.b16 %v679
        %v1333 = vunpack.c.h.b16 %v679
        %v1334 = vunpack.c.l.b16 %v680
        %v1335 = vunpack.c.h.b16 %v680
        %v1336 = vunpack.c.l.b16 %v681
        %v1337 = vunpack.c.h.b16 %v681
        %v1338 = vunpack.c.l.b16 %v682
        %v1339 = vunpack.c.h.b16 %v682
        %v1340 = vunpack.c.l.b16 %v683
        %v1341 = vunpack.c.h.b16 %v683
        %v1342 = vunpack.c.l.b16 %v684
        %v1343 = vunpack.c.h.b16 %v684
        %v1344 = vunpack.c.l.b16 %v685
        %v1345 = vunpack.c.h.b16 %v685
        %v1346 = vunpack.c.l.b16 %v686
        %v1347 = vunpack.c.h.b16 %v686
        %v1348 = vunpack.c.l.b16 %v687
        %v1349 = vunpack.c.h.b16 %v687
        %v1350 = vunpack.c.l.b16 %v688
        %v1351 = vunpack.c.h.b16 %v688
        %v1352 = vunpack.c.l.b16 %v689
        %v1353 = vunpack.c.h.b16 %v689
        %v1354 = vunpack.c.l.b16 %v690
        %v1355 = vunpack.c.h.b16 %v690
        %v1356 = vunpack.c.l.b16 %v691
        %v1357 = vunpack.c.h.b16 %v691
        %v1358 = vunpack.c.l.b16 %v692
        %v1359 = vunpack.c.h.b16 %v692
        %v1360 = vunpack.c.l.b16 %v693
        %v1361 = vunpack.c.h.b16 %v693
        %v1362 = vunpack.c.l.b16 %v694
        %v1363 = vunpack.c.h.b16 %v694
        %v1364 = vunpack.c.l.b16 %v695
        %v1365 = vunpack.c.h.b16 %v695
        %v1366 = vunpack.c.l.b16 %v696
        %v1367 = vunpack.c.h.b16 %v696
        %v1368 = vunpack.c.l.b16 %v697
        %v1369 = vunpack.c.h.b16 %v697
        %v1370 = vunpack.c.l.b16 %v698
        %v1371 = vunpack.c.h.b16 %v698
        %v1372 = vunpack.c.l.b16 %v699
        %v1373 = vunpack.c.h.b16 %v699
        %v1374 = vunpack.c.l.b16 %v700
        %v1375 = vunpack.c.h.b16 %v700
        %v1376 = vunpack.c.l.b16 %v701
        %v1377 = vunpack.c.h.b16 %v701
        %v1378 = vunpack.c.l.b16 %v702
        %v1379 = vunpack.c.h.b16 %v702
        %v1380 = vunpack.c.l.b16 %v703
        %v1381 = vunpack.c.h.b16 %v703
        %v1382 = vunpack.c.l.b16 %v704
        %v1383 = vunpack.c.h.b16 %v704
        %v1384 = vunpack.c.l.b16 %v705
        %v1385 = vunpack.c.h.b16 %v705
        %v1386 = vunpack.c.l.b16 %v706
        %v1387 = vunpack.c.h.b16 %v706
        %v1388 = vunpack.c.l.b16 %v707
        %v1389 = vunpack.c.h.b16 %v707
        %v1390 = vunpack.c.l.b16 %v708
        %v1391 = vunpack.c.h.b16 %v708
        %v1392 = vunpack.c.l.b16 %v709
        %v1393 = vunpack.c.h.b16 %v709
        %v1394 = vunpack.c.l.b16 %v710
        %v1395 = vunpack.c.h.b16 %v710
        %v1396 = vunpack.c.l.b16 %v711
        %v1397 = vunpack.c.h.b16 %v711
        %v1398 = vunpack.c.l.b16 %v712
        %v1399 = vunpack.c.h.b16 %v712
        %v1400 = vunpack.c.l.b16 %v713
        %v1401 = vunpack.c.h.b16 %v713
        %v1402 = vunpack.c.l.b16 %v714
        %v1403 = vunpack.c.h.b16 %v714
        %v1404 = vunpack.c.l.b16 %v715
        %v1405 = vunpack.c.h.b16 %v715
        %v1406 = vunpack.c.l.b16 %v716
        %v1407 = vunpack.c.h.b16 %v716
        %v1408 = vunpack.c.l.b16 %v717
        %v1409 = vunpack.c.h.b16 %v717
        %v1410 = vunpack.c.l.b16 %v718
        %v1411 = vunpack.c.h.b16 %v718
        %v1412 = vunpack.c.l.b16 %v719
        %v1413 = vunpack.c.h.b16 %v719
        %v1414 = vunpack.c.l.b16 %v720
        %v1415 = vunpack.c.h.b16 %v720
        %v1416 = vunpack.c.l.b16 %v721
        %v1417 = vunpack.c.h.b16 %v721
        %v1418 = vunpack.c.l.b16 %v722
        %v1419 = vunpack.c.h.b16 %v722
        %v1420 = vunpack.c.l.b16 %v723
        %v1421 = vunpack.c.h.b16 %v723
        %v1422 = vunpack.c.l.b16 %v724
        %v1423 = vunpack.c.h.b16 %v724
        %v1424 = vunpack.c.l.b16 %v725
        %v1425 = vunpack.c.h.b16 %v725
        %v1426 = vunpack.c.l.b16 %v726
        %v1427 = vunpack.c.h.b16 %v726
        %v1428 = vunpack.c.l.b16 %v727
        %v1429 = vunpack.c.h.b16 %v727
        %v1430 = vunpack.c.l.b16 %v728
        %v1431 = vunpack.c.h.b16 %v728
        %v1432 = vunpack.c.l.b16 %v729
        %v1433 = vunpack.c.h.b16 %v729
        %v1434 = vunpack.c.l.b16 %v730
        %v1435 = vunpack.c.h.b16 %v730
        %v1436 = vunpack.c.l.b16 %v731
        %v1437 = vunpack.c.h.b16 %v731
        %v1438 = vunpack.c.l.b16 %v732
        %v1439 = vunpack.c.h.b16 %v732
        %v1440 = vunpack.c.l.b16 %v733
        %v1441 = vunpack.c.h.b16 %v733
        %v1442 = vunpack.c.l.b16 %v734
        %v1443 = vunpack.c.h.b16 %v734
        %v1444 = vunpack.c.l.b16 %v735
        %v1445 = vunpack.c.h.b16 %v735
        %v1446 = vunpack.c.l.b16 %v736
        %v1447 = vunpack.c.h.b16 %v736
        %v1448 = vunpack.c.l.b16 %v737
        %v1449 = vunpack.c.h.b16 %v737
        %v1450 = vunpack.c.l.b16 %v738
        %v1451 = vunpack.c.h.b16 %v738
        %v1452 = vunpack.c.l.b16 %v739
        %v1453 = vunpack.c.h.b16 %v739
        %v1454 = vunpack.c.l.b16 %v740
        %v1455 = vunpack.c.h.b16 %v740
        %v1456 = vunpack.c.l.b16 %v741
        %v1457 = vunpack.c.h.b16 %v741
        %v1458 = vunpack.c.l.b16 %v742
        %v1459 = vunpack.c.h.b16 %v742
        %v1460 = vunpack.c.l.b16 %v743
        %v1461 = vunpack.c.h.b16 %v743
        %v1462 = vunpack.c.l.b16 %v744
        %v1463 = vunpack.c.h.b16 %v744
        %v1464 = vunpack.c.l.b16 %v745
        %v1465 = vunpack.c.h.b16 %v745
        %v1466 = vunpack.c.l.b16 %v746
        %v1467 = vunpack.c.h.b16 %v746
        %v1468 = vunpack.c.l.b16 %v747
        %v1469 = vunpack.c.h.b16 %v747
        %v1470 = vunpack.c.l.b16 %v748
        %v1471 = vunpack.c.h.b16 %v748
        %v1472 = vunpack.c.l.b16 %v749
        %v1473 = vunpack.c.h.b16 %v749
        %v1474 = vunpack.c.l.b16 %v750
        %v1475 = vunpack.c.h.b16 %v750
        %v1476 = vunpack.c.l.b16 %v751
        %v1477 = vunpack.c.h.b16 %v751
        %v1478 = vunpack.c.l.b16 %v752
        %v1479 = vunpack.c.h.b16 %v752
        %v1480 = vunpack.c.l.b16 %v753
        %v1481 = vunpack.c.h.b16 %v753
        %v1482 = vunpack.c.l.b16 %v754
        %v1483 = vunpack.c.h.b16 %v754
        %v1484 = vunpack.c.l.b16 %v755
        %v1485 = vunpack.c.h.b16 %v755
        %v1486 = vunpack.c.l.b16 %v756
        %v1487 = vunpack.c.h.b16 %v756
        %v1488 = vunpack.c.l.b16 %v757
        %v1489 = vunpack.c.h.b16 %v757
        %v1490 = vunpack.c.l.b16 %v758
        %v1491 = vunpack.c.h.b16 %v758
        %v1492 = vunpack.c.l.b16 %v759
        %v1493 = vunpack.c.h.b16 %v759
        %v1494 = vunpack.c.l.b16 %v760
        %v1495 = vunpack.c.h.b16 %v760
        %v1496 = vunpack.c.l.b16 %v761
        %v1497 = vunpack.c.h.b16 %v761
        %v1498 = vunpack.c.l.b16 %v762
        %v1499 = vunpack.c.h.b16 %v762
        %v1500 = vunpack.c.l.b16 %v763
        %v1501 = vunpack.c.h.b16 %v763
        %v1502 = vunpack.c.l.b16 %v764
        %v1503 = vunpack.c.h.b16 %v764
        %v1504 = vunpack.c.l.b16 %v765
        %v1505 = vunpack.c.h.b16 %v765
        %v1506 = vunpack.c.l.b16 %v766
        %v1507 = vunpack.c.h.b16 %v766
        %v1508 = vunpack.c.l.b16 %v767
        %v1509 = vunpack.c.h.b16 %v767
        %v1510 = vunpack.c.l.b16 %v768
        %v1511 = vunpack.c.h.b16 %v768
        %v1512 = vunpack.c.l.b16 %v769
        %v1513 = vunpack.c.h.b16 %v769
        %v1514 = vunpack.c.l.b16 %v770
        %v1515 = vunpack.c.h.b16 %v770
        %v1516 = vunpack.c.l.b16 %v771
        %v1517 = vunpack.c.h.b16 %v771
        %v1518 = vunpack.c.l.b16 %v772
        %v1519 = vunpack.c.h.b16 %v772
        %v1520 = vunpack.c.l.b16 %v773
        %v1521 = vunpack.c.h.b16 %v773
        %v1522 = vunpack.c.l.b16 %v774
        %v1523 = vunpack.c.h.b16 %v774
        %v1524 = vunpack.c.l.b16 %v775
        %v1525 = vunpack.c.h.b16 %v775
        %v1526 = vunpack.c.l.b16 %v776
        %v1527 = vunpack.c.h.b16 %v776
        %v1528 = vunpack.c.l.b16 %v777
        %v1529 = vunpack.c.h.b16 %v777
        %v1530 = vunpack.c.l.b16 %v778
        %v1531 = vunpack.c.h.b16 %v778
        %v1532 = vunpack.c.l.b16 %v779
        %v1533 = vunpack.c.h.b16 %v779
        %v1534 = vunpack.c.l.b16 %v780
        %v1535 = vunpack.c.h.b16 %v780
        %v1536 = vunpack.c.l.b16 %v781
        %v1537 = vunpack.c.h.b16 %v781
        %v1538 = vunpack.c.l.b16 %v782
        %v1539 = vunpack.c.h.b16 %v782
        %v1540 = vunpack.c.l.b16 %v783
        %v1541 = vunpack.c.h.b16 %v783
        %v1542 = vunpack.c.l.b16 %v784
        %v1543 = vunpack.c.h.b16 %v784
        %v1544 = vunpack.c.l.b16 %v785
        %v1545 = vunpack.c.h.b16 %v785
        %v1546 = vunpack.c.l.b16 %v786
        %v1547 = vunpack.c.h.b16 %v786
        %v1548 = vunpack.c.l.b16 %v787
        %v1549 = vunpack.c.h.b16 %v787
        %v1550 = vunpack.c.l.b16 %v788
        %v1551 = vunpack.c.h.b16 %v788
        %v1552 = vunpack.c.l.b16 %v789
        %v1553 = vunpack.c.h.b16 %v789
        %v1554 = vunpack.c.l.b16 %v790
        %v1555 = vunpack.c.h.b16 %v790
        %v1556 = vunpack.c.l.b16 %v791
        %v1557 = vunpack.c.h.b16 %v791
        %v1558 = vunpack.c.l.b16 %v792
        %v1559 = vunpack.c.h.b16 %v792
        %v1560 = vunpack.c.l.b16 %v793
        %v1561 = vunpack.c.h.b16 %v793
        %v1562 = vpack.c.b16 %v1058, %v1050
        %v1563 = vpack.c.b16 %v1059, %v1051
        %v1564 = vpack.c.b16 %v1060, %v1052
        %v1565 = vpack.c.b16 %v1061, %v1053
        %v1566 = vpack.c.b16 %v1062, %v1054
        %v1567 = vpack.c.b16 %v1063, %v1055
        %v1568 = vpack.c.b16 %v1064, %v1056
        %v1569 = vpack.c.b16 %v1065, %v1057
        %v1570 = vpack.c.b16 %v1074, %v1066
        %v1571 = vpack.c.b16 %v1075, %v1067
        %v1572 = vpack.c.b16 %v1076, %v1068
        %v1573 = vpack.c.b16 %v1077, %v1069
        %v1574 = vpack.c.b16 %v1078, %v1070
        %v1575 = vpack.c.b16 %v1079, %v1071
        %v1576 = vpack.c.b16 %v1080, %v1072
        %v1577 = vpack.c.b16 %v1081, %v1073
        %v1578 = vpack.c.b16 %v1090, %v1082
        %v1579 = vpack.c.b16 %v1091, %v1083
        %v1580 = vpack.c.b16 %v1092, %v1084
        %v1581 = vpack.c.b16 %v1093, %v1085
        %v1582 = vpack.c.b16 %v1094, %v1086
        %v1583 = vpack.c.b16 %v1095, %v1087
        %v1584 = vpack.c.b16 %v1096, %v1088
        %v1585 = vpack.c.b16 %v1097, %v1089
        %v1586 = vpack.c.b16 %v1106, %v1098
        %v1587 = vpack.c.b16 %v1107, %v1099
        %v1588 = vpack.c.b16 %v1108, %v1100
        %v1589 = vpack.c.b16 %v1109, %v1101
        %v1590 = vpack.c.b16 %v1110, %v1102
        %v1591 = vpack.c.b16 %v1111, %v1103
        %v1592 = vpack.c.b16 %v1112, %v1104
        %v1593 = vpack.c.b16 %v1113, %v1105
        %v1594 = vpack.c.b16 %v1122, %v1114
        %v1595 = vpack.c.b16 %v1123, %v1115
        %v1596 = vpack.c.b16 %v1124, %v1116
        %v1597 = vpack.c.b16 %v1125, %v1117
        %v1598 = vpack.c.b16 %v1126, %v1118
        %v1599 = vpack.c.b16 %v1127, %v1119
        %v1600 = vpack.c.b16 %v1128, %v1120
        %v1601 = vpack.c.b16 %v1129, %v1121
        %v1602 = vpack.c.b16 %v1138, %v1130
        %v1603 = vpack.c.b16 %v1139, %v1131
        %v1604 = vpack.c.b16 %v1140, %v1132
        %v1605 = vpack.c.b16 %v1141, %v1133
        %v1606 = vpack.c.b16 %v1142, %v1134
        %v1607 = vpack.c.b16 %v1143, %v1135
        %v1608 = vpack.c.b16 %v1144, %v1136
        %v1609 = vpack.c.b16 %v1145, %v1137
        %v1610 = vpack.c.b16 %v1154, %v1146
        %v1611 = vpack.c.b16 %v1155, %v1147
        %v1612 = vpack.c.b16 %v1156, %v1148
        %v1613 = vpack.c.b16 %v1157, %v1149
        %v1614 = vpack.c.b16 %v1158, %v1150
        %v1615 = vpack.c.b16 %v1159, %v1151
        %v1616 = vpack.c.b16 %v1160, %v1152
        %v1617 = vpack.c.b16 %v1161, %v1153
        %v1618 = vpack.c.b16 %v1170, %v1162
        %v1619 = vpack.c.b16 %v1171, %v1163
        %v1620 = vpack.c.b16 %v1172, %v1164
        %v1621 = vpack.c.b16 %v1173, %v1165
        %v1622 = vpack.c.b16 %v1174, %v1166
        %v1623 = vpack.c.b16 %v1175, %v1167
        %v1624 = vpack.c.b16 %v1176, %v1168
        %v1625 = vpack.c.b16 %v1177, %v1169
        %v1626 = vpack.c.b16 %v1186, %v1178
        %v1627 = vpack.c.b16 %v1187, %v1179
        %v1628 = vpack.c.b16 %v1188, %v1180
        %v1629 = vpack.c.b16 %v1189, %v1181
        %v1630 = vpack.c.b16 %v1190, %v1182
        %v1631 = vpack.c.b16 %v1191, %v1183
        %v1632 = vpack.c.b16 %v1192, %v1184
        %v1633 = vpack.c.b16 %v1193, %v1185
        %v1634 = vpack.c.b16 %v1202, %v1194
        %v1635 = vpack.c.b16 %v1203, %v1195
        %v1636 = vpack.c.b16 %v1204, %v1196
        %v1637 = vpack.c.b16 %v1205, %v1197
        %v1638 = vpack.c.b16 %v1206, %v1198
        %v1639 = vpack.c.b16 %v1207, %v1199
        %v1640 = vpack.c.b16 %v1208, %v1200
        %v1641 = vpack.c.b16 %v1209, %v1201
        %v1642 = vpack.c.b16 %v1218, %v1210
        %v1643 = vpack.c.b16 %v1219, %v1211
        %v1644 = vpack.c.b16 %v1220, %v1212
        %v1645 = vpack.c.b16 %v1221, %v1213
        %v1646 = vpack.c.b16 %v1222, %v1214
        %v1647 = vpack.c.b16 %v1223, %v1215
        %v1648 = vpack.c.b16 %v1224, %v1216
        %v1649 = vpack.c.b16 %v1225, %v1217
        %v1650 = vpack.c.b16 %v1234, %v1226
        %v1651 = vpack.c.b16 %v1235, %v1227
        %v1652 = vpack.c.b16 %v1236, %v1228
        %v1653 = vpack.c.b16 %v1237, %v1229
        %v1654 = vpack.c.b16 %v1238, %v1230
        %v1655 = vpack.c.b16 %v1239, %v1231
        %v1656 = vpack.c.b16 %v1240, %v1232
        %v1657 = vpack.c.b16 %v1241, %v1233
        %v1658 = vpack.c.b16 %v1250, %v1242
        %v1659 = vpack.c.b16 %v1251, %v1243
        %v1660 = vpack.c.b16 %v1252, %v1244
        %v1661 = vpack.c.b16 %v1253, %v1245
        %v1662 = vpack.c.b16 %v1254, %v1246
        %v1663 = vpack.c.b16 %v1255, %v1247
        %v1664 = vpack.c.b16 %v1256, %v1248
        %v1665 = vpack.c.b16 %v1257, %v1249
        %v1666 = vpack.c.b16 %v1266, %v1258
        %v1667 = vpack.c.b16 %v1267, %v1259
        %v1668 = vpack.c.b16 %v1268, %v1260
        %v1669 = vpack.c.b16 %v1269, %v1261
        %v1670 = vpack.c.b16 %v1270, %v1262
        %v1671 = vpack.c.b16 %v1271, %v1263
        %v1672 = vpack.c.b16 %v1272, %v1264
        %v1673 = vpack.c.b16 %v1273, %v1265
        %v1674 = vpack.c.b16 %v1282, %v1274
        %v1675 = vpack.c.b16 %v1283, %v1275
        %v1676 = vpack.c.b16 %v1284, %v1276
        %v1677 = vpack.c.b16 %v1285, %v1277
        %v1678 = vpack.c.b16 %v1286, %v1278
        %v1679 = vpack.c.b16 %v1287, %v1279
        %v1680 = vpack.c.b16 %v1288, %v1280
        %v1681 = vpack.c.b16 %v1289, %v1281
        %v1682 = vpack.c.b16 %v1298, %v1290
        %v1683 = vpack.c.b16 %v1299, %v1291
        %v1684 = vpack.c.b16 %v1300, %v1292
        %v1685 = vpack.c.b16 %v1301, %v1293
        %v1686 = vpack.c.b16 %v1302, %v1294
        %v1687 = vpack.c.b16 %v1303, %v1295
        %v1688 = vpack.c.b16 %v1304, %v1296
        %v1689 = vpack.c.b16 %v1305, %v1297
        %v1690 = vpack.c.b16 %v1314, %v1306
        %v1691 = vpack.c.b16 %v1315, %v1307
        %v1692 = vpack.c.b16 %v1316, %v1308
        %v1693 = vpack.c.b16 %v1317, %v1309
        %v1694 = vpack.c.b16 %v1318, %v1310
        %v1695 = vpack.c.b16 %v1319, %v1311
        %v1696 = vpack.c.b16 %v1320, %v1312
        %v1697 = vpack.c.b16 %v1321, %v1313
        %v1698 = vpack.c.b16 %v1330, %v1322
        %v1699 = vpack.c.b16 %v1331, %v1323
        %v1700 = vpack.c.b16 %v1332, %v1324
        %v1701 = vpack.c.b16 %v1333, %v1325
        %v1702 = vpack.c.b16 %v1334, %v1326
        %v1703 = vpack.c.b16 %v1335, %v1327
        %v1704 = vpack.c.b16 %v1336, %v1328
        %v1705 = vpack.c.b16 %v1337, %v1329
        %v1706 = vpack.c.b16 %v1346, %v1338
        %v1707 = vpack.c.b16 %v1347, %v1339
        %v1708 = vpack.c.b16 %v1348, %v1340
        %v1709 = vpack.c.b16 %v1349, %v1341
        %v1710 = vpack.c.b16 %v1350, %v1342
        %v1711 = vpack.c.b16 %v1351, %v1343
        %v1712 = vpack.c.b16 %v1352, %v1344
        %v1713 = vpack.c.b16 %v1353, %v1345
        %v1714 = vpack.c.b16 %v1362, %v1354
        %v1715 = vpack.c.b16 %v1363, %v1355
        %v1716 = vpack.c.b16 %v1364, %v1356
        %v1717 = vpack.c.b16 %v1365, %v1357
        %v1718 = vpack.c.b16 %v1366, %v1358
        %v1719 = vpack.c.b16 %v1367, %v1359
        %v1720 = vpack.c.b16 %v1368, %v1360
        %v1721 = vpack.c.b16 %v1369, %v1361
        %v1722 = vpack.c.b16 %v1378, %v1370
        %v1723 = vpack.c.b16 %v1379, %v1371
        %v1724 = vpack.c.b16 %v1380, %v1372
        %v1725 = vpack.c.b16 %v1381, %v1373
        %v1726 = vpack.c.b16 %v1382, %v1374
        %v1727 = vpack.c.b16 %v1383, %v1375
        %v1728 = vpack.c.b16 %v1384, %v1376
        %v1729 = vpack.c.b16 %v1385, %v1377
        %v1730 = vpack.c.b16 %v1394, %v1386
        %v1731 = vpack.c.b16 %v1395, %v1387
        %v1732 = vpack.c.b16 %v1396, %v1388
        %v1733 = vpack.c.b16 %v1397, %v1389
        %v1734 = vpack.c.b16 %v1398, %v1390
        %v1735 = vpack.c.b16 %v1399, %v1391
        %v1736 = vpack.c.b16 %v1400, %v1392
        %v1737 = vpack.c.b16 %v1401, %v1393
        %v1738 = vpack.c.b16 %v1410, %v1402
        %v1739 = vpack.c.b16 %v1411, %v1403
        %v1740 = vpack.c.b16 %v1412, %v1404
        %v1741 = vpack.c.b16 %v1413, %v1405
        %v1742 = vpack.c.b16 %v1414, %v1406
        %v1743 = vpack.c.b16 %v1415, %v1407
        %v1744 = vpack.c.b16 %v1416, %v1408
        %v1745 = vpack.c.b16 %v1417, %v1409
        %v1746 = vpack.c.b16 %v1426, %v1418
        %v1747 = vpack.c.b16 %v1427, %v1419
        %v1748 = vpack.c.b16 %v1428, %v1420
        %v1749 = vpack.c.b16 %v1429, %v1421
        %v1750 = vpack.c.b16 %v1430, %v1422
        %v1751 = vpack.c.b16 %v1431, %v1423
        %v1752 = vpack.c.b16 %v1432, %v1424
        %v1753 = vpack.c.b16 %v1433, %v1425
        %v1754 = vpack.c.b16 %v1442, %v1434
        %v1755 = vpack.c.b16 %v1443, %v1435
        %v1756 = vpack.c.b16 %v1444, %v1436
        %v1757 = vpack.c.b16 %v1445, %v1437
        %v1758 = vpack.c.b16 %v1446, %v1438
        %v1759 = vpack.c.b16 %v1447, %v1439
        %v1760 = vpack.c.b16 %v1448, %v1440
        %v1761 = vpack.c.b16 %v1449, %v1441
        %v1762 = vpack.c.b16 %v1458, %v1450
        %v1763 = vpack.c.b16 %v1459, %v1451
        %v1764 = vpack.c.b16 %v1460, %v1452
        %v1765 = vpack.c.b16 %v1461, %v1453
        %v1766 = vpack.c.b16 %v1462, %v1454
        %v1767 = vpack.c.b16 %v1463, %v1455
        %v1768 = vpack.c.b16 %v1464, %v1456
        %v1769 = vpack.c.b16 %v1465, %v1457
        %v1770 = vpack.c.b16 %v1474, %v1466
        %v1771 = vpack.c.b16 %v1475, %v1467
        %v1772 = vpack.c.b16 %v1476, %v1468
        %v1773 = vpack.c.b16 %v1477, %v1469
        %v1774 = vpack.c.b16 %v1478, %v1470
        %v1775 = vpack.c.b16 %v1479, %v1471
        %v1776 = vpack.c.b16 %v1480, %v1472
        %v1777 = vpack.c.b16 %v1481, %v1473
        %v1778 = vpack.c.b16 %v1490, %v1482
        %v1779 = vpack.c.b16 %v1491, %v1483
        %v1780 = vpack.c.b16 %v1492, %v1484
        %v1781 = vpack.c.b16 %v1493, %v1485
        %v1782 = vpack.c.b16 %v1494, %v1486
        %v1783 = vpack.c.b16 %v1495, %v1487
        %v1784 = vpack.c.b16 %v1496, %v1488
        %v1785 = vpack.c.b16 %v1497, %v1489
        %v1786 = vpack.c.b16 %v1506, %v1498
        %v1787 = vpack.c.b16 %v1507, %v1499
        %v1788 = vpack.c.b16 %v1508, %v1500
        %v1789 = vpack.c.b16 %v1509, %v1501
        %v1790 = vpack.c.b16 %v1510, %v1502
        %v1791 = vpack.c.b16 %v1511, %v1503
        %v1792 = vpack.c.b16 %v1512, %v1504
        %v1793 = vpack.c.b16 %v1513, %v1505
        %v1794 = vpack.c.b16 %v1522, %v1514
        %v1795 = vpack.c.b16 %v1523, %v1515
        %v1796 = vpack.c.b16 %v1524, %v1516
        %v1797 = vpack.c.b16 %v1525, %v1517
        %v1798 = vpack.c.b16 %v1526, %v1518
        %v1799 = vpack.c.b16 %v1527, %v1519
        %v1800 = vpack.c.b16 %v1528, %v1520
        %v1801 = vpack.c.b16 %v1529, %v1521
        %v1802 = vpack.c.b16 %v1538, %v1530
        %v1803 = vpack.c.b16 %v1539, %v1531
        %v1804 = vpack.c.b16 %v1540, %v1532
        %v1805 = vpack.c.b16 %v1541, %v1533
        %v1806 = vpack.c.b16 %v1542, %v1534
        %v1807 = vpack.c.b16 %v1543, %v1535
        %v1808 = vpack.c.b16 %v1544, %v1536
        %v1809 = vpack.c.b16 %v1545, %v1537
        %v1810 = vpack.c.b16 %v1554, %v1546
        %v1811 = vpack.c.b16 %v1555, %v1547
        %v1812 = vpack.c.b16 %v1556, %v1548
        %v1813 = vpack.c.b16 %v1557, %v1549
        %v1814 = vpack.c.b16 %v1558, %v1550
        %v1815 = vpack.c.b16 %v1559, %v1551
        %v1816 = vpack.c.b16 %v1560, %v1552
        %v1817 = vpack.c.b16 %v1561, %v1553
        %2074 = vmatpush.bf16.msra.mxu0 %v1618
        %2075 = vmatpush.bf16.msra.mxu0 %v1610
        %2076 = vmatpush.bf16.msra.mxu0 %v1602
        %2077 = vmatpush.bf16.msra.mxu0 %v1594
        %2078 = vmatpush.bf16.msra.mxu0 %v1586
        %2079 = vmatpush.bf16.msra.mxu0 %v1578
        %2080 = vmatpush.bf16.msra.mxu0 %v1570
        %2081 = vmatpush.bf16.msra.mxu0 %v1562
        %2082 = vmatmul.bf16.gmra.mxu0 %v530
        %v2083 = vpop.f32.mrf.mxu0
        %v2084 = vadd.f32 0.0, %v2083
        %v2085 = vpop.f32.mrf.mxu0
        %v2086 = vadd.f32 0.0, %v2085
        %2087 = vmatmul.bf16.gmra.mxu0 %v534
        %v2088 = vpop.f32.mrf.mxu0
        %v2089 = vadd.f32 0.0, %v2088
        %v2090 = vpop.f32.mrf.mxu0
        %v2091 = vadd.f32 0.0, %v2090
        %2092 = vdwg.mxu0
        %2093 = vmatpush.bf16.msra.mxu0 %v1682
        %2094 = vmatpush.bf16.msra.mxu0 %v1674
        %2095 = vmatpush.bf16.msra.mxu0 %v1666
        %2096 = vmatpush.bf16.msra.mxu0 %v1658
        %2097 = vmatpush.bf16.msra.mxu0 %v1650
        %2098 = vmatpush.bf16.msra.mxu0 %v1642
        %2099 = vmatpush.bf16.msra.mxu0 %v1634
        %2100 = vmatpush.bf16.msra.mxu0 %v1626
        %2101 = vmatmul.bf16.gmra.mxu0 %v531
        %v2102 = vpop.f32.mrf.mxu0
        %v2103 = vadd.f32 %v2084, %v2102
        %v2104 = vpop.f32.mrf.mxu0
        %v2105 = vadd.f32 %v2086, %v2104
        %2106 = vmatmul.bf16.gmra.mxu0 %v535
        %v2107 = vpop.f32.mrf.mxu0
        %v2108 = vadd.f32 %v2089, %v2107
        %v2109 = vpop.f32.mrf.mxu0
        %v2110 = vadd.f32 %v2091, %v2109
        %2111 = vdwg.mxu0
        %2112 = vmatpush.bf16.msra.mxu0 %v1746
        %2113 = vmatpush.bf16.msra.mxu0 %v1738
        %2114 = vmatpush.bf16.msra.mxu0 %v1730
        %2115 = vmatpush.bf16.msra.mxu0 %v1722
        %2116 = vmatpush.bf16.msra.mxu0 %v1714
        %2117 = vmatpush.bf16.msra.mxu0 %v1706
        %2118 = vmatpush.bf16.msra.mxu0 %v1698
        %2119 = vmatpush.bf16.msra.mxu0 %v1690
        %2120 = vmatmul.bf16.gmra.mxu0 %v532
        %v2121 = vpop.f32.mrf.mxu0
        %v2122 = vadd.f32 %v2103, %v2121
        %v2123 = vpop.f32.mrf.mxu0
        %v2124 = vadd.f32 %v2105, %v2123
        %2125 = vmatmul.bf16.gmra.mxu0 %v536
        %v2126 = vpop.f32.mrf.mxu0
        %v2127 = vadd.f32 %v2108, %v2126
        %v2128 = vpop.f32.mrf.mxu0
        %v2129 = vadd.f32 %v2110, %v2128
        %2130 = vdwg.mxu0
        %2131 = vmatpush.bf16.msra.mxu0 %v1810
        %2132 = vmatpush.bf16.msra.mxu0 %v1802
        %2133 = vmatpush.bf16.msra.mxu0 %v1794
        %2134 = vmatpush.bf16.msra.mxu0 %v1786
        %2135 = vmatpush.bf16.msra.mxu0 %v1778
        %2136 = vmatpush.bf16.msra.mxu0 %v1770
        %2137 = vmatpush.bf16.msra.mxu0 %v1762
        %2138 = vmatpush.bf16.msra.mxu0 %v1754
        %2139 = vmatmul.bf16.gmra.mxu0 %v533
        %v2140 = vpop.f32.mrf.mxu0
        %v2141 = vadd.f32 %v2122, %v2140
        %v2142 = vpop.f32.mrf.mxu0
        %v2143 = vadd.f32 %v2124, %v2142
        %2144 = vmatmul.bf16.gmra.mxu0 %v537
        %v2145 = vpop.f32.mrf.mxu0
        %v2146 = vadd.f32 %v2127, %v2145
        %v2147 = vpop.f32.mrf.mxu0
        %v2148 = vadd.f32 %v2129, %v2147
        %2149 = vdwg.mxu0
        %2150 = vmatpush.bf16.msra.mxu0 %v1619
        %2151 = vmatpush.bf16.msra.mxu0 %v1611
        %2152 = vmatpush.bf16.msra.mxu0 %v1603
        %2153 = vmatpush.bf16.msra.mxu0 %v1595
        %2154 = vmatpush.bf16.msra.mxu0 %v1587
        %2155 = vmatpush.bf16.msra.mxu0 %v1579
        %2156 = vmatpush.bf16.msra.mxu0 %v1571
        %2157 = vmatpush.bf16.msra.mxu0 %v1563
        %2158 = vmatmul.bf16.gmra.mxu0 %v530
        %v2159 = vpop.f32.mrf.mxu0
        %v2160 = vadd.f32 0.0, %v2159
        %v2161 = vpop.f32.mrf.mxu0
        %v2162 = vadd.f32 0.0, %v2161
        %2163 = vmatmul.bf16.gmra.mxu0 %v534
        %v2164 = vpop.f32.mrf.mxu0
        %v2165 = vadd.f32 0.0, %v2164
        %v2166 = vpop.f32.mrf.mxu0
        %v2167 = vadd.f32 0.0, %v2166
        %2168 = vdwg.mxu0
        %2169 = vmatpush.bf16.msra.mxu0 %v1683
        %2170 = vmatpush.bf16.msra.mxu0 %v1675
        %2171 = vmatpush.bf16.msra.mxu0 %v1667
        %2172 = vmatpush.bf16.msra.mxu0 %v1659
        %2173 = vmatpush.bf16.msra.mxu0 %v1651
        %2174 = vmatpush.bf16.msra.mxu0 %v1643
        %2175 = vmatpush.bf16.msra.mxu0 %v1635
        %2176 = vmatpush.bf16.msra.mxu0 %v1627
        %2177 = vmatmul.bf16.gmra.mxu0 %v531
        %v2178 = vpop.f32.mrf.mxu0
        %v2179 = vadd.f32 %v2160, %v2178
        %v2180 = vpop.f32.mrf.mxu0
        %v2181 = vadd.f32 %v2162, %v2180
        %2182 = vmatmul.bf16.gmra.mxu0 %v535
        %v2183 = vpop.f32.mrf.mxu0
        %v2184 = vadd.f32 %v2165, %v2183
        %v2185 = vpop.f32.mrf.mxu0
        %v2186 = vadd.f32 %v2167, %v2185
        %2187 = vdwg.mxu0
        %2188 = vmatpush.bf16.msra.mxu0 %v1747
        %2189 = vmatpush.bf16.msra.mxu0 %v1739
        %2190 = vmatpush.bf16.msra.mxu0 %v1731
        %2191 = vmatpush.bf16.msra.mxu0 %v1723
        %2192 = vmatpush.bf16.msra.mxu0 %v1715
        %2193 = vmatpush.bf16.msra.mxu0 %v1707
        %2194 = vmatpush.bf16.msra.mxu0 %v1699
        %2195 = vmatpush.bf16.msra.mxu0 %v1691
        %2196 = vmatmul.bf16.gmra.mxu0 %v532
        %v2197 = vpop.f32.mrf.mxu0
        %v2198 = vadd.f32 %v2179, %v2197
        %v2199 = vpop.f32.mrf.mxu0
        %v2200 = vadd.f32 %v2181, %v2199
        %2201 = vmatmul.bf16.gmra.mxu0 %v536
        %v2202 = vpop.f32.mrf.mxu0
        %v2203 = vadd.f32 %v2184, %v2202
        %v2204 = vpop.f32.mrf.mxu0
        %v2205 = vadd.f32 %v2186, %v2204
        %2206 = vdwg.mxu0
        %2207 = vmatpush.bf16.msra.mxu0 %v1811
        %2208 = vmatpush.bf16.msra.mxu0 %v1803
        %2209 = vmatpush.bf16.msra.mxu0 %v1795
        %2210 = vmatpush.bf16.msra.mxu0 %v1787
        %2211 = vmatpush.bf16.msra.mxu0 %v1779
        %2212 = vmatpush.bf16.msra.mxu0 %v1771
        %2213 = vmatpush.bf16.msra.mxu0 %v1763
        %2214 = vmatpush.bf16.msra.mxu0 %v1755
        %2215 = vmatmul.bf16.gmra.mxu0 %v533
        %v2216 = vpop.f32.mrf.mxu0
        %v2217 = vadd.f32 %v2198, %v2216
        %v2218 = vpop.f32.mrf.mxu0
        %v2219 = vadd.f32 %v2200, %v2218
        %2220 = vmatmul.bf16.gmra.mxu0 %v537
        %v2221 = vpop.f32.mrf.mxu0
        %v2222 = vadd.f32 %v2203, %v2221
        %v2223 = vpop.f32.mrf.mxu0
        %v2224 = vadd.f32 %v2205, %v2223
        %2225 = vdwg.mxu0
        %2226 = vmatpush.bf16.msra.mxu0 %v1620
        %2227 = vmatpush.bf16.msra.mxu0 %v1612
        %2228 = vmatpush.bf16.msra.mxu0 %v1604
        %2229 = vmatpush.bf16.msra.mxu0 %v1596
        %2230 = vmatpush.bf16.msra.mxu0 %v1588
        %2231 = vmatpush.bf16.msra.mxu0 %v1580
        %2232 = vmatpush.bf16.msra.mxu0 %v1572
        %2233 = vmatpush.bf16.msra.mxu0 %v1564
        %2234 = vmatmul.bf16.gmra.mxu0 %v530
        %v2235 = vpop.f32.mrf.mxu0
        %v2236 = vadd.f32 0.0, %v2235
        %v2237 = vpop.f32.mrf.mxu0
        %v2238 = vadd.f32 0.0, %v2237
        %2239 = vmatmul.bf16.gmra.mxu0 %v534
        %v2240 = vpop.f32.mrf.mxu0
        %v2241 = vadd.f32 0.0, %v2240
        %v2242 = vpop.f32.mrf.mxu0
        %v2243 = vadd.f32 0.0, %v2242
        %2244 = vdwg.mxu0
        %2245 = vmatpush.bf16.msra.mxu0 %v1684
        %2246 = vmatpush.bf16.msra.mxu0 %v1676
        %2247 = vmatpush.bf16.msra.mxu0 %v1668
        %2248 = vmatpush.bf16.msra.mxu0 %v1660
        %2249 = vmatpush.bf16.msra.mxu0 %v1652
        %2250 = vmatpush.bf16.msra.mxu0 %v1644
        %2251 = vmatpush.bf16.msra.mxu0 %v1636
        %2252 = vmatpush.bf16.msra.mxu0 %v1628
        %2253 = vmatmul.bf16.gmra.mxu0 %v531
        %v2254 = vpop.f32.mrf.mxu0
        %v2255 = vadd.f32 %v2236, %v2254
        %v2256 = vpop.f32.mrf.mxu0
        %v2257 = vadd.f32 %v2238, %v2256
        %2258 = vmatmul.bf16.gmra.mxu0 %v535
        %v2259 = vpop.f32.mrf.mxu0
        %v2260 = vadd.f32 %v2241, %v2259
        %v2261 = vpop.f32.mrf.mxu0
        %v2262 = vadd.f32 %v2243, %v2261
        %2263 = vdwg.mxu0
        %2264 = vmatpush.bf16.msra.mxu0 %v1748
        %2265 = vmatpush.bf16.msra.mxu0 %v1740
        %2266 = vmatpush.bf16.msra.mxu0 %v1732
        %2267 = vmatpush.bf16.msra.mxu0 %v1724
        %2268 = vmatpush.bf16.msra.mxu0 %v1716
        %2269 = vmatpush.bf16.msra.mxu0 %v1708
        %2270 = vmatpush.bf16.msra.mxu0 %v1700
        %2271 = vmatpush.bf16.msra.mxu0 %v1692
        %2272 = vmatmul.bf16.gmra.mxu0 %v532
        %v2273 = vpop.f32.mrf.mxu0
        %v2274 = vadd.f32 %v2255, %v2273
        %v2275 = vpop.f32.mrf.mxu0
        %v2276 = vadd.f32 %v2257, %v2275
        %2277 = vmatmul.bf16.gmra.mxu0 %v536
        %v2278 = vpop.f32.mrf.mxu0
        %v2279 = vadd.f32 %v2260, %v2278
        %v2280 = vpop.f32.mrf.mxu0
        %v2281 = vadd.f32 %v2262, %v2280
        %2282 = vdwg.mxu0
        %2283 = vmatpush.bf16.msra.mxu0 %v1812
        %2284 = vmatpush.bf16.msra.mxu0 %v1804
        %2285 = vmatpush.bf16.msra.mxu0 %v1796
        %2286 = vmatpush.bf16.msra.mxu0 %v1788
        %2287 = vmatpush.bf16.msra.mxu0 %v1780
        %2288 = vmatpush.bf16.msra.mxu0 %v1772
        %2289 = vmatpush.bf16.msra.mxu0 %v1764
        %2290 = vmatpush.bf16.msra.mxu0 %v1756
        %2291 = vmatmul.bf16.gmra.mxu0 %v533
        %v2292 = vpop.f32.mrf.mxu0
        %v2293 = vadd.f32 %v2274, %v2292
        %v2294 = vpop.f32.mrf.mxu0
        %v2295 = vadd.f32 %v2276, %v2294
        %2296 = vmatmul.bf16.gmra.mxu0 %v537
        %v2297 = vpop.f32.mrf.mxu0
        %v2298 = vadd.f32 %v2279, %v2297
        %v2299 = vpop.f32.mrf.mxu0
        %v2300 = vadd.f32 %v2281, %v2299
        %2301 = vdwg.mxu0
        %2302 = vmatpush.bf16.msra.mxu0 %v1621
        %2303 = vmatpush.bf16.msra.mxu0 %v1613
        %2304 = vmatpush.bf16.msra.mxu0 %v1605
        %2305 = vmatpush.bf16.msra.mxu0 %v1597
        %2306 = vmatpush.bf16.msra.mxu0 %v1589
        %2307 = vmatpush.bf16.msra.mxu0 %v1581
        %2308 = vmatpush.bf16.msra.mxu0 %v1573
        %2309 = vmatpush.bf16.msra.mxu0 %v1565
        %2310 = vmatmul.bf16.gmra.mxu0 %v530
        %v2311 = vpop.f32.mrf.mxu0
        %v2312 = vadd.f32 0.0, %v2311
        %v2313 = vpop.f32.mrf.mxu0
        %v2314 = vadd.f32 0.0, %v2313
        %2315 = vmatmul.bf16.gmra.mxu0 %v534
        %v2316 = vpop.f32.mrf.mxu0
        %v2317 = vadd.f32 0.0, %v2316
        %v2318 = vpop.f32.mrf.mxu0
        %v2319 = vadd.f32 0.0, %v2318
        %2320 = vdwg.mxu0
        %2321 = vmatpush.bf16.msra.mxu0 %v1685
        %2322 = vmatpush.bf16.msra.mxu0 %v1677
        %2323 = vmatpush.bf16.msra.mxu0 %v1669
        %2324 = vmatpush.bf16.msra.mxu0 %v1661
        %2325 = vmatpush.bf16.msra.mxu0 %v1653
        %2326 = vmatpush.bf16.msra.mxu0 %v1645
        %2327 = vmatpush.bf16.msra.mxu0 %v1637
        %2328 = vmatpush.bf16.msra.mxu0 %v1629
        %2329 = vmatmul.bf16.gmra.mxu0 %v531
        %v2330 = vpop.f32.mrf.mxu0
        %v2331 = vadd.f32 %v2312, %v2330
        %v2332 = vpop.f32.mrf.mxu0
        %v2333 = vadd.f32 %v2314, %v2332
        %2334 = vmatmul.bf16.gmra.mxu0 %v535
        %v2335 = vpop.f32.mrf.mxu0
        %v2336 = vadd.f32 %v2317, %v2335
        %v2337 = vpop.f32.mrf.mxu0
        %v2338 = vadd.f32 %v2319, %v2337
        %2339 = vdwg.mxu0
        %2340 = vmatpush.bf16.msra.mxu0 %v1749
        %2341 = vmatpush.bf16.msra.mxu0 %v1741
        %2342 = vmatpush.bf16.msra.mxu0 %v1733
        %2343 = vmatpush.bf16.msra.mxu0 %v1725
        %2344 = vmatpush.bf16.msra.mxu0 %v1717
        %2345 = vmatpush.bf16.msra.mxu0 %v1709
        %2346 = vmatpush.bf16.msra.mxu0 %v1701
        %2347 = vmatpush.bf16.msra.mxu0 %v1693
        %2348 = vmatmul.bf16.gmra.mxu0 %v532
        %v2349 = vpop.f32.mrf.mxu0
        %v2350 = vadd.f32 %v2331, %v2349
        %v2351 = vpop.f32.mrf.mxu0
        %v2352 = vadd.f32 %v2333, %v2351
        %2353 = vmatmul.bf16.gmra.mxu0 %v536
        %v2354 = vpop.f32.mrf.mxu0
        %v2355 = vadd.f32 %v2336, %v2354
        %v2356 = vpop.f32.mrf.mxu0
        %v2357 = vadd.f32 %v2338, %v2356
        %2358 = vdwg.mxu0
        %2359 = vmatpush.bf16.msra.mxu0 %v1813
        %2360 = vmatpush.bf16.msra.mxu0 %v1805
        %2361 = vmatpush.bf16.msra.mxu0 %v1797
        %2362 = vmatpush.bf16.msra.mxu0 %v1789
        %2363 = vmatpush.bf16.msra.mxu0 %v1781
        %2364 = vmatpush.bf16.msra.mxu0 %v1773
        %2365 = vmatpush.bf16.msra.mxu0 %v1765
        %2366 = vmatpush.bf16.msra.mxu0 %v1757
        %2367 = vmatmul.bf16.gmra.mxu0 %v533
        %v2368 = vpop.f32.mrf.mxu0
        %v2369 = vadd.f32 %v2350, %v2368
        %v2370 = vpop.f32.mrf.mxu0
        %v2371 = vadd.f32 %v2352, %v2370
        %2372 = vmatmul.bf16.gmra.mxu0 %v537
        %v2373 = vpop.f32.mrf.mxu0
        %v2374 = vadd.f32 %v2355, %v2373
        %v2375 = vpop.f32.mrf.mxu0
        %v2376 = vadd.f32 %v2357, %v2375
        %2377 = vdwg.mxu0
        %2378 = vmatpush.bf16.msra.mxu0 %v1622
        %2379 = vmatpush.bf16.msra.mxu0 %v1614
        %2380 = vmatpush.bf16.msra.mxu0 %v1606
        %2381 = vmatpush.bf16.msra.mxu0 %v1598
        %2382 = vmatpush.bf16.msra.mxu0 %v1590
        %2383 = vmatpush.bf16.msra.mxu0 %v1582
        %2384 = vmatpush.bf16.msra.mxu0 %v1574
        %2385 = vmatpush.bf16.msra.mxu0 %v1566
        %2386 = vmatmul.bf16.gmra.mxu0 %v530
        %v2387 = vpop.f32.mrf.mxu0
        %v2388 = vadd.f32 0.0, %v2387
        %v2389 = vpop.f32.mrf.mxu0
        %v2390 = vadd.f32 0.0, %v2389
        %2391 = vmatmul.bf16.gmra.mxu0 %v534
        %v2392 = vpop.f32.mrf.mxu0
        %v2393 = vadd.f32 0.0, %v2392
        %v2394 = vpop.f32.mrf.mxu0
        %v2395 = vadd.f32 0.0, %v2394
        %2396 = vdwg.mxu0
        %2397 = vmatpush.bf16.msra.mxu0 %v1686
        %2398 = vmatpush.bf16.msra.mxu0 %v1678
        %2399 = vmatpush.bf16.msra.mxu0 %v1670
        %2400 = vmatpush.bf16.msra.mxu0 %v1662
        %2401 = vmatpush.bf16.msra.mxu0 %v1654
        %2402 = vmatpush.bf16.msra.mxu0 %v1646
        %2403 = vmatpush.bf16.msra.mxu0 %v1638
        %2404 = vmatpush.bf16.msra.mxu0 %v1630
        %2405 = vmatmul.bf16.gmra.mxu0 %v531
        %v2406 = vpop.f32.mrf.mxu0
        %v2407 = vadd.f32 %v2388, %v2406
        %v2408 = vpop.f32.mrf.mxu0
        %v2409 = vadd.f32 %v2390, %v2408
        %2410 = vmatmul.bf16.gmra.mxu0 %v535
        %v2411 = vpop.f32.mrf.mxu0
        %v2412 = vadd.f32 %v2393, %v2411
        %v2413 = vpop.f32.mrf.mxu0
        %v2414 = vadd.f32 %v2395, %v2413
        %2415 = vdwg.mxu0
        %2416 = vmatpush.bf16.msra.mxu0 %v1750
        %2417 = vmatpush.bf16.msra.mxu0 %v1742
        %2418 = vmatpush.bf16.msra.mxu0 %v1734
        %2419 = vmatpush.bf16.msra.mxu0 %v1726
        %2420 = vmatpush.bf16.msra.mxu0 %v1718
        %2421 = vmatpush.bf16.msra.mxu0 %v1710
        %2422 = vmatpush.bf16.msra.mxu0 %v1702
        %2423 = vmatpush.bf16.msra.mxu0 %v1694
        %2424 = vmatmul.bf16.gmra.mxu0 %v532
        %v2425 = vpop.f32.mrf.mxu0
        %v2426 = vadd.f32 %v2407, %v2425
        %v2427 = vpop.f32.mrf.mxu0
        %v2428 = vadd.f32 %v2409, %v2427
        %2429 = vmatmul.bf16.gmra.mxu0 %v536
        %v2430 = vpop.f32.mrf.mxu0
        %v2431 = vadd.f32 %v2412, %v2430
        %v2432 = vpop.f32.mrf.mxu0
        %v2433 = vadd.f32 %v2414, %v2432
        %2434 = vdwg.mxu0
        %2435 = vmatpush.bf16.msra.mxu0 %v1814
        %2436 = vmatpush.bf16.msra.mxu0 %v1806
        %2437 = vmatpush.bf16.msra.mxu0 %v1798
        %2438 = vmatpush.bf16.msra.mxu0 %v1790
        %2439 = vmatpush.bf16.msra.mxu0 %v1782
        %2440 = vmatpush.bf16.msra.mxu0 %v1774
        %2441 = vmatpush.bf16.msra.mxu0 %v1766
        %2442 = vmatpush.bf16.msra.mxu0 %v1758
        %2443 = vmatmul.bf16.gmra.mxu0 %v533
        %v2444 = vpop.f32.mrf.mxu0
        %v2445 = vadd.f32 %v2426, %v2444
        %v2446 = vpop.f32.mrf.mxu0
        %v2447 = vadd.f32 %v2428, %v2446
        %2448 = vmatmul.bf16.gmra.mxu0 %v537
        %v2449 = vpop.f32.mrf.mxu0
        %v2450 = vadd.f32 %v2431, %v2449
        %v2451 = vpop.f32.mrf.mxu0
        %v2452 = vadd.f32 %v2433, %v2451
        %2453 = vdwg.mxu0
        %2454 = vmatpush.bf16.msra.mxu0 %v1623
        %2455 = vmatpush.bf16.msra.mxu0 %v1615
        %2456 = vmatpush.bf16.msra.mxu0 %v1607
        %2457 = vmatpush.bf16.msra.mxu0 %v1599
        %2458 = vmatpush.bf16.msra.mxu0 %v1591
        %2459 = vmatpush.bf16.msra.mxu0 %v1583
        %2460 = vmatpush.bf16.msra.mxu0 %v1575
        %2461 = vmatpush.bf16.msra.mxu0 %v1567
        %2462 = vmatmul.bf16.gmra.mxu0 %v530
        %v2463 = vpop.f32.mrf.mxu0
        %v2464 = vadd.f32 0.0, %v2463
        %v2465 = vpop.f32.mrf.mxu0
        %v2466 = vadd.f32 0.0, %v2465
        %2467 = vmatmul.bf16.gmra.mxu0 %v534
        %v2468 = vpop.f32.mrf.mxu0
        %v2469 = vadd.f32 0.0, %v2468
        %v2470 = vpop.f32.mrf.mxu0
        %v2471 = vadd.f32 0.0, %v2470
        %2472 = vdwg.mxu0
        %2473 = vmatpush.bf16.msra.mxu0 %v1687
        %2474 = vmatpush.bf16.msra.mxu0 %v1679
        %2475 = vmatpush.bf16.msra.mxu0 %v1671
        %2476 = vmatpush.bf16.msra.mxu0 %v1663
        %2477 = vmatpush.bf16.msra.mxu0 %v1655
        %2478 = vmatpush.bf16.msra.mxu0 %v1647
        %2479 = vmatpush.bf16.msra.mxu0 %v1639
        %2480 = vmatpush.bf16.msra.mxu0 %v1631
        %2481 = vmatmul.bf16.gmra.mxu0 %v531
        %v2482 = vpop.f32.mrf.mxu0
        %v2483 = vadd.f32 %v2464, %v2482
        %v2484 = vpop.f32.mrf.mxu0
        %v2485 = vadd.f32 %v2466, %v2484
        %2486 = vmatmul.bf16.gmra.mxu0 %v535
        %v2487 = vpop.f32.mrf.mxu0
        %v2488 = vadd.f32 %v2469, %v2487
        %v2489 = vpop.f32.mrf.mxu0
        %v2490 = vadd.f32 %v2471, %v2489
        %2491 = vdwg.mxu0
        %2492 = vmatpush.bf16.msra.mxu0 %v1751
        %2493 = vmatpush.bf16.msra.mxu0 %v1743
        %2494 = vmatpush.bf16.msra.mxu0 %v1735
        %2495 = vmatpush.bf16.msra.mxu0 %v1727
        %2496 = vmatpush.bf16.msra.mxu0 %v1719
        %2497 = vmatpush.bf16.msra.mxu0 %v1711
        %2498 = vmatpush.bf16.msra.mxu0 %v1703
        %2499 = vmatpush.bf16.msra.mxu0 %v1695
        %2500 = vmatmul.bf16.gmra.mxu0 %v532
        %v2501 = vpop.f32.mrf.mxu0
        %v2502 = vadd.f32 %v2483, %v2501
        %v2503 = vpop.f32.mrf.mxu0
        %v2504 = vadd.f32 %v2485, %v2503
        %2505 = vmatmul.bf16.gmra.mxu0 %v536
        %v2506 = vpop.f32.mrf.mxu0
        %v2507 = vadd.f32 %v2488, %v2506
        %v2508 = vpop.f32.mrf.mxu0
        %v2509 = vadd.f32 %v2490, %v2508
        %2510 = vdwg.mxu0
        %2511 = vmatpush.bf16.msra.mxu0 %v1815
        %2512 = vmatpush.bf16.msra.mxu0 %v1807
        %2513 = vmatpush.bf16.msra.mxu0 %v1799
        %2514 = vmatpush.bf16.msra.mxu0 %v1791
        %2515 = vmatpush.bf16.msra.mxu0 %v1783
        %2516 = vmatpush.bf16.msra.mxu0 %v1775
        %2517 = vmatpush.bf16.msra.mxu0 %v1767
        %2518 = vmatpush.bf16.msra.mxu0 %v1759
        %2519 = vmatmul.bf16.gmra.mxu0 %v533
        %v2520 = vpop.f32.mrf.mxu0
        %v2521 = vadd.f32 %v2502, %v2520
        %v2522 = vpop.f32.mrf.mxu0
        %v2523 = vadd.f32 %v2504, %v2522
        %2524 = vmatmul.bf16.gmra.mxu0 %v537
        %v2525 = vpop.f32.mrf.mxu0
        %v2526 = vadd.f32 %v2507, %v2525
        %v2527 = vpop.f32.mrf.mxu0
        %v2528 = vadd.f32 %v2509, %v2527
        %2529 = vdwg.mxu0
        %2530 = vmatpush.bf16.msra.mxu0 %v1624
        %2531 = vmatpush.bf16.msra.mxu0 %v1616
        %2532 = vmatpush.bf16.msra.mxu0 %v1608
        %2533 = vmatpush.bf16.msra.mxu0 %v1600
        %2534 = vmatpush.bf16.msra.mxu0 %v1592
        %2535 = vmatpush.bf16.msra.mxu0 %v1584
        %2536 = vmatpush.bf16.msra.mxu0 %v1576
        %2537 = vmatpush.bf16.msra.mxu0 %v1568
        %2538 = vmatmul.bf16.gmra.mxu0 %v530
        %v2539 = vpop.f32.mrf.mxu0
        %v2540 = vadd.f32 0.0, %v2539
        %v2541 = vpop.f32.mrf.mxu0
        %v2542 = vadd.f32 0.0, %v2541
        %2543 = vmatmul.bf16.gmra.mxu0 %v534
        %v2544 = vpop.f32.mrf.mxu0
        %v2545 = vadd.f32 0.0, %v2544
        %v2546 = vpop.f32.mrf.mxu0
        %v2547 = vadd.f32 0.0, %v2546
        %2548 = vdwg.mxu0
        %2549 = vmatpush.bf16.msra.mxu0 %v1688
        %2550 = vmatpush.bf16.msra.mxu0 %v1680
        %2551 = vmatpush.bf16.msra.mxu0 %v1672
        %2552 = vmatpush.bf16.msra.mxu0 %v1664
        %2553 = vmatpush.bf16.msra.mxu0 %v1656
        %2554 = vmatpush.bf16.msra.mxu0 %v1648
        %2555 = vmatpush.bf16.msra.mxu0 %v1640
        %2556 = vmatpush.bf16.msra.mxu0 %v1632
        %2557 = vmatmul.bf16.gmra.mxu0 %v531
        %v2558 = vpop.f32.mrf.mxu0
        %v2559 = vadd.f32 %v2540, %v2558
        %v2560 = vpop.f32.mrf.mxu0
        %v2561 = vadd.f32 %v2542, %v2560
        %2562 = vmatmul.bf16.gmra.mxu0 %v535
        %v2563 = vpop.f32.mrf.mxu0
        %v2564 = vadd.f32 %v2545, %v2563
        %v2565 = vpop.f32.mrf.mxu0
        %v2566 = vadd.f32 %v2547, %v2565
        %2567 = vdwg.mxu0
        %2568 = vmatpush.bf16.msra.mxu0 %v1752
        %2569 = vmatpush.bf16.msra.mxu0 %v1744
        %2570 = vmatpush.bf16.msra.mxu0 %v1736
        %2571 = vmatpush.bf16.msra.mxu0 %v1728
        %2572 = vmatpush.bf16.msra.mxu0 %v1720
        %2573 = vmatpush.bf16.msra.mxu0 %v1712
        %2574 = vmatpush.bf16.msra.mxu0 %v1704
        %2575 = vmatpush.bf16.msra.mxu0 %v1696
        %2576 = vmatmul.bf16.gmra.mxu0 %v532
        %v2577 = vpop.f32.mrf.mxu0
        %v2578 = vadd.f32 %v2559, %v2577
        %v2579 = vpop.f32.mrf.mxu0
        %v2580 = vadd.f32 %v2561, %v2579
        %2581 = vmatmul.bf16.gmra.mxu0 %v536
        %v2582 = vpop.f32.mrf.mxu0
        %v2583 = vadd.f32 %v2564, %v2582
        %v2584 = vpop.f32.mrf.mxu0
        %v2585 = vadd.f32 %v2566, %v2584
        %2586 = vdwg.mxu0
        %2587 = vmatpush.bf16.msra.mxu0 %v1816
        %2588 = vmatpush.bf16.msra.mxu0 %v1808
        %2589 = vmatpush.bf16.msra.mxu0 %v1800
        %2590 = vmatpush.bf16.msra.mxu0 %v1792
        %2591 = vmatpush.bf16.msra.mxu0 %v1784
        %2592 = vmatpush.bf16.msra.mxu0 %v1776
        %2593 = vmatpush.bf16.msra.mxu0 %v1768
        %2594 = vmatpush.bf16.msra.mxu0 %v1760
        %2595 = vmatmul.bf16.gmra.mxu0 %v533
        %v2596 = vpop.f32.mrf.mxu0
        %v2597 = vadd.f32 %v2578, %v2596
        %v2598 = vpop.f32.mrf.mxu0
        %v2599 = vadd.f32 %v2580, %v2598
        %2600 = vmatmul.bf16.gmra.mxu0 %v537
        %v2601 = vpop.f32.mrf.mxu0
        %v2602 = vadd.f32 %v2583, %v2601
        %v2603 = vpop.f32.mrf.mxu0
        %v2604 = vadd.f32 %v2585, %v2603
        %2605 = vdwg.mxu0
        %2606 = vmatpush.bf16.msra.mxu0 %v1625
        %2607 = vmatpush.bf16.msra.mxu0 %v1617
        %2608 = vmatpush.bf16.msra.mxu0 %v1609
        %2609 = vmatpush.bf16.msra.mxu0 %v1601
        %2610 = vmatpush.bf16.msra.mxu0 %v1593
        %2611 = vmatpush.bf16.msra.mxu0 %v1585
        %2612 = vmatpush.bf16.msra.mxu0 %v1577
        %2613 = vmatpush.bf16.msra.mxu0 %v1569
        %2614 = vmatmul.bf16.gmra.mxu0 %v530
        %v2615 = vpop.f32.mrf.mxu0
        %v2616 = vadd.f32 0.0, %v2615
        %v2617 = vpop.f32.mrf.mxu0
        %v2618 = vadd.f32 0.0, %v2617
        %2619 = vmatmul.bf16.gmra.mxu0 %v534
        %v2620 = vpop.f32.mrf.mxu0
        %v2621 = vadd.f32 0.0, %v2620
        %v2622 = vpop.f32.mrf.mxu0
        %v2623 = vadd.f32 0.0, %v2622
        %2624 = vdwg.mxu0
        %2625 = vmatpush.bf16.msra.mxu0 %v1689
        %2626 = vmatpush.bf16.msra.mxu0 %v1681
        %2627 = vmatpush.bf16.msra.mxu0 %v1673
        %2628 = vmatpush.bf16.msra.mxu0 %v1665
        %2629 = vmatpush.bf16.msra.mxu0 %v1657
        %2630 = vmatpush.bf16.msra.mxu0 %v1649
        %2631 = vmatpush.bf16.msra.mxu0 %v1641
        %2632 = vmatpush.bf16.msra.mxu0 %v1633
        %2633 = vmatmul.bf16.gmra.mxu0 %v531
        %v2634 = vpop.f32.mrf.mxu0
        %v2635 = vadd.f32 %v2616, %v2634
        %v2636 = vpop.f32.mrf.mxu0
        %v2637 = vadd.f32 %v2618, %v2636
        %2638 = vmatmul.bf16.gmra.mxu0 %v535
        %v2639 = vpop.f32.mrf.mxu0
        %v2640 = vadd.f32 %v2621, %v2639
        %v2641 = vpop.f32.mrf.mxu0
        %v2642 = vadd.f32 %v2623, %v2641
        %2643 = vdwg.mxu0
        %2644 = vmatpush.bf16.msra.mxu0 %v1753
        %2645 = vmatpush.bf16.msra.mxu0 %v1745
        %2646 = vmatpush.bf16.msra.mxu0 %v1737
        %2647 = vmatpush.bf16.msra.mxu0 %v1729
        %2648 = vmatpush.bf16.msra.mxu0 %v1721
        %2649 = vmatpush.bf16.msra.mxu0 %v1713
        %2650 = vmatpush.bf16.msra.mxu0 %v1705
        %2651 = vmatpush.bf16.msra.mxu0 %v1697
        %2652 = vmatmul.bf16.gmra.mxu0 %v532
        %v2653 = vpop.f32.mrf.mxu0
        %v2654 = vadd.f32 %v2635, %v2653
        %v2655 = vpop.f32.mrf.mxu0
        %v2656 = vadd.f32 %v2637, %v2655
        %2657 = vmatmul.bf16.gmra.mxu0 %v536
        %v2658 = vpop.f32.mrf.mxu0
        %v2659 = vadd.f32 %v2640, %v2658
        %v2660 = vpop.f32.mrf.mxu0
        %v2661 = vadd.f32 %v2642, %v2660
        %2662 = vdwg.mxu0
        %2663 = vmatpush.bf16.msra.mxu0 %v1817
        %2664 = vmatpush.bf16.msra.mxu0 %v1809
        %2665 = vmatpush.bf16.msra.mxu0 %v1801
        %2666 = vmatpush.bf16.msra.mxu0 %v1793
        %2667 = vmatpush.bf16.msra.mxu0 %v1785
        %2668 = vmatpush.bf16.msra.mxu0 %v1777
        %2669 = vmatpush.bf16.msra.mxu0 %v1769
        %2670 = vmatpush.bf16.msra.mxu0 %v1761
        %2671 = vmatmul.bf16.gmra.mxu0 %v533
        %v2672 = vpop.f32.mrf.mxu0
        %v2673 = vadd.f32 %v2654, %v2672
        %v2674 = vpop.f32.mrf.mxu0
        %v2675 = vadd.f32 %v2656, %v2674
        %2676 = vmatmul.bf16.gmra.mxu0 %v537
        %v2677 = vpop.f32.mrf.mxu0
        %v2678 = vadd.f32 %v2659, %v2677
        %v2679 = vpop.f32.mrf.mxu0
        %v2680 = vadd.f32 %v2661, %v2679
        %2681 = vdwg.mxu0
        %v2682 = vld [vmem:[#allocation8] sm:$0xff]
        %v2683 = vld [vmem:[#allocation8 + $0x8] sm:$0xff]
        %v2684 = vld [vmem:[#allocation8 + $0x10] sm:$0xff]
        %v2685 = vld [vmem:[#allocation8 + $0x18] sm:$0xff]
        %v2686 = vld [vmem:[#allocation10] sm:$0xff]
        %v2687 = vld [vmem:[#allocation10 + $0x8] sm:$0xff]
        %v2688 = vld [vmem:[#allocation10 + $0x10] sm:$0xff]
        %v2689 = vld [vmem:[#allocation10 + $0x18] sm:$0xff]
        %v2690 = vmul.f32 %v2141, %v2682
        %v2691 = vmul.f32 %v2143, %v2683
        %v2692 = vmul.f32 %v2146, %v2684
        %v2693 = vmul.f32 %v2148, %v2685
        %2694 = vrot.lane.b32.xlu0 %v2141, 64
        %v2695 = vpop.permute.xlu0 %2694
        %2696 = vrot.lane.b32.xlu0 %v2143, 64
        %v2697 = vpop.permute.xlu0 %2696
        %2698 = vrot.lane.b32.xlu0 %v2146, 64
        %v2699 = vpop.permute.xlu0 %2698
        %2700 = vrot.lane.b32.xlu0 %v2148, 64
        %v2701 = vpop.permute.xlu0 %2700
        %v2702 = vmul.f32 %v2695, %v2686
        %v2703 = vmul.f32 %v2697, %v2687
        %v2704 = vmul.f32 %v2699, %v2688
        %v2705 = vmul.f32 %v2701, %v2689
        %v2706 = vadd.f32 %v2690, %v2702
        %v2707 = vadd.f32 %v2691, %v2703
        %v2708 = vadd.f32 %v2692, %v2704
        %v2709 = vadd.f32 %v2693, %v2705
        %v2710 = vpack.c.bf16 %v2706, %v2706
        %v2711 = vpack.c.bf16 %v2707, %v2707
        %v2712 = vpack.c.bf16 %v2708, %v2708
        %v2713 = vpack.c.bf16 %v2709, %v2709
        %2714 = vst [vmem:[%s366] sm:$0xf] %v2710
        %2715 = vst [vmem:[%s366 + $0x4] sm:$0xf] %v2711
        %2716 = vst [vmem:[%s366 + $0x8] sm:$0xf] %v2712
        %2717 = vst [vmem:[%s366 + $0xc] sm:$0xf] %v2713
        %v2718 = vmul.f32 %v2217, %v2682
        %v2719 = vmul.f32 %v2219, %v2683
        %v2720 = vmul.f32 %v2222, %v2684
        %v2721 = vmul.f32 %v2224, %v2685
        %2722 = vrot.lane.b32.xlu0 %v2217, 64
        %v2723 = vpop.permute.xlu0 %2722
        %2724 = vrot.lane.b32.xlu0 %v2219, 64
        %v2725 = vpop.permute.xlu0 %2724
        %2726 = vrot.lane.b32.xlu0 %v2222, 64
        %v2727 = vpop.permute.xlu0 %2726
        %2728 = vrot.lane.b32.xlu0 %v2224, 64
        %v2729 = vpop.permute.xlu0 %2728
        %v2730 = vmul.f32 %v2723, %v2686
        %v2731 = vmul.f32 %v2725, %v2687
        %v2732 = vmul.f32 %v2727, %v2688
        %v2733 = vmul.f32 %v2729, %v2689
        %v2734 = vadd.f32 %v2718, %v2730
        %v2735 = vadd.f32 %v2719, %v2731
        %v2736 = vadd.f32 %v2720, %v2732
        %v2737 = vadd.f32 %v2721, %v2733
        %v2738 = vpack.c.bf16 %v2734, %v2734
        %v2739 = vpack.c.bf16 %v2735, %v2735
        %v2740 = vpack.c.bf16 %v2736, %v2736
        %v2741 = vpack.c.bf16 %v2737, %v2737
        %s2742 = scalar_lea.vmem %s366, 16 [#allocation11]
        %2743 = vst [vmem:[%s2742] sm:$0xf] %v2738
        %2744 = vst [vmem:[%s2742 + $0x4] sm:$0xf] %v2739
        %2745 = vst [vmem:[%s2742 + $0x8] sm:$0xf] %v2740
        %2746 = vst [vmem:[%s2742 + $0xc] sm:$0xf] %v2741
        %v2747 = vmul.f32 %v2293, %v2682
        %v2748 = vmul.f32 %v2295, %v2683
        %v2749 = vmul.f32 %v2298, %v2684
        %v2750 = vmul.f32 %v2300, %v2685
        %2751 = vrot.lane.b32.xlu0 %v2293, 64
        %v2752 = vpop.permute.xlu0 %2751
        %2753 = vrot.lane.b32.xlu0 %v2295, 64
        %v2754 = vpop.permute.xlu0 %2753
        %2755 = vrot.lane.b32.xlu0 %v2298, 64
        %v2756 = vpop.permute.xlu0 %2755
        %2757 = vrot.lane.b32.xlu0 %v2300, 64
        %v2758 = vpop.permute.xlu0 %2757
        %v2759 = vmul.f32 %v2752, %v2686
        %v2760 = vmul.f32 %v2754, %v2687
        %v2761 = vmul.f32 %v2756, %v2688
        %v2762 = vmul.f32 %v2758, %v2689
        %v2763 = vadd.f32 %v2747, %v2759
        %v2764 = vadd.f32 %v2748, %v2760
        %v2765 = vadd.f32 %v2749, %v2761
        %v2766 = vadd.f32 %v2750, %v2762
        %v2767 = vpack.c.bf16 %v2763, %v2763
        %v2768 = vpack.c.bf16 %v2764, %v2764
        %v2769 = vpack.c.bf16 %v2765, %v2765
        %v2770 = vpack.c.bf16 %v2766, %v2766
        %s2771 = scalar_lea.vmem %s366, 32 [#allocation11]
        %2772 = vst [vmem:[%s2771] sm:$0xf] %v2767
        %2773 = vst [vmem:[%s2771 + $0x4] sm:$0xf] %v2768
        %2774 = vst [vmem:[%s2771 + $0x8] sm:$0xf] %v2769
        %2775 = vst [vmem:[%s2771 + $0xc] sm:$0xf] %v2770
        %v2776 = vmul.f32 %v2369, %v2682
        %v2777 = vmul.f32 %v2371, %v2683
        %v2778 = vmul.f32 %v2374, %v2684
        %v2779 = vmul.f32 %v2376, %v2685
        %2780 = vrot.lane.b32.xlu0 %v2369, 64
        %v2781 = vpop.permute.xlu0 %2780
        %2782 = vrot.lane.b32.xlu0 %v2371, 64
        %v2783 = vpop.permute.xlu0 %2782
        %2784 = vrot.lane.b32.xlu0 %v2374, 64
        %v2785 = vpop.permute.xlu0 %2784
        %2786 = vrot.lane.b32.xlu0 %v2376, 64
        %v2787 = vpop.permute.xlu0 %2786
        %v2788 = vmul.f32 %v2781, %v2686
        %v2789 = vmul.f32 %v2783, %v2687
        %v2790 = vmul.f32 %v2785, %v2688
        %v2791 = vmul.f32 %v2787, %v2689
        %v2792 = vadd.f32 %v2776, %v2788
        %v2793 = vadd.f32 %v2777, %v2789
        %v2794 = vadd.f32 %v2778, %v2790
        %v2795 = vadd.f32 %v2779, %v2791
        %v2796 = vpack.c.bf16 %v2792, %v2792
        %v2797 = vpack.c.bf16 %v2793, %v2793
        %v2798 = vpack.c.bf16 %v2794, %v2794
        %v2799 = vpack.c.bf16 %v2795, %v2795
        %s2800 = scalar_lea.vmem %s366, 48 [#allocation11]
        %2801 = vst [vmem:[%s2800] sm:$0xf] %v2796
        %2802 = vst [vmem:[%s2800 + $0x4] sm:$0xf] %v2797
        %2803 = vst [vmem:[%s2800 + $0x8] sm:$0xf] %v2798
        %2804 = vst [vmem:[%s2800 + $0xc] sm:$0xf] %v2799
        %v2805 = vmul.f32 %v2445, %v2682
        %v2806 = vmul.f32 %v2447, %v2683
        %v2807 = vmul.f32 %v2450, %v2684
        %v2808 = vmul.f32 %v2452, %v2685
        %2809 = vrot.lane.b32.xlu0 %v2445, 64
        %v2810 = vpop.permute.xlu0 %2809
        %2811 = vrot.lane.b32.xlu0 %v2447, 64
        %v2812 = vpop.permute.xlu0 %2811
        %2813 = vrot.lane.b32.xlu0 %v2450, 64
        %v2814 = vpop.permute.xlu0 %2813
        %2815 = vrot.lane.b32.xlu0 %v2452, 64
        %v2816 = vpop.permute.xlu0 %2815
        %v2817 = vmul.f32 %v2810, %v2686
        %v2818 = vmul.f32 %v2812, %v2687
        %v2819 = vmul.f32 %v2814, %v2688
        %v2820 = vmul.f32 %v2816, %v2689
        %v2821 = vadd.f32 %v2805, %v2817
        %v2822 = vadd.f32 %v2806, %v2818
        %v2823 = vadd.f32 %v2807, %v2819
        %v2824 = vadd.f32 %v2808, %v2820
        %v2825 = vpack.c.bf16 %v2821, %v2821
        %v2826 = vpack.c.bf16 %v2822, %v2822
        %v2827 = vpack.c.bf16 %v2823, %v2823
        %v2828 = vpack.c.bf16 %v2824, %v2824
        %2829 = vst [vmem:[%s373] sm:$0xf] %v2825
        %2830 = vst [vmem:[%s373 + $0x4] sm:$0xf] %v2826
        %2831 = vst [vmem:[%s373 + $0x8] sm:$0xf] %v2827
        %2832 = vst [vmem:[%s373 + $0xc] sm:$0xf] %v2828
        %v2833 = vpack.c.bf16 %v2597, %v2597
        %v2834 = vpack.c.bf16 %v2599, %v2599
        %v2835 = vpack.c.bf16 %v2602, %v2602
        %v2836 = vpack.c.bf16 %v2604, %v2604
        %2837 = vst [vmem:[%s380] sm:$0xf] %v2833
        %2838 = vst [vmem:[%s380 + $0x4] sm:$0xf] %v2834
        %2839 = vst [vmem:[%s380 + $0x8] sm:$0xf] %v2835
        %2840 = vst [vmem:[%s380 + $0xc] sm:$0xf] %v2836
        %v2841 = vmul.f32 %v2521, %v2682
        %v2842 = vmul.f32 %v2523, %v2683
        %v2843 = vmul.f32 %v2526, %v2684
        %v2844 = vmul.f32 %v2528, %v2685
        %2845 = vrot.lane.b32.xlu0 %v2521, 64
        %v2846 = vpop.permute.xlu0 %2845
        %2847 = vrot.lane.b32.xlu0 %v2523, 64
        %v2848 = vpop.permute.xlu0 %2847
        %2849 = vrot.lane.b32.xlu0 %v2526, 64
        %v2850 = vpop.permute.xlu0 %2849
        %2851 = vrot.lane.b32.xlu0 %v2528, 64
        %v2852 = vpop.permute.xlu0 %2851
        %v2853 = vmul.f32 %v2846, %v2686
        %v2854 = vmul.f32 %v2848, %v2687
        %v2855 = vmul.f32 %v2850, %v2688
        %v2856 = vmul.f32 %v2852, %v2689
        %v2857 = vadd.f32 %v2841, %v2853
        %v2858 = vadd.f32 %v2842, %v2854
        %v2859 = vadd.f32 %v2843, %v2855
        %v2860 = vadd.f32 %v2844, %v2856
        %v2861 = vpack.c.bf16 %v2857, %v2857
        %v2862 = vpack.c.bf16 %v2858, %v2858
        %v2863 = vpack.c.bf16 %v2859, %v2859
        %v2864 = vpack.c.bf16 %v2860, %v2860
        %s2865 = scalar_lea.vmem %s373, 16 [#allocation12]
        %2866 = vst [vmem:[%s2865] sm:$0xf] %v2861
        %2867 = vst [vmem:[%s2865 + $0x4] sm:$0xf] %v2862
        %2868 = vst [vmem:[%s2865 + $0x8] sm:$0xf] %v2863
        %2869 = vst [vmem:[%s2865 + $0xc] sm:$0xf] %v2864
        %v2870 = vpack.c.bf16 %v2673, %v2673
        %v2871 = vpack.c.bf16 %v2675, %v2675
        %v2872 = vpack.c.bf16 %v2678, %v2678
        %v2873 = vpack.c.bf16 %v2680, %v2680
        %s2874 = scalar_lea.vmem %s380, 16 [#allocation14]
        %2875 = vst [vmem:[%s2874] sm:$0xf] %v2870
        %2876 = vst [vmem:[%s2874 + $0x4] sm:$0xf] %v2871
        %2877 = vst [vmem:[%s2874 + $0x8] sm:$0xf] %v2872
        %2878 = vst [vmem:[%s2874 + $0xc] sm:$0xf] %v2873
        %s2879 = sand.u32 %s148, 1
        %s2880 = scalar_lea.sflag [#allocation4], %s2879
        %s2881 = sand.u32 %s148, 1
        %s2882 = smul.addr %s2881, 64
        %s2883 = scalar_lea.vmem [#allocation11], %s2882
        %s2884 = sand.u32 %s30, 1
        %s2885 = scalar_lea.sflag [#allocation13], %s2884
        %s2886 = sand.u32 %s174, 1
        %s2887 = smul.addr %s2886, 32
        %s2888 = scalar_lea.vmem [#allocation12], %s2887
        %s2889 = sand.u32 %s30, 1
        %s2890 = scalar_lea.sflag [#allocation13], %s2889
        %s2891 = sand.u32 %s200, 1
        %s2892 = smul.addr %s2891, 32
        %s2893 = scalar_lea.vmem [#allocation14], %s2892
        // Predicated region
        $region61: #{tpu_custom_call.1} parent=39 // pred_check
          %p2894 = pneg %p158
        $region62: #{tpu_custom_call.1} parent=39 // pred_check_branch
          %2896 = sbr.rel (%p2894) target = $region64
        $region63: #{tpu_custom_call.1} parent=39 // pred_region
          %2898 = vsyncadd %s2880, 0
          %s2899 = smul.addr %s30, 16
          %s2900 = smul.addr %s2899, 4
          %s2901 = scalar_lea.hbm %s5, %s2900
          %s2902 = sshll.u32 %s2883, 4
          %s2903 = int_to_ptr.vmem [resolvable:$true] %s2902
          %s2904 = sshll.u32 %s2901, 4
          %s2905 = int_to_ptr.hbm [resolvable:$true] %s2904
          %2910 = dma.vmem_to_hbm [thread:$0]  %s2903, 1024, %s2905, %s2880, 64, 64, 4
        $region64: #{tpu_custom_call.1} parent=39 // pred_fallthru
          _
        // Predicated region
        $region65: #{tpu_custom_call.1} parent=39 // pred_check
          %p2911 = pneg %p184
        $region66: #{tpu_custom_call.1} parent=39 // pred_check_branch
          %2913 = sbr.rel (%p2911) target = $region68
        $region67: #{tpu_custom_call.1} parent=39 // pred_region
          %2915 = vsyncadd %s2885, 0
          %s2916 = smul.addr %s30, 8
          %s2917 = smul.addr %s2916, 4
          %s2918 = scalar_lea.hbm %s6, %s2917
          %s2919 = sshll.u32 %s2888, 4
          %s2920 = int_to_ptr.vmem [resolvable:$true] %s2919
          %s2921 = sshll.u32 %s2918, 4
          %s2922 = int_to_ptr.hbm [resolvable:$true] %s2921
          %2927 = dma.vmem_to_hbm [thread:$0]  %s2920, 512, %s2922, %s2885, 64, 64, 4
        $region68: #{tpu_custom_call.1} parent=39 // pred_fallthru
          _
        // Predicated region
        $region69: #{tpu_custom_call.1} parent=39 // pred_check
          %p2928 = pneg %p210
        $region70: #{tpu_custom_call.1} parent=39 // pred_check_branch
          %2930 = sbr.rel (%p2928) target = $region72
        $region71: #{tpu_custom_call.1} parent=39 // pred_region
          %2932 = vsyncadd %s2890, 0
          %s2933 = smul.addr %s30, 8
          %s2934 = smul.addr %s2933, 4
          %s2935 = scalar_lea.hbm %s7, %s2934
          %s2936 = sshll.u32 %s2893, 4
          %s2937 = int_to_ptr.vmem [resolvable:$true] %s2936
          %s2938 = sshll.u32 %s2935, 4
          %s2939 = int_to_ptr.hbm [resolvable:$true] %s2938
          %2944 = dma.vmem_to_hbm [thread:$0]  %s2937, 512, %s2939, %s2890, 64, 64, 4
        $region72: #{tpu_custom_call.1} parent=39 // pred_fallthru
          _
      $region40: #{tpu_custom_call.1} parent=5 // pred_fallthru
        _
      %p2945 = scmp.le.s32.totalorder 2, %s25
      // Predicated region
      $region73: #{tpu_custom_call.1} parent=5 // pred_check
        %p2946 = pneg %p2945
      $region74: #{tpu_custom_call.1} parent=5 // pred_check_branch
        %2948 = sbr.rel (%p2946) target = $region76
      $region75: #{tpu_custom_call.1} parent=5 // pred_region
        %s2949 = ssub.s32 %s25, 2
        // Predicated region
        $region77: #{tpu_custom_call.1} parent=75 // pred_check
          %p2950 = pneg %p164
        $region78: #{tpu_custom_call.1} parent=75 // pred_check_branch
          %2952 = sbr.rel (%p2950) target = $region80
        $region79: #{tpu_custom_call.1} parent=75 // pred_region
          %s2953 = sand.u32 %s149, 1
          %s2954 = scalar_lea.sflag [#allocation4], %s2953
          %s2955 = sand.u32 %s149, 1
          %s2956 = smul.addr %s2955, 64
          %s2957 = scalar_lea.vmem [#allocation11], %s2956
          %2959 = dma.done %s2954, 1024
        $region80: #{tpu_custom_call.1} parent=75 // pred_fallthru
          _
        // Predicated region
        $region81: #{tpu_custom_call.1} parent=75 // pred_check
          %p2960 = pneg %p190
        $region82: #{tpu_custom_call.1} parent=75 // pred_check_branch
          %2962 = sbr.rel (%p2960) target = $region84
        $region83: #{tpu_custom_call.1} parent=75 // pred_region
          %s2963 = sand.u32 %s31, 1
          %s2964 = scalar_lea.sflag [#allocation13], %s2963
          %s2965 = sand.u32 %s175, 1
          %s2966 = smul.addr %s2965, 32
          %s2967 = scalar_lea.vmem [#allocation12], %s2966
          %2969 = dma.done %s2964, 512
        $region84: #{tpu_custom_call.1} parent=75 // pred_fallthru
          _
        // Predicated region
        $region85: #{tpu_custom_call.1} parent=75 // pred_check
          %p2970 = pneg %p216
        $region86: #{tpu_custom_call.1} parent=75 // pred_check_branch
          %2972 = sbr.rel (%p2970) target = $region88
        $region87: #{tpu_custom_call.1} parent=75 // pred_region
          %s2973 = sand.u32 %s31, 1
          %s2974 = scalar_lea.sflag [#allocation13], %s2973
          %s2975 = sand.u32 %s201, 1
          %s2976 = smul.addr %s2975, 32
          %s2977 = scalar_lea.vmem [#allocation14], %s2976
          %2979 = dma.done %s2974, 512
        $region88: #{tpu_custom_call.1} parent=75 // pred_fallthru
          _
      $region76: #{tpu_custom_call.1} parent=5 // pred_fallthru
        _
    $region6: #{tpu_custom_call.1} parent=1 // loop_footer
      %s29 = sadd.s32 1, %s25
    $region7: #{tpu_custom_call.1} parent=1 // loop_footer_branch
      %24 = sbr.rel target = $region3
    $region8: #{tpu_custom_call.1} parent=1 // loop_exit
      _
    %2980 = vsyncpa [#allocation3], 1
    %s2981 = scalar_lea.sflag [#allocation3], 1
    %2982 = vsyncpa %s2981, 1
    %2983 = vsyncpa [#allocation6], 1
    %2984 = vsyncpa [#allocation9], 1
    %2985 = vsyncpa [#allocation4], 1
    %s2986 = scalar_lea.sflag [#allocation4], 1
    %2987 = vsyncpa %s2986, 1
    %2988 = vsyncpa [#allocation13], 1
    %s2989 = scalar_lea.sflag [#allocation13], 1
    %2990 = vsyncpa %s2989, 1

</llo_original>
